<compile_context>
chip_gen: v5e
topology: v5e:2x2
jax: 0.10.0
libtpu: 0.0.40
codegen_flags: <defaults>
</compile_context>

<pallas_src>
import jax
import jax.numpy as jnp
from jax import lax
from jax.experimental import pallas as pl
from jax.experimental.pallas import tpu as pltpu


# ------------------------------- Pallas kernel -------------------------------- #

def _chunk(total, cap):
    """Largest chunk <= cap that divides total (falls back to a single chunk)."""
    c = min(total, cap)
    return c if total % c == 0 else total


def _decoder_kernel(x_ref,
                    w1, b1, w2, b2, w3, b3, w4, b4, w5, b5,
                    o_ref, s2_ref, s3_ref, s4_ref):
    f32 = jnp.float32

    def act(v):
        return jnp.maximum(v, 0.0)

    # ---- layer 1: (pixels, channels); ONE merged matmul (Pb,256)@(256,512).
    #      The 4 position column blocks are 128-lane aligned, so moving them onto the
    #      pixel (sublane) axis is a pure vreg relabel. ----
    pb = x_ref.shape[0]                        # folded batch * input pixels
    c1 = b1.shape[1] // 4                      # 128
    y1 = act(jnp.dot(x_ref[...], w1[...], preferred_element_type=f32) + b1[...])
    a1 = jnp.concatenate([y1[:, p * c1:(p + 1) * c1] for p in range(4)], axis=0)

    # ---- layer 2: switch to (channels, pixels) by contracting the minor (channel)
    #      dims of both operands (q@k^T pattern, no transpose). ONE merged matmul;
    #      rows split per position (64 = 8-aligned) into 128-lane-aligned s2 slices. ----
    p1 = 4 * pb                                # pixels after layer 1
    c2 = w2.shape[0] // 4                      # 64
    y2 = lax.dot_general(w2[...], a1, (((1,), (1,)), ((), ())),
                         preferred_element_type=f32)           # (4*c2, p1)
    for p in range(4):
        s2_ref[:, p * p1:(p + 1) * p1] = act(y2[p * c2:(p + 1) * c2, :] + b2[...])

    # ---- layers 3-4: merged matmuls, chunked along the pixel (lane) axis and fed
    #      directly from scratch refs so live values stay well inside the register
    #      file (no spill bounce through VMEM). ----
    def mid_layer(src_ref, dst_ref, w_ref, b_ref, lane_cap):
        pin = src_ref.shape[1]
        cout = w_ref.shape[0] // 4
        ch = _chunk(pin, lane_cap)
        for c in range(0, pin, ch):
            y = jnp.dot(w_ref[...], src_ref[:, c:c + ch],
                        preferred_element_type=f32)            # (4*cout, ch)
            for p in range(4):
                dst_ref[:, p * pin + c:p * pin + c + ch] = (
                    act(y[p * cout:(p + 1) * cout, :] + b_ref[...]))

    mid_layer(s2_ref, s3_ref, w3, b3, lane_cap=256)   # (128,64)@(64,256) chunks
    mid_layer(s3_ref, s4_ref, w4, b4, lane_cap=512)   # (64,32)@(32,512) chunks

    # ---- layer 5: single merged (12,16) weight; lane-dense (12, chunk) stores straight
    #      into the output block (position axis lives on the 12 output rows). ----
    p4 = s4_ref.shape[1]
    ch5 = _chunk(p4, 1024)
    for c in range(0, p4, ch5):
        y = jnp.dot(w5[...], s4_ref[:, c:c + ch5], preferred_element_type=f32)
        o_ref[:, c:c + ch5] = act(y + b5[...]).astype(o_ref.dtype)


# ------------------------------ wrapper / glue --------------------------------- #

def _pack_params(params):
    """Merge the 4 kernel positions of each layer into one weight matrix.

    Layer 1 ((pixels, channels) orientation): (Cin, 4*Cout), column = pos*Cout + co,
      bias pre-tiled to (1, 4*Cout).
    Layers 2..5 ((channels, pixels) orientation): (4*Cout, Cin), row = pos*Cout + co,
      bias (Cout, 1) applied per position block (layer 5: pre-tiled to (4*Cout, 1)).
    """
    packed = []
    n_layers = len(params)
    for li, (w, b) in enumerate(params):
        cin, cout = w.shape[0], w.shape[1]
        if li == 0:
            wm = jnp.transpose(w, (0, 2, 3, 1)).reshape(cin, 4 * cout)
            bm = jnp.tile(b.reshape(1, cout), (1, 4))
        else:
            wm = jnp.transpose(w, (2, 3, 1, 0)).reshape(4 * cout, cin)
            if li == n_layers - 1:
                bm = jnp.tile(b.reshape(cout, 1), (4, 1))
            else:
                bm = b.reshape(cout, 1)
        packed += [wm, bm]
    return packed


@jax.jit
def conv_decoder_forward(x_nchw, params):
    """Matches ConvDecoder.forward. Input/output are NCHW (PyTorch convention)."""
    N, C0, H0, W0 = x_nchw.shape
    L = len(params)
    assert L == 5
    P0 = H0 * W0
    Pb = N * P0                                   # batch folded into the pixel axis
    c_out = params[-1][0].shape[1]                # 3
    out_rows = 4 * c_out                          # 12  (pos5 x channel)
    P_final = Pb * 4 ** (L - 1)                   # lanes of the output block

    # NCHW -> (batch*pixels, channels): one tiny one-off relayout (~128 KB).
    x_pc = jnp.transpose(x_nchw.reshape(N, C0, P0), (0, 2, 1)).reshape(Pb, C0)
    packed = _pack_params(params)

    flops = 2 * sum(4 * (Pb * 4 ** li) * w.shape[0] * w.shape[1]
                    for li, (w, _) in enumerate(params))
    bytes_accessed = 4 * (x_pc.size + sum(a.size for a in packed)
                          + out_rows * P_final)

    scrambled = pl.pallas_call(
        _decoder_kernel,
        out_shape=jax.ShapeDtypeStruct((out_rows, P_final), x_nchw.dtype),
        scratch_shapes=[
            pltpu.VMEM((params[1][0].shape[1], 16 * Pb), jnp.float32),   # L2 out (64, 16Pb)
            pltpu.VMEM((params[2][0].shape[1], 64 * Pb), jnp.float32),   # L3 out (32, 64Pb)
            pltpu.VMEM((params[3][0].shape[1], 256 * Pb), jnp.float32),  # L4 out (16, 256Pb)
        ],
        cost_estimate=pl.CostEstimate(flops=flops, transcendentals=0,
                                      bytes_accessed=bytes_accessed),
    )(x_pc, *packed)

    # Un-scramble: output row = pos5*c_out + co; column = (pos4, pos3, pos2, pos1, n, i0, j0),
    # pos = 2*di + dj, and h = 32*i0 + 16*d1i + 8*d2i + 4*d3i + 2*d4i + d5i (same for w / j).
    # Single pass over the small final tensor (~400 KB); lands directly in NCHW.
    # TODO(synk): could be folded into the layer-5 store pattern or a tiny second Pallas
    # kernel with lane-dense stores to remove this last piece of XLA glue.
    y = scrambled.reshape((2, 2, c_out) + (2, 2) * (L - 1) + (N, H0, W0))
    n_ax, i0_ax, j0_ax = 2 * L + 1, 2 * L + 2, 2 * L + 3
    h_axes = [i0_ax] + [3 + 2 * (L - 1 - k) for k in range(1, L)] + [0]
    w_axes = [j0_ax] + [4 + 2 * (L - 1 - k) for k in range(1, L)] + [1]
    y = jnp.transpose(y, (n_ax, 2, *h_axes, *w_axes))
    return y.reshape(N, c_out, H0 * 2 ** L, W0 * 2 ** L)


# ----------------------------- params & reference ------------------------------ #

def make_params(key):
    """Deterministic synthetic parameters (PyTorch-style uniform fan-in init)."""
    chans = [256, 128, 64, 32, 16, 3]
    params = []
    for li in range(5):
        cin, cout = chans[li], chans[li + 1]
        key, kw_, kb_ = jax.random.split(key, 3)
        bound = 1.0 / jnp.sqrt(cin * 2 * 2)
        w = jax.random.uniform(kw_, (cin, cout, 2, 2), jnp.float32, -bound, bound)
        b = jax.random.uniform(kb_, (cout,), jnp.float32, -bound, bound)
        params.append((w, b))
    return params


def _ref_layer(x_nchw, w, b):
    N, C, H, W = x_nchw.shape
    Cout = w.shape[1]
    y = jnp.einsum('nchw,codk->nohdwk', x_nchw, w)
    y = y.reshape(N, Cout, 2 * H, 2 * W) + b[None, :, None, None]
    return jnp.maximum(y, 0.0)


def conv_decoder_ref(x_nchw, params):
    x = x_nchw
    for (w, b) in params:
        x = _ref_layer(x, w, b)
    return x


# ----------------------------------- main --------------------------------------- #

if __name__ == "__main__":
    key = jax.random.PRNGKey(0)
    kx, kp = jax.random.split(key)

    # Module-consistent shape: (batch=2, C=256, H=W=4) -> output (2, 3, 128, 128)
    x = jax.random.normal(kx, (2, 256, 4, 4), jnp.float32)
    params = make_params(kp)

    out = jax.block_until_ready(conv_decoder_forward(x, params))
    assert out.shape == (2, 3, 128, 128), out.shape

    ref = jax.block_until_ready(conv_decoder_ref(x, params))
    if not jnp.allclose(out, ref, atol=2e-4, rtol=2e-4):
        err = jnp.max(jnp.abs(out - ref))
        raise AssertionError(
            f"Pallas ConvDecoder mismatch vs pure-JAX reference (max abs err {err})")

    print("KERNEL_OK")
</pallas_src>

<mosaic_0001>
module attributes {stable_mosaic.version = 11 : i64} {
  func.func @_decoder_kernel(%arg0: memref<32x256xf32, #tpu.memory_space<vmem>>, %arg1: memref<256x512xf32, #tpu.memory_space<vmem>>, %arg2: memref<1x512xf32, #tpu.memory_space<vmem>>, %arg3: memref<256x128xf32, #tpu.memory_space<vmem>>, %arg4: memref<64x1xf32, #tpu.memory_space<vmem>>, %arg5: memref<128x64xf32, #tpu.memory_space<vmem>>, %arg6: memref<32x1xf32, #tpu.memory_space<vmem>>, %arg7: memref<64x32xf32, #tpu.memory_space<vmem>>, %arg8: memref<16x1xf32, #tpu.memory_space<vmem>>, %arg9: memref<12x16xf32, #tpu.memory_space<vmem>>, %arg10: memref<12x1xf32, #tpu.memory_space<vmem>>, %arg11: memref<12x8192xf32, #tpu.memory_space<vmem>>, %arg12: memref<64x512xf32, #tpu.memory_space<vmem>>, %arg13: memref<32x2048xf32, #tpu.memory_space<vmem>>, %arg14: memref<16x8192xf32, #tpu.memory_space<vmem>>) attributes {dimension_semantics = [], scalar_prefetch = 0 : i64, scratch_operands = 3 : i64, tpu.core_type = #tpu.core_type<tc>} {
    %c0 = arith.constant 0 : index
    %c0_0 = arith.constant 0 : index
    %0 = vector.load %arg0[%c0, %c0_0] : memref<32x256xf32, #tpu.memory_space<vmem>>, vector<32x256xf32>
    %c0_1 = arith.constant 0 : index
    %c0_2 = arith.constant 0 : index
    %1 = vector.load %arg1[%c0_1, %c0_2] : memref<256x512xf32, #tpu.memory_space<vmem>>, vector<256x512xf32>
    %cst = arith.constant dense<0.000000e+00> : vector<32x512xf32>
    %2 = tpu.matmul %0, %1, %cst {dimension_numbers = #tpu.dot_dimension_numbers<[1], [0], [0], [1], [0, 0, 1, 1], [], []>} : vector<32x256xf32>, vector<256x512xf32>, vector<32x512xf32> -> vector<32x512xf32>
    %c0_3 = arith.constant 0 : index
    %c0_4 = arith.constant 0 : index
    %3 = vector.load %arg2[%c0_3, %c0_4] : memref<1x512xf32, #tpu.memory_space<vmem>>, vector<1x512xf32>
    %4 = vector.broadcast %3 : vector<1x512xf32> to vector<32x512xf32>
    %5 = arith.addf %2, %4 : vector<32x512xf32>
    %cst_5 = arith.constant 0.000000e+00 : f32
    %6 = vector.broadcast %cst_5 : f32 to vector<32x512xf32>
    %7 = arith.maximumf %5, %6 : vector<32x512xf32>
    %8 = vector.extract_strided_slice %7 {offsets = [0, 0], sizes = [32, 128], strides = [1, 1]} : vector<32x512xf32> to vector<32x128xf32>
    %9 = vector.extract_strided_slice %7 {offsets = [0, 128], sizes = [32, 128], strides = [1, 1]} : vector<32x512xf32> to vector<32x128xf32>
    %10 = vector.extract_strided_slice %7 {offsets = [0, 256], sizes = [32, 128], strides = [1, 1]} : vector<32x512xf32> to vector<32x128xf32>
    %11 = vector.extract_strided_slice %7 {offsets = [0, 384], sizes = [32, 128], strides = [1, 1]} : vector<32x512xf32> to vector<32x128xf32>
    %12 = tpu.concatenate %8, %9, %10, %11 in 0 : vector<32x128xf32>, vector<32x128xf32>, vector<32x128xf32>, vector<32x128xf32> -> vector<128x128xf32>
    %c0_6 = arith.constant 0 : index
    %c0_7 = arith.constant 0 : index
    %13 = vector.load %arg3[%c0_6, %c0_7] : memref<256x128xf32, #tpu.memory_space<vmem>>, vector<256x128xf32>
    %cst_8 = arith.constant dense<0.000000e+00> : vector<256x128xf32>
    %14 = tpu.matmul %13, %12, %cst_8 {dimension_numbers = #tpu.dot_dimension_numbers<[1], [1], [0], [0], [0, 0, 1, 0], [], []>} : vector<256x128xf32>, vector<128x128xf32>, vector<256x128xf32> -> vector<256x128xf32>
    %15 = vector.extract_strided_slice %14 {offsets = [0, 0], sizes = [64, 128], strides = [1, 1]} : vector<256x128xf32> to vector<64x128xf32>
    %c0_9 = arith.constant 0 : index
    %c0_10 = arith.constant 0 : index
    %16 = vector.load %arg4[%c0_9, %c0_10] : memref<64x1xf32, #tpu.memory_space<vmem>>, vector<64x1xf32>
    %17 = vector.broadcast %16 : vector<64x1xf32> to vector<64x128xf32>
    %18 = arith.addf %15, %17 : vector<64x128xf32>
    %cst_11 = arith.constant 0.000000e+00 : f32
    %19 = vector.broadcast %cst_11 : f32 to vector<64x128xf32>
    %20 = arith.maximumf %18, %19 : vector<64x128xf32>
    %c0_12 = arith.constant 0 : index
    %c0_13 = arith.constant 0 : index
    %21 = vector.load %arg12[%c0_12, %c0_13] : memref<64x512xf32, #tpu.memory_space<vmem>>, vector<64x128xf32>
    tpu.vector_store %arg12[%c0_12, %c0_13], %20 {strides = array<i32>} : memref<64x512xf32, #tpu.memory_space<vmem>>, vector<64x128xf32>,
    %22 = vector.extract_strided_slice %14 {offsets = [64, 0], sizes = [64, 128], strides = [1, 1]} : vector<256x128xf32> to vector<64x128xf32>
    %c0_14 = arith.constant 0 : index
    %c0_15 = arith.constant 0 : index
    %23 = vector.load %arg4[%c0_14, %c0_15] : memref<64x1xf32, #tpu.memory_space<vmem>>, vector<64x1xf32>
    %24 = vector.broadcast %23 : vector<64x1xf32> to vector<64x128xf32>
    %25 = arith.addf %22, %24 : vector<64x128xf32>
    %cst_16 = arith.constant 0.000000e+00 : f32
    %26 = vector.broadcast %cst_16 : f32 to vector<64x128xf32>
    %27 = arith.maximumf %25, %26 : vector<64x128xf32>
    %c0_17 = arith.constant 0 : index
    %c128 = arith.constant 128 : index
    %28 = vector.load %arg12[%c0_17, %c128] : memref<64x512xf32, #tpu.memory_space<vmem>>, vector<64x128xf32>
    tpu.vector_store %arg12[%c0_17, %c128], %27 {strides = array<i32>} : memref<64x512xf32, #tpu.memory_space<vmem>>, vector<64x128xf32>,
    %29 = vector.extract_strided_slice %14 {offsets = [128, 0], sizes = [64, 128], strides = [1, 1]} : vector<256x128xf32> to vector<64x128xf32>
    %c0_18 = arith.constant 0 : index
    %c0_19 = arith.constant 0 : index
    %30 = vector.load %arg4[%c0_18, %c0_19] : memref<64x1xf32, #tpu.memory_space<vmem>>, vector<64x1xf32>
    %31 = vector.broadcast %30 : vector<64x1xf32> to vector<64x128xf32>
    %32 = arith.addf %29, %31 : vector<64x128xf32>
    %cst_20 = arith.constant 0.000000e+00 : f32
    %33 = vector.broadcast %cst_20 : f32 to vector<64x128xf32>
    %34 = arith.maximumf %32, %33 : vector<64x128xf32>
    %c0_21 = arith.constant 0 : index
    %c256 = arith.constant 256 : index
    %35 = vector.load %arg12[%c0_21, %c256] : memref<64x512xf32, #tpu.memory_space<vmem>>, vector<64x128xf32>
    tpu.vector_store %arg12[%c0_21, %c256], %34 {strides = array<i32>} : memref<64x512xf32, #tpu.memory_space<vmem>>, vector<64x128xf32>,
    %36 = vector.extract_strided_slice %14 {offsets = [192, 0], sizes = [64, 128], strides = [1, 1]} : vector<256x128xf32> to vector<64x128xf32>
    %c0_22 = arith.constant 0 : index
    %c0_23 = arith.constant 0 : index
    %37 = vector.load %arg4[%c0_22, %c0_23] : memref<64x1xf32, #tpu.memory_space<vmem>>, vector<64x1xf32>
    %38 = vector.broadcast %37 : vector<64x1xf32> to vector<64x128xf32>
    %39 = arith.addf %36, %38 : vector<64x128xf32>
    %cst_24 = arith.constant 0.000000e+00 : f32
    %40 = vector.broadcast %cst_24 : f32 to vector<64x128xf32>
    %41 = arith.maximumf %39, %40 : vector<64x128xf32>
    %c0_25 = arith.constant 0 : index
    %c384 = arith.constant 384 : index
    %42 = vector.load %arg12[%c0_25, %c384] : memref<64x512xf32, #tpu.memory_space<vmem>>, vector<64x128xf32>
    tpu.vector_store %arg12[%c0_25, %c384], %41 {strides = array<i32>} : memref<64x512xf32, #tpu.memory_space<vmem>>, vector<64x128xf32>,
    %c0_26 = arith.constant 0 : index
    %c0_27 = arith.constant 0 : index
    %43 = vector.load %arg5[%c0_26, %c0_27] : memref<128x64xf32, #tpu.memory_space<vmem>>, vector<128x64xf32>
    %c0_28 = arith.constant 0 : index
    %c0_29 = arith.constant 0 : index
    %44 = vector.load %arg12[%c0_28, %c0_29] : memref<64x512xf32, #tpu.memory_space<vmem>>, vector<64x256xf32>
    %cst_30 = arith.constant dense<0.000000e+00> : vector<128x256xf32>
    %45 = tpu.matmul %43, %44, %cst_30 {dimension_numbers = #tpu.dot_dimension_numbers<[1], [0], [0], [1], [0, 0, 1, 1], [], []>} : vector<128x64xf32>, vector<64x256xf32>, vector<128x256xf32> -> vector<128x256xf32>
    %46 = vector.extract_strided_slice %45 {offsets = [0, 0], sizes = [32, 256], strides = [1, 1]} : vector<128x256xf32> to vector<32x256xf32>
    %c0_31 = arith.constant 0 : index
    %c0_32 = arith.constant 0 : index
    %47 = vector.load %arg6[%c0_31, %c0_32] : memref<32x1xf32, #tpu.memory_space<vmem>>, vector<32x1xf32>
    %48 = vector.broadcast %47 : vector<32x1xf32> to vector<32x256xf32>
    %49 = arith.addf %46, %48 : vector<32x256xf32>
    %cst_33 = arith.constant 0.000000e+00 : f32
    %50 = vector.broadcast %cst_33 : f32 to vector<32x256xf32>
    %51 = arith.maximumf %49, %50 : vector<32x256xf32>
    %c0_34 = arith.constant 0 : index
    %c0_35 = arith.constant 0 : index
    %52 = vector.load %arg13[%c0_34, %c0_35] : memref<32x2048xf32, #tpu.memory_space<vmem>>, vector<32x256xf32>
    tpu.vector_store %arg13[%c0_34, %c0_35], %51 {strides = array<i32>} : memref<32x2048xf32, #tpu.memory_space<vmem>>, vector<32x256xf32>,
    %53 = vector.extract_strided_slice %45 {offsets = [32, 0], sizes = [32, 256], strides = [1, 1]} : vector<128x256xf32> to vector<32x256xf32>
    %c0_36 = arith.constant 0 : index
    %c0_37 = arith.constant 0 : index
    %54 = vector.load %arg6[%c0_36, %c0_37] : memref<32x1xf32, #tpu.memory_space<vmem>>, vector<32x1xf32>
    %55 = vector.broadcast %54 : vector<32x1xf32> to vector<32x256xf32>
    %56 = arith.addf %53, %55 : vector<32x256xf32>
    %cst_38 = arith.constant 0.000000e+00 : f32
    %57 = vector.broadcast %cst_38 : f32 to vector<32x256xf32>
    %58 = arith.maximumf %56, %57 : vector<32x256xf32>
    %c0_39 = arith.constant 0 : index
    %c512 = arith.constant 512 : index
    %59 = vector.load %arg13[%c0_39, %c512] : memref<32x2048xf32, #tpu.memory_space<vmem>>, vector<32x256xf32>
    tpu.vector_store %arg13[%c0_39, %c512], %58 {strides = array<i32>} : memref<32x2048xf32, #tpu.memory_space<vmem>>, vector<32x256xf32>,
    %60 = vector.extract_strided_slice %45 {offsets = [64, 0], sizes = [32, 256], strides = [1, 1]} : vector<128x256xf32> to vector<32x256xf32>
    %c0_40 = arith.constant 0 : index
    %c0_41 = arith.constant 0 : index
    %61 = vector.load %arg6[%c0_40, %c0_41] : memref<32x1xf32, #tpu.memory_space<vmem>>, vector<32x1xf32>
    %62 = vector.broadcast %61 : vector<32x1xf32> to vector<32x256xf32>
    %63 = arith.addf %60, %62 : vector<32x256xf32>
    %cst_42 = arith.constant 0.000000e+00 : f32
    %64 = vector.broadcast %cst_42 : f32 to vector<32x256xf32>
    %65 = arith.maximumf %63, %64 : vector<32x256xf32>
    %c0_43 = arith.constant 0 : index
    %c1024 = arith.constant 1024 : index
    %66 = vector.load %arg13[%c0_43, %c1024] : memref<32x2048xf32, #tpu.memory_space<vmem>>, vector<32x256xf32>
    tpu.vector_store %arg13[%c0_43, %c1024], %65 {strides = array<i32>} : memref<32x2048xf32, #tpu.memory_space<vmem>>, vector<32x256xf32>,
    %67 = vector.extract_strided_slice %45 {offsets = [96, 0], sizes = [32, 256], strides = [1, 1]} : vector<128x256xf32> to vector<32x256xf32>
    %c0_44 = arith.constant 0 : index
    %c0_45 = arith.constant 0 : index
    %68 = vector.load %arg6[%c0_44, %c0_45] : memref<32x1xf32, #tpu.memory_space<vmem>>, vector<32x1xf32>
    %69 = vector.broadcast %68 : vector<32x1xf32> to vector<32x256xf32>
    %70 = arith.addf %67, %69 : vector<32x256xf32>
    %cst_46 = arith.constant 0.000000e+00 : f32
    %71 = vector.broadcast %cst_46 : f32 to vector<32x256xf32>
    %72 = arith.maximumf %70, %71 : vector<32x256xf32>
    %c0_47 = arith.constant 0 : index
    %c1536 = arith.constant 1536 : index
    %73 = vector.load %arg13[%c0_47, %c1536] : memref<32x2048xf32, #tpu.memory_space<vmem>>, vector<32x256xf32>
    tpu.vector_store %arg13[%c0_47, %c1536], %72 {strides = array<i32>} : memref<32x2048xf32, #tpu.memory_space<vmem>>, vector<32x256xf32>,
    %c0_48 = arith.constant 0 : index
    %c0_49 = arith.constant 0 : index
    %74 = vector.load %arg5[%c0_48, %c0_49] : memref<128x64xf32, #tpu.memory_space<vmem>>, vector<128x64xf32>
    %c0_50 = arith.constant 0 : index
    %c256_51 = arith.constant 256 : index
    %75 = vector.load %arg12[%c0_50, %c256_51] : memref<64x512xf32, #tpu.memory_space<vmem>>, vector<64x256xf32>
    %cst_52 = arith.constant dense<0.000000e+00> : vector<128x256xf32>
    %76 = tpu.matmul %74, %75, %cst_52 {dimension_numbers = #tpu.dot_dimension_numbers<[1], [0], [0], [1], [0, 0, 1, 1], [], []>} : vector<128x64xf32>, vector<64x256xf32>, vector<128x256xf32> -> vector<128x256xf32>
    %77 = vector.extract_strided_slice %76 {offsets = [0, 0], sizes = [32, 256], strides = [1, 1]} : vector<128x256xf32> to vector<32x256xf32>
    %c0_53 = arith.constant 0 : index
    %c0_54 = arith.constant 0 : index
    %78 = vector.load %arg6[%c0_53, %c0_54] : memref<32x1xf32, #tpu.memory_space<vmem>>, vector<32x1xf32>
    %79 = vector.broadcast %78 : vector<32x1xf32> to vector<32x256xf32>
    %80 = arith.addf %77, %79 : vector<32x256xf32>
    %cst_55 = arith.constant 0.000000e+00 : f32
    %81 = vector.broadcast %cst_55 : f32 to vector<32x256xf32>
    %82 = arith.maximumf %80, %81 : vector<32x256xf32>
    %c0_56 = arith.constant 0 : index
    %c256_57 = arith.constant 256 : index
    %83 = vector.load %arg13[%c0_56, %c256_57] : memref<32x2048xf32, #tpu.memory_space<vmem>>, vector<32x256xf32>
    tpu.vector_store %arg13[%c0_56, %c256_57], %82 {strides = array<i32>} : memref<32x2048xf32, #tpu.memory_space<vmem>>, vector<32x256xf32>,
    %84 = vector.extract_strided_slice %76 {offsets = [32, 0], sizes = [32, 256], strides = [1, 1]} : vector<128x256xf32> to vector<32x256xf32>
    %c0_58 = arith.constant 0 : index
    %c0_59 = arith.constant 0 : index
    %85 = vector.load %arg6[%c0_58, %c0_59] : memref<32x1xf32, #tpu.memory_space<vmem>>, vector<32x1xf32>
    %86 = vector.broadcast %85 : vector<32x1xf32> to vector<32x256xf32>
    %87 = arith.addf %84, %86 : vector<32x256xf32>
    %cst_60 = arith.constant 0.000000e+00 : f32
    %88 = vector.broadcast %cst_60 : f32 to vector<32x256xf32>
    %89 = arith.maximumf %87, %88 : vector<32x256xf32>
    %c0_61 = arith.constant 0 : index
    %c768 = arith.constant 768 : index
    %90 = vector.load %arg13[%c0_61, %c768] : memref<32x2048xf32, #tpu.memory_space<vmem>>, vector<32x256xf32>
    tpu.vector_store %arg13[%c0_61, %c768], %89 {strides = array<i32>} : memref<32x2048xf32, #tpu.memory_space<vmem>>, vector<32x256xf32>,
    %91 = vector.extract_strided_slice %76 {offsets = [64, 0], sizes = [32, 256], strides = [1, 1]} : vector<128x256xf32> to vector<32x256xf32>
    %c0_62 = arith.constant 0 : index
    %c0_63 = arith.constant 0 : index
    %92 = vector.load %arg6[%c0_62, %c0_63] : memref<32x1xf32, #tpu.memory_space<vmem>>, vector<32x1xf32>
    %93 = vector.broadcast %92 : vector<32x1xf32> to vector<32x256xf32>
    %94 = arith.addf %91, %93 : vector<32x256xf32>
    %cst_64 = arith.constant 0.000000e+00 : f32
    %95 = vector.broadcast %cst_64 : f32 to vector<32x256xf32>
    %96 = arith.maximumf %94, %95 : vector<32x256xf32>
    %c0_65 = arith.constant 0 : index
    %c1280 = arith.constant 1280 : index
    %97 = vector.load %arg13[%c0_65, %c1280] : memref<32x2048xf32, #tpu.memory_space<vmem>>, vector<32x256xf32>
    tpu.vector_store %arg13[%c0_65, %c1280], %96 {strides = array<i32>} : memref<32x2048xf32, #tpu.memory_space<vmem>>, vector<32x256xf32>,
    %98 = vector.extract_strided_slice %76 {offsets = [96, 0], sizes = [32, 256], strides = [1, 1]} : vector<128x256xf32> to vector<32x256xf32>
    %c0_66 = arith.constant 0 : index
    %c0_67 = arith.constant 0 : index
    %99 = vector.load %arg6[%c0_66, %c0_67] : memref<32x1xf32, #tpu.memory_space<vmem>>, vector<32x1xf32>
    %100 = vector.broadcast %99 : vector<32x1xf32> to vector<32x256xf32>
    %101 = arith.addf %98, %100 : vector<32x256xf32>
    %cst_68 = arith.constant 0.000000e+00 : f32
    %102 = vector.broadcast %cst_68 : f32 to vector<32x256xf32>
    %103 = arith.maximumf %101, %102 : vector<32x256xf32>
    %c0_69 = arith.constant 0 : index
    %c1792 = arith.constant 1792 : index
    %104 = vector.load %arg13[%c0_69, %c1792] : memref<32x2048xf32, #tpu.memory_space<vmem>>, vector<32x256xf32>
    tpu.vector_store %arg13[%c0_69, %c1792], %103 {strides = array<i32>} : memref<32x2048xf32, #tpu.memory_space<vmem>>, vector<32x256xf32>,
    %c0_70 = arith.constant 0 : index
    %c0_71 = arith.constant 0 : index
    %105 = vector.load %arg7[%c0_70, %c0_71] : memref<64x32xf32, #tpu.memory_space<vmem>>, vector<64x32xf32>
    %c0_72 = arith.constant 0 : index
    %c0_73 = arith.constant 0 : index
    %106 = vector.load %arg13[%c0_72, %c0_73] : memref<32x2048xf32, #tpu.memory_space<vmem>>, vector<32x512xf32>
    %cst_74 = arith.constant dense<0.000000e+00> : vector<64x512xf32>
    %107 = tpu.matmul %105, %106, %cst_74 {dimension_numbers = #tpu.dot_dimension_numbers<[1], [0], [0], [1], [0, 0, 1, 1], [], []>} : vector<64x32xf32>, vector<32x512xf32>, vector<64x512xf32> -> vector<64x512xf32>
    %108 = vector.extract_strided_slice %107 {offsets = [0, 0], sizes = [16, 512], strides = [1, 1]} : vector<64x512xf32> to vector<16x512xf32>
    %c0_75 = arith.constant 0 : index
    %c0_76 = arith.constant 0 : index
    %109 = vector.load %arg8[%c0_75, %c0_76] : memref<16x1xf32, #tpu.memory_space<vmem>>, vector<16x1xf32>
    %110 = vector.broadcast %109 : vector<16x1xf32> to vector<16x512xf32>
    %111 = arith.addf %108, %110 : vector<16x512xf32>
    %cst_77 = arith.constant 0.000000e+00 : f32
    %112 = vector.broadcast %cst_77 : f32 to vector<16x512xf32>
    %113 = arith.maximumf %111, %112 : vector<16x512xf32>
    %c0_78 = arith.constant 0 : index
    %c0_79 = arith.constant 0 : index
    %114 = vector.load %arg14[%c0_78, %c0_79] : memref<16x8192xf32, #tpu.memory_space<vmem>>, vector<16x512xf32>
    tpu.vector_store %arg14[%c0_78, %c0_79], %113 {strides = array<i32>} : memref<16x8192xf32, #tpu.memory_space<vmem>>, vector<16x512xf32>,
    %115 = vector.extract_strided_slice %107 {offsets = [16, 0], sizes = [16, 512], strides = [1, 1]} : vector<64x512xf32> to vector<16x512xf32>
    %c0_80 = arith.constant 0 : index
    %c0_81 = arith.constant 0 : index
    %116 = vector.load %arg8[%c0_80, %c0_81] : memref<16x1xf32, #tpu.memory_space<vmem>>, vector<16x1xf32>
    %117 = vector.broadcast %116 : vector<16x1xf32> to vector<16x512xf32>
    %118 = arith.addf %115, %117 : vector<16x512xf32>
    %cst_82 = arith.constant 0.000000e+00 : f32
    %119 = vector.broadcast %cst_82 : f32 to vector<16x512xf32>
    %120 = arith.maximumf %118, %119 : vector<16x512xf32>
    %c0_83 = arith.constant 0 : index
    %c2048 = arith.constant 2048 : index
    %121 = vector.load %arg14[%c0_83, %c2048] : memref<16x8192xf32, #tpu.memory_space<vmem>>, vector<16x512xf32>
    tpu.vector_store %arg14[%c0_83, %c2048], %120 {strides = array<i32>} : memref<16x8192xf32, #tpu.memory_space<vmem>>, vector<16x512xf32>,
    %122 = vector.extract_strided_slice %107 {offsets = [32, 0], sizes = [16, 512], strides = [1, 1]} : vector<64x512xf32> to vector<16x512xf32>
    %c0_84 = arith.constant 0 : index
    %c0_85 = arith.constant 0 : index
    %123 = vector.load %arg8[%c0_84, %c0_85] : memref<16x1xf32, #tpu.memory_space<vmem>>, vector<16x1xf32>
    %124 = vector.broadcast %123 : vector<16x1xf32> to vector<16x512xf32>
    %125 = arith.addf %122, %124 : vector<16x512xf32>
    %cst_86 = arith.constant 0.000000e+00 : f32
    %126 = vector.broadcast %cst_86 : f32 to vector<16x512xf32>
    %127 = arith.maximumf %125, %126 : vector<16x512xf32>
    %c0_87 = arith.constant 0 : index
    %c4096 = arith.constant 4096 : index
    %128 = vector.load %arg14[%c0_87, %c4096] : memref<16x8192xf32, #tpu.memory_space<vmem>>, vector<16x512xf32>
    tpu.vector_store %arg14[%c0_87, %c4096], %127 {strides = array<i32>} : memref<16x8192xf32, #tpu.memory_space<vmem>>, vector<16x512xf32>,
    %129 = vector.extract_strided_slice %107 {offsets = [48, 0], sizes = [16, 512], strides = [1, 1]} : vector<64x512xf32> to vector<16x512xf32>
    %c0_88 = arith.constant 0 : index
    %c0_89 = arith.constant 0 : index
    %130 = vector.load %arg8[%c0_88, %c0_89] : memref<16x1xf32, #tpu.memory_space<vmem>>, vector<16x1xf32>
    %131 = vector.broadcast %130 : vector<16x1xf32> to vector<16x512xf32>
    %132 = arith.addf %129, %131 : vector<16x512xf32>
    %cst_90 = arith.constant 0.000000e+00 : f32
    %133 = vector.broadcast %cst_90 : f32 to vector<16x512xf32>
    %134 = arith.maximumf %132, %133 : vector<16x512xf32>
    %c0_91 = arith.constant 0 : index
    %c6144 = arith.constant 6144 : index
    %135 = vector.load %arg14[%c0_91, %c6144] : memref<16x8192xf32, #tpu.memory_space<vmem>>, vector<16x512xf32>
    tpu.vector_store %arg14[%c0_91, %c6144], %134 {strides = array<i32>} : memref<16x8192xf32, #tpu.memory_space<vmem>>, vector<16x512xf32>,
    %c0_92 = arith.constant 0 : index
    %c0_93 = arith.constant 0 : index
    %136 = vector.load %arg7[%c0_92, %c0_93] : memref<64x32xf32, #tpu.memory_space<vmem>>, vector<64x32xf32>
    %c0_94 = arith.constant 0 : index
    %c512_95 = arith.constant 512 : index
    %137 = vector.load %arg13[%c0_94, %c512_95] : memref<32x2048xf32, #tpu.memory_space<vmem>>, vector<32x512xf32>
    %cst_96 = arith.constant dense<0.000000e+00> : vector<64x512xf32>
    %138 = tpu.matmul %136, %137, %cst_96 {dimension_numbers = #tpu.dot_dimension_numbers<[1], [0], [0], [1], [0, 0, 1, 1], [], []>} : vector<64x32xf32>, vector<32x512xf32>, vector<64x512xf32> -> vector<64x512xf32>
    %139 = vector.extract_strided_slice %138 {offsets = [0, 0], sizes = [16, 512], strides = [1, 1]} : vector<64x512xf32> to vector<16x512xf32>
    %c0_97 = arith.constant 0 : index
    %c0_98 = arith.constant 0 : index
    %140 = vector.load %arg8[%c0_97, %c0_98] : memref<16x1xf32, #tpu.memory_space<vmem>>, vector<16x1xf32>
    %141 = vector.broadcast %140 : vector<16x1xf32> to vector<16x512xf32>
    %142 = arith.addf %139, %141 : vector<16x512xf32>
    %cst_99 = arith.constant 0.000000e+00 : f32
    %143 = vector.broadcast %cst_99 : f32 to vector<16x512xf32>
    %144 = arith.maximumf %142, %143 : vector<16x512xf32>
    %c0_100 = arith.constant 0 : index
    %c512_101 = arith.constant 512 : index
    %145 = vector.load %arg14[%c0_100, %c512_101] : memref<16x8192xf32, #tpu.memory_space<vmem>>, vector<16x512xf32>
    tpu.vector_store %arg14[%c0_100, %c512_101], %144 {strides = array<i32>} : memref<16x8192xf32, #tpu.memory_space<vmem>>, vector<16x512xf32>,
    %146 = vector.extract_strided_slice %138 {offsets = [16, 0], sizes = [16, 512], strides = [1, 1]} : vector<64x512xf32> to vector<16x512xf32>
    %c0_102 = arith.constant 0 : index
    %c0_103 = arith.constant 0 : index
    %147 = vector.load %arg8[%c0_102, %c0_103] : memref<16x1xf32, #tpu.memory_space<vmem>>, vector<16x1xf32>
    %148 = vector.broadcast %147 : vector<16x1xf32> to vector<16x512xf32>
    %149 = arith.addf %146, %148 : vector<16x512xf32>
    %cst_104 = arith.constant 0.000000e+00 : f32
    %150 = vector.broadcast %cst_104 : f32 to vector<16x512xf32>
    %151 = arith.maximumf %149, %150 : vector<16x512xf32>
    %c0_105 = arith.constant 0 : index
    %c2560 = arith.constant 2560 : index
    %152 = vector.load %arg14[%c0_105, %c2560] : memref<16x8192xf32, #tpu.memory_space<vmem>>, vector<16x512xf32>
    tpu.vector_store %arg14[%c0_105, %c2560], %151 {strides = array<i32>} : memref<16x8192xf32, #tpu.memory_space<vmem>>, vector<16x512xf32>,
    %153 = vector.extract_strided_slice %138 {offsets = [32, 0], sizes = [16, 512], strides = [1, 1]} : vector<64x512xf32> to vector<16x512xf32>
    %c0_106 = arith.constant 0 : index
    %c0_107 = arith.constant 0 : index
    %154 = vector.load %arg8[%c0_106, %c0_107] : memref<16x1xf32, #tpu.memory_space<vmem>>, vector<16x1xf32>
    %155 = vector.broadcast %154 : vector<16x1xf32> to vector<16x512xf32>
    %156 = arith.addf %153, %155 : vector<16x512xf32>
    %cst_108 = arith.constant 0.000000e+00 : f32
    %157 = vector.broadcast %cst_108 : f32 to vector<16x512xf32>
    %158 = arith.maximumf %156, %157 : vector<16x512xf32>
    %c0_109 = arith.constant 0 : index
    %c4608 = arith.constant 4608 : index
    %159 = vector.load %arg14[%c0_109, %c4608] : memref<16x8192xf32, #tpu.memory_space<vmem>>, vector<16x512xf32>
    tpu.vector_store %arg14[%c0_109, %c4608], %158 {strides = array<i32>} : memref<16x8192xf32, #tpu.memory_space<vmem>>, vector<16x512xf32>,
    %160 = vector.extract_strided_slice %138 {offsets = [48, 0], sizes = [16, 512], strides = [1, 1]} : vector<64x512xf32> to vector<16x512xf32>
    %c0_110 = arith.constant 0 : index
    %c0_111 = arith.constant 0 : index
    %161 = vector.load %arg8[%c0_110, %c0_111] : memref<16x1xf32, #tpu.memory_space<vmem>>, vector<16x1xf32>
    %162 = vector.broadcast %161 : vector<16x1xf32> to vector<16x512xf32>
    %163 = arith.addf %160, %162 : vector<16x512xf32>
    %cst_112 = arith.constant 0.000000e+00 : f32
    %164 = vector.broadcast %cst_112 : f32 to vector<16x512xf32>
    %165 = arith.maximumf %163, %164 : vector<16x512xf32>
    %c0_113 = arith.constant 0 : index
    %c6656 = arith.constant 6656 : index
    %166 = vector.load %arg14[%c0_113, %c6656] : memref<16x8192xf32, #tpu.memory_space<vmem>>, vector<16x512xf32>
    tpu.vector_store %arg14[%c0_113, %c6656], %165 {strides = array<i32>} : memref<16x8192xf32, #tpu.memory_space<vmem>>, vector<16x512xf32>,
    %c0_114 = arith.constant 0 : index
    %c0_115 = arith.constant 0 : index
    %167 = vector.load %arg7[%c0_114, %c0_115] : memref<64x32xf32, #tpu.memory_space<vmem>>, vector<64x32xf32>
    %c0_116 = arith.constant 0 : index
    %c1024_117 = arith.constant 1024 : index
    %168 = vector.load %arg13[%c0_116, %c1024_117] : memref<32x2048xf32, #tpu.memory_space<vmem>>, vector<32x512xf32>
    %cst_118 = arith.constant dense<0.000000e+00> : vector<64x512xf32>
    %169 = tpu.matmul %167, %168, %cst_118 {dimension_numbers = #tpu.dot_dimension_numbers<[1], [0], [0], [1], [0, 0, 1, 1], [], []>} : vector<64x32xf32>, vector<32x512xf32>, vector<64x512xf32> -> vector<64x512xf32>
    %170 = vector.extract_strided_slice %169 {offsets = [0, 0], sizes = [16, 512], strides = [1, 1]} : vector<64x512xf32> to vector<16x512xf32>
    %c0_119 = arith.constant 0 : index
    %c0_120 = arith.constant 0 : index
    %171 = vector.load %arg8[%c0_119, %c0_120] : memref<16x1xf32, #tpu.memory_space<vmem>>, vector<16x1xf32>
    %172 = vector.broadcast %171 : vector<16x1xf32> to vector<16x512xf32>
    %173 = arith.addf %170, %172 : vector<16x512xf32>
    %cst_121 = arith.constant 0.000000e+00 : f32
    %174 = vector.broadcast %cst_121 : f32 to vector<16x512xf32>
    %175 = arith.maximumf %173, %174 : vector<16x512xf32>
    %c0_122 = arith.constant 0 : index
    %c1024_123 = arith.constant 1024 : index
    %176 = vector.load %arg14[%c0_122, %c1024_123] : memref<16x8192xf32, #tpu.memory_space<vmem>>, vector<16x512xf32>
    tpu.vector_store %arg14[%c0_122, %c1024_123], %175 {strides = array<i32>} : memref<16x8192xf32, #tpu.memory_space<vmem>>, vector<16x512xf32>,
    %177 = vector.extract_strided_slice %169 {offsets = [16, 0], sizes = [16, 512], strides = [1, 1]} : vector<64x512xf32> to vector<16x512xf32>
    %c0_124 = arith.constant 0 : index
    %c0_125 = arith.constant 0 : index
    %178 = vector.load %arg8[%c0_124, %c0_125] : memref<16x1xf32, #tpu.memory_space<vmem>>, vector<16x1xf32>
    %179 = vector.broadcast %178 : vector<16x1xf32> to vector<16x512xf32>
    %180 = arith.addf %177, %179 : vector<16x512xf32>
    %cst_126 = arith.constant 0.000000e+00 : f32
    %181 = vector.broadcast %cst_126 : f32 to vector<16x512xf32>
    %182 = arith.maximumf %180, %181 : vector<16x512xf32>
    %c0_127 = arith.constant 0 : index
    %c3072 = arith.constant 3072 : index
    %183 = vector.load %arg14[%c0_127, %c3072] : memref<16x8192xf32, #tpu.memory_space<vmem>>, vector<16x512xf32>
    tpu.vector_store %arg14[%c0_127, %c3072], %182 {strides = array<i32>} : memref<16x8192xf32, #tpu.memory_space<vmem>>, vector<16x512xf32>,
    %184 = vector.extract_strided_slice %169 {offsets = [32, 0], sizes = [16, 512], strides = [1, 1]} : vector<64x512xf32> to vector<16x512xf32>
    %c0_128 = arith.constant 0 : index
    %c0_129 = arith.constant 0 : index
    %185 = vector.load %arg8[%c0_128, %c0_129] : memref<16x1xf32, #tpu.memory_space<vmem>>, vector<16x1xf32>
    %186 = vector.broadcast %185 : vector<16x1xf32> to vector<16x512xf32>
    %187 = arith.addf %184, %186 : vector<16x512xf32>
    %cst_130 = arith.constant 0.000000e+00 : f32
    %188 = vector.broadcast %cst_130 : f32 to vector<16x512xf32>
    %189 = arith.maximumf %187, %188 : vector<16x512xf32>
    %c0_131 = arith.constant 0 : index
    %c5120 = arith.constant 5120 : index
    %190 = vector.load %arg14[%c0_131, %c5120] : memref<16x8192xf32, #tpu.memory_space<vmem>>, vector<16x512xf32>
    tpu.vector_store %arg14[%c0_131, %c5120], %189 {strides = array<i32>} : memref<16x8192xf32, #tpu.memory_space<vmem>>, vector<16x512xf32>,
    %191 = vector.extract_strided_slice %169 {offsets = [48, 0], sizes = [16, 512], strides = [1, 1]} : vector<64x512xf32> to vector<16x512xf32>
    %c0_132 = arith.constant 0 : index
    %c0_133 = arith.constant 0 : index
    %192 = vector.load %arg8[%c0_132, %c0_133] : memref<16x1xf32, #tpu.memory_space<vmem>>, vector<16x1xf32>
    %193 = vector.broadcast %192 : vector<16x1xf32> to vector<16x512xf32>
    %194 = arith.addf %191, %193 : vector<16x512xf32>
    %cst_134 = arith.constant 0.000000e+00 : f32
    %195 = vector.broadcast %cst_134 : f32 to vector<16x512xf32>
    %196 = arith.maximumf %194, %195 : vector<16x512xf32>
    %c0_135 = arith.constant 0 : index
    %c7168 = arith.constant 7168 : index
    %197 = vector.load %arg14[%c0_135, %c7168] : memref<16x8192xf32, #tpu.memory_space<vmem>>, vector<16x512xf32>
    tpu.vector_store %arg14[%c0_135, %c7168], %196 {strides = array<i32>} : memref<16x8192xf32, #tpu.memory_space<vmem>>, vector<16x512xf32>,
    %c0_136 = arith.constant 0 : index
    %c0_137 = arith.constant 0 : index
    %198 = vector.load %arg7[%c0_136, %c0_137] : memref<64x32xf32, #tpu.memory_space<vmem>>, vector<64x32xf32>
    %c0_138 = arith.constant 0 : index
    %c1536_139 = arith.constant 1536 : index
    %199 = vector.load %arg13[%c0_138, %c1536_139] : memref<32x2048xf32, #tpu.memory_space<vmem>>, vector<32x512xf32>
    %cst_140 = arith.constant dense<0.000000e+00> : vector<64x512xf32>
    %200 = tpu.matmul %198, %199, %cst_140 {dimension_numbers = #tpu.dot_dimension_numbers<[1], [0], [0], [1], [0, 0, 1, 1], [], []>} : vector<64x32xf32>, vector<32x512xf32>, vector<64x512xf32> -> vector<64x512xf32>
    %201 = vector.extract_strided_slice %200 {offsets = [0, 0], sizes = [16, 512], strides = [1, 1]} : vector<64x512xf32> to vector<16x512xf32>
    %c0_141 = arith.constant 0 : index
    %c0_142 = arith.constant 0 : index
    %202 = vector.load %arg8[%c0_141, %c0_142] : memref<16x1xf32, #tpu.memory_space<vmem>>, vector<16x1xf32>
    %203 = vector.broadcast %202 : vector<16x1xf32> to vector<16x512xf32>
    %204 = arith.addf %201, %203 : vector<16x512xf32>
    %cst_143 = arith.constant 0.000000e+00 : f32
    %205 = vector.broadcast %cst_143 : f32 to vector<16x512xf32>
    %206 = arith.maximumf %204, %205 : vector<16x512xf32>
    %c0_144 = arith.constant 0 : index
    %c1536_145 = arith.constant 1536 : index
    %207 = vector.load %arg14[%c0_144, %c1536_145] : memref<16x8192xf32, #tpu.memory_space<vmem>>, vector<16x512xf32>
    tpu.vector_store %arg14[%c0_144, %c1536_145], %206 {strides = array<i32>} : memref<16x8192xf32, #tpu.memory_space<vmem>>, vector<16x512xf32>,
    %208 = vector.extract_strided_slice %200 {offsets = [16, 0], sizes = [16, 512], strides = [1, 1]} : vector<64x512xf32> to vector<16x512xf32>
    %c0_146 = arith.constant 0 : index
    %c0_147 = arith.constant 0 : index
    %209 = vector.load %arg8[%c0_146, %c0_147] : memref<16x1xf32, #tpu.memory_space<vmem>>, vector<16x1xf32>
    %210 = vector.broadcast %209 : vector<16x1xf32> to vector<16x512xf32>
    %211 = arith.addf %208, %210 : vector<16x512xf32>
    %cst_148 = arith.constant 0.000000e+00 : f32
    %212 = vector.broadcast %cst_148 : f32 to vector<16x512xf32>
    %213 = arith.maximumf %211, %212 : vector<16x512xf32>
    %c0_149 = arith.constant 0 : index
    %c3584 = arith.constant 3584 : index
    %214 = vector.load %arg14[%c0_149, %c3584] : memref<16x8192xf32, #tpu.memory_space<vmem>>, vector<16x512xf32>
    tpu.vector_store %arg14[%c0_149, %c3584], %213 {strides = array<i32>} : memref<16x8192xf32, #tpu.memory_space<vmem>>, vector<16x512xf32>,
    %215 = vector.extract_strided_slice %200 {offsets = [32, 0], sizes = [16, 512], strides = [1, 1]} : vector<64x512xf32> to vector<16x512xf32>
    %c0_150 = arith.constant 0 : index
    %c0_151 = arith.constant 0 : index
    %216 = vector.load %arg8[%c0_150, %c0_151] : memref<16x1xf32, #tpu.memory_space<vmem>>, vector<16x1xf32>
    %217 = vector.broadcast %216 : vector<16x1xf32> to vector<16x512xf32>
    %218 = arith.addf %215, %217 : vector<16x512xf32>
    %cst_152 = arith.constant 0.000000e+00 : f32
    %219 = vector.broadcast %cst_152 : f32 to vector<16x512xf32>
    %220 = arith.maximumf %218, %219 : vector<16x512xf32>
    %c0_153 = arith.constant 0 : index
    %c5632 = arith.constant 5632 : index
    %221 = vector.load %arg14[%c0_153, %c5632] : memref<16x8192xf32, #tpu.memory_space<vmem>>, vector<16x512xf32>
    tpu.vector_store %arg14[%c0_153, %c5632], %220 {strides = array<i32>} : memref<16x8192xf32, #tpu.memory_space<vmem>>, vector<16x512xf32>,
    %222 = vector.extract_strided_slice %200 {offsets = [48, 0], sizes = [16, 512], strides = [1, 1]} : vector<64x512xf32> to vector<16x512xf32>
    %c0_154 = arith.constant 0 : index
    %c0_155 = arith.constant 0 : index
    %223 = vector.load %arg8[%c0_154, %c0_155] : memref<16x1xf32, #tpu.memory_space<vmem>>, vector<16x1xf32>
    %224 = vector.broadcast %223 : vector<16x1xf32> to vector<16x512xf32>
    %225 = arith.addf %222, %224 : vector<16x512xf32>
    %cst_156 = arith.constant 0.000000e+00 : f32
    %226 = vector.broadcast %cst_156 : f32 to vector<16x512xf32>
    %227 = arith.maximumf %225, %226 : vector<16x512xf32>
    %c0_157 = arith.constant 0 : index
    %c7680 = arith.constant 7680 : index
    %228 = vector.load %arg14[%c0_157, %c7680] : memref<16x8192xf32, #tpu.memory_space<vmem>>, vector<16x512xf32>
    tpu.vector_store %arg14[%c0_157, %c7680], %227 {strides = array<i32>} : memref<16x8192xf32, #tpu.memory_space<vmem>>, vector<16x512xf32>,
    %c0_158 = arith.constant 0 : index
    %c0_159 = arith.constant 0 : index
    %229 = vector.load %arg9[%c0_158, %c0_159] : memref<12x16xf32, #tpu.memory_space<vmem>>, vector<12x16xf32>
    %c0_160 = arith.constant 0 : index
    %c0_161 = arith.constant 0 : index
    %230 = vector.load %arg14[%c0_160, %c0_161] : memref<16x8192xf32, #tpu.memory_space<vmem>>, vector<16x1024xf32>
    %cst_162 = arith.constant dense<0.000000e+00> : vector<12x1024xf32>
    %231 = tpu.matmul %229, %230, %cst_162 {dimension_numbers = #tpu.dot_dimension_numbers<[1], [0], [0], [1], [0, 0, 1, 1], [], []>} : vector<12x16xf32>, vector<16x1024xf32>, vector<12x1024xf32> -> vector<12x1024xf32>
    %c0_163 = arith.constant 0 : index
    %c0_164 = arith.constant 0 : index
    %232 = vector.load %arg10[%c0_163, %c0_164] : memref<12x1xf32, #tpu.memory_space<vmem>>, vector<12x1xf32>
    %233 = vector.broadcast %232 : vector<12x1xf32> to vector<12x1024xf32>
    %234 = arith.addf %231, %233 : vector<12x1024xf32>
    %cst_165 = arith.constant 0.000000e+00 : f32
    %235 = vector.broadcast %cst_165 : f32 to vector<12x1024xf32>
    %236 = arith.maximumf %234, %235 : vector<12x1024xf32>
    %c0_166 = arith.constant 0 : index
    %c0_167 = arith.constant 0 : index
    %237 = vector.load %arg11[%c0_166, %c0_167] : memref<12x8192xf32, #tpu.memory_space<vmem>>, vector<12x1024xf32>
    tpu.vector_store %arg11[%c0_166, %c0_167], %236 {strides = array<i32>} : memref<12x8192xf32, #tpu.memory_space<vmem>>, vector<12x1024xf32>,
    %c0_168 = arith.constant 0 : index
    %c0_169 = arith.constant 0 : index
    %238 = vector.load %arg9[%c0_168, %c0_169] : memref<12x16xf32, #tpu.memory_space<vmem>>, vector<12x16xf32>
    %c0_170 = arith.constant 0 : index
    %c1024_171 = arith.constant 1024 : index
    %239 = vector.load %arg14[%c0_170, %c1024_171] : memref<16x8192xf32, #tpu.memory_space<vmem>>, vector<16x1024xf32>
    %cst_172 = arith.constant dense<0.000000e+00> : vector<12x1024xf32>
    %240 = tpu.matmul %238, %239, %cst_172 {dimension_numbers = #tpu.dot_dimension_numbers<[1], [0], [0], [1], [0, 0, 1, 1], [], []>} : vector<12x16xf32>, vector<16x1024xf32>, vector<12x1024xf32> -> vector<12x1024xf32>
    %c0_173 = arith.constant 0 : index
    %c0_174 = arith.constant 0 : index
    %241 = vector.load %arg10[%c0_173, %c0_174] : memref<12x1xf32, #tpu.memory_space<vmem>>, vector<12x1xf32>
    %242 = vector.broadcast %241 : vector<12x1xf32> to vector<12x1024xf32>
    %243 = arith.addf %240, %242 : vector<12x1024xf32>
    %cst_175 = arith.constant 0.000000e+00 : f32
    %244 = vector.broadcast %cst_175 : f32 to vector<12x1024xf32>
    %245 = arith.maximumf %243, %244 : vector<12x1024xf32>
    %c0_176 = arith.constant 0 : index
    %c1024_177 = arith.constant 1024 : index
    %246 = vector.load %arg11[%c0_176, %c1024_177] : memref<12x8192xf32, #tpu.memory_space<vmem>>, vector<12x1024xf32>
    tpu.vector_store %arg11[%c0_176, %c1024_177], %245 {strides = array<i32>} : memref<12x8192xf32, #tpu.memory_space<vmem>>, vector<12x1024xf32>,
    %c0_178 = arith.constant 0 : index
    %c0_179 = arith.constant 0 : index
    %247 = vector.load %arg9[%c0_178, %c0_179] : memref<12x16xf32, #tpu.memory_space<vmem>>, vector<12x16xf32>
    %c0_180 = arith.constant 0 : index
    %c2048_181 = arith.constant 2048 : index
    %248 = vector.load %arg14[%c0_180, %c2048_181] : memref<16x8192xf32, #tpu.memory_space<vmem>>, vector<16x1024xf32>
    %cst_182 = arith.constant dense<0.000000e+00> : vector<12x1024xf32>
    %249 = tpu.matmul %247, %248, %cst_182 {dimension_numbers = #tpu.dot_dimension_numbers<[1], [0], [0], [1], [0, 0, 1, 1], [], []>} : vector<12x16xf32>, vector<16x1024xf32>, vector<12x1024xf32> -> vector<12x1024xf32>
    %c0_183 = arith.constant 0 : index
    %c0_184 = arith.constant 0 : index
    %250 = vector.load %arg10[%c0_183, %c0_184] : memref<12x1xf32, #tpu.memory_space<vmem>>, vector<12x1xf32>
    %251 = vector.broadcast %250 : vector<12x1xf32> to vector<12x1024xf32>
    %252 = arith.addf %249, %251 : vector<12x1024xf32>
    %cst_185 = arith.constant 0.000000e+00 : f32
    %253 = vector.broadcast %cst_185 : f32 to vector<12x1024xf32>
    %254 = arith.maximumf %252, %253 : vector<12x1024xf32>
    %c0_186 = arith.constant 0 : index
    %c2048_187 = arith.constant 2048 : index
    %255 = vector.load %arg11[%c0_186, %c2048_187] : memref<12x8192xf32, #tpu.memory_space<vmem>>, vector<12x1024xf32>
    tpu.vector_store %arg11[%c0_186, %c2048_187], %254 {strides = array<i32>} : memref<12x8192xf32, #tpu.memory_space<vmem>>, vector<12x1024xf32>,
    %c0_188 = arith.constant 0 : index
    %c0_189 = arith.constant 0 : index
    %256 = vector.load %arg9[%c0_188, %c0_189] : memref<12x16xf32, #tpu.memory_space<vmem>>, vector<12x16xf32>
    %c0_190 = arith.constant 0 : index
    %c3072_191 = arith.constant 3072 : index
    %257 = vector.load %arg14[%c0_190, %c3072_191] : memref<16x8192xf32, #tpu.memory_space<vmem>>, vector<16x1024xf32>
    %cst_192 = arith.constant dense<0.000000e+00> : vector<12x1024xf32>
    %258 = tpu.matmul %256, %257, %cst_192 {dimension_numbers = #tpu.dot_dimension_numbers<[1], [0], [0], [1], [0, 0, 1, 1], [], []>} : vector<12x16xf32>, vector<16x1024xf32>, vector<12x1024xf32> -> vector<12x1024xf32>
    %c0_193 = arith.constant 0 : index
    %c0_194 = arith.constant 0 : index
    %259 = vector.load %arg10[%c0_193, %c0_194] : memref<12x1xf32, #tpu.memory_space<vmem>>, vector<12x1xf32>
    %260 = vector.broadcast %259 : vector<12x1xf32> to vector<12x1024xf32>
    %261 = arith.addf %258, %260 : vector<12x1024xf32>
    %cst_195 = arith.constant 0.000000e+00 : f32
    %262 = vector.broadcast %cst_195 : f32 to vector<12x1024xf32>
    %263 = arith.maximumf %261, %262 : vector<12x1024xf32>
    %c0_196 = arith.constant 0 : index
    %c3072_197 = arith.constant 3072 : index
    %264 = vector.load %arg11[%c0_196, %c3072_197] : memref<12x8192xf32, #tpu.memory_space<vmem>>, vector<12x1024xf32>
    tpu.vector_store %arg11[%c0_196, %c3072_197], %263 {strides = array<i32>} : memref<12x8192xf32, #tpu.memory_space<vmem>>, vector<12x1024xf32>,
    %c0_198 = arith.constant 0 : index
    %c0_199 = arith.constant 0 : index
    %265 = vector.load %arg9[%c0_198, %c0_199] : memref<12x16xf32, #tpu.memory_space<vmem>>, vector<12x16xf32>
    %c0_200 = arith.constant 0 : index
    %c4096_201 = arith.constant 4096 : index
    %266 = vector.load %arg14[%c0_200, %c4096_201] : memref<16x8192xf32, #tpu.memory_space<vmem>>, vector<16x1024xf32>
    %cst_202 = arith.constant dense<0.000000e+00> : vector<12x1024xf32>
    %267 = tpu.matmul %265, %266, %cst_202 {dimension_numbers = #tpu.dot_dimension_numbers<[1], [0], [0], [1], [0, 0, 1, 1], [], []>} : vector<12x16xf32>, vector<16x1024xf32>, vector<12x1024xf32> -> vector<12x1024xf32>
    %c0_203 = arith.constant 0 : index
    %c0_204 = arith.constant 0 : index
    %268 = vector.load %arg10[%c0_203, %c0_204] : memref<12x1xf32, #tpu.memory_space<vmem>>, vector<12x1xf32>
    %269 = vector.broadcast %268 : vector<12x1xf32> to vector<12x1024xf32>
    %270 = arith.addf %267, %269 : vector<12x1024xf32>
    %cst_205 = arith.constant 0.000000e+00 : f32
    %271 = vector.broadcast %cst_205 : f32 to vector<12x1024xf32>
    %272 = arith.maximumf %270, %271 : vector<12x1024xf32>
    %c0_206 = arith.constant 0 : index
    %c4096_207 = arith.constant 4096 : index
    %273 = vector.load %arg11[%c0_206, %c4096_207] : memref<12x8192xf32, #tpu.memory_space<vmem>>, vector<12x1024xf32>
    tpu.vector_store %arg11[%c0_206, %c4096_207], %272 {strides = array<i32>} : memref<12x8192xf32, #tpu.memory_space<vmem>>, vector<12x1024xf32>,
    %c0_208 = arith.constant 0 : index
    %c0_209 = arith.constant 0 : index
    %274 = vector.load %arg9[%c0_208, %c0_209] : memref<12x16xf32, #tpu.memory_space<vmem>>, vector<12x16xf32>
    %c0_210 = arith.constant 0 : index
    %c5120_211 = arith.constant 5120 : index
    %275 = vector.load %arg14[%c0_210, %c5120_211] : memref<16x8192xf32, #tpu.memory_space<vmem>>, vector<16x1024xf32>
    %cst_212 = arith.constant dense<0.000000e+00> : vector<12x1024xf32>
    %276 = tpu.matmul %274, %275, %cst_212 {dimension_numbers = #tpu.dot_dimension_numbers<[1], [0], [0], [1], [0, 0, 1, 1], [], []>} : vector<12x16xf32>, vector<16x1024xf32>, vector<12x1024xf32> -> vector<12x1024xf32>
    %c0_213 = arith.constant 0 : index
    %c0_214 = arith.constant 0 : index
    %277 = vector.load %arg10[%c0_213, %c0_214] : memref<12x1xf32, #tpu.memory_space<vmem>>, vector<12x1xf32>
    %278 = vector.broadcast %277 : vector<12x1xf32> to vector<12x1024xf32>
    %279 = arith.addf %276, %278 : vector<12x1024xf32>
    %cst_215 = arith.constant 0.000000e+00 : f32
    %280 = vector.broadcast %cst_215 : f32 to vector<12x1024xf32>
    %281 = arith.maximumf %279, %280 : vector<12x1024xf32>
    %c0_216 = arith.constant 0 : index
    %c5120_217 = arith.constant 5120 : index
    %282 = vector.load %arg11[%c0_216, %c5120_217] : memref<12x8192xf32, #tpu.memory_space<vmem>>, vector<12x1024xf32>
    tpu.vector_store %arg11[%c0_216, %c5120_217], %281 {strides = array<i32>} : memref<12x8192xf32, #tpu.memory_space<vmem>>, vector<12x1024xf32>,
    %c0_218 = arith.constant 0 : index
    %c0_219 = arith.constant 0 : index
    %283 = vector.load %arg9[%c0_218, %c0_219] : memref<12x16xf32, #tpu.memory_space<vmem>>, vector<12x16xf32>
    %c0_220 = arith.constant 0 : index
    %c6144_221 = arith.constant 6144 : index
    %284 = vector.load %arg14[%c0_220, %c6144_221] : memref<16x8192xf32, #tpu.memory_space<vmem>>, vector<16x1024xf32>
    %cst_222 = arith.constant dense<0.000000e+00> : vector<12x1024xf32>
    %285 = tpu.matmul %283, %284, %cst_222 {dimension_numbers = #tpu.dot_dimension_numbers<[1], [0], [0], [1], [0, 0, 1, 1], [], []>} : vector<12x16xf32>, vector<16x1024xf32>, vector<12x1024xf32> -> vector<12x1024xf32>
    %c0_223 = arith.constant 0 : index
    %c0_224 = arith.constant 0 : index
    %286 = vector.load %arg10[%c0_223, %c0_224] : memref<12x1xf32, #tpu.memory_space<vmem>>, vector<12x1xf32>
    %287 = vector.broadcast %286 : vector<12x1xf32> to vector<12x1024xf32>
    %288 = arith.addf %285, %287 : vector<12x1024xf32>
    %cst_225 = arith.constant 0.000000e+00 : f32
    %289 = vector.broadcast %cst_225 : f32 to vector<12x1024xf32>
    %290 = arith.maximumf %288, %289 : vector<12x1024xf32>
    %c0_226 = arith.constant 0 : index
    %c6144_227 = arith.constant 6144 : index
    %291 = vector.load %arg11[%c0_226, %c6144_227] : memref<12x8192xf32, #tpu.memory_space<vmem>>, vector<12x1024xf32>
    tpu.vector_store %arg11[%c0_226, %c6144_227], %290 {strides = array<i32>} : memref<12x8192xf32, #tpu.memory_space<vmem>>, vector<12x1024xf32>,
    %c0_228 = arith.constant 0 : index
    %c0_229 = arith.constant 0 : index
    %292 = vector.load %arg9[%c0_228, %c0_229] : memref<12x16xf32, #tpu.memory_space<vmem>>, vector<12x16xf32>
    %c0_230 = arith.constant 0 : index
    %c7168_231 = arith.constant 7168 : index
    %293 = vector.load %arg14[%c0_230, %c7168_231] : memref<16x8192xf32, #tpu.memory_space<vmem>>, vector<16x1024xf32>
    %cst_232 = arith.constant dense<0.000000e+00> : vector<12x1024xf32>
    %294 = tpu.matmul %292, %293, %cst_232 {dimension_numbers = #tpu.dot_dimension_numbers<[1], [0], [0], [1], [0, 0, 1, 1], [], []>} : vector<12x16xf32>, vector<16x1024xf32>, vector<12x1024xf32> -> vector<12x1024xf32>
    %c0_233 = arith.constant 0 : index
    %c0_234 = arith.constant 0 : index
    %295 = vector.load %arg10[%c0_233, %c0_234] : memref<12x1xf32, #tpu.memory_space<vmem>>, vector<12x1xf32>
    %296 = vector.broadcast %295 : vector<12x1xf32> to vector<12x1024xf32>
    %297 = arith.addf %294, %296 : vector<12x1024xf32>
    %cst_235 = arith.constant 0.000000e+00 : f32
    %298 = vector.broadcast %cst_235 : f32 to vector<12x1024xf32>
    %299 = arith.maximumf %297, %298 : vector<12x1024xf32>
    %c0_236 = arith.constant 0 : index
    %c7168_237 = arith.constant 7168 : index
    %300 = vector.load %arg11[%c0_236, %c7168_237] : memref<12x8192xf32, #tpu.memory_space<vmem>>, vector<12x1024xf32>
    tpu.vector_store %arg11[%c0_236, %c7168_237], %299 {strides = array<i32>} : memref<12x8192xf32, #tpu.memory_space<vmem>>, vector<12x1024xf32>,
    return
  }
}

</mosaic_0001>

<llo_original>
// kernel: conv_decoder_forward.1
$region0: #{conv_decoder_forward.1}
  #allocation0 [shape = 'u32[]', space=smem, size = 0x4, offset = 0x4, fixed_abs, tag = 'smem constant byte address 0x4 - core index']
  #allocation1 [shape = 'u32[72,128]{1,0:T(1,128)}', space=vmem, size = 0x9000, scoped, tag = 'internal scratch']
  #allocation2 [shape = 'f32[64,512]{1,0:T(8,128)}', space=vmem, size = 0x20000, scoped, tag = 'scratch operand']
  #allocation3 [shape = 'f32[32,2048]{1,0:T(8,128)}', space=vmem, size = 0x40000, scoped, tag = 'scratch operand']
  #allocation4 [shape = 'f32[16,8192]{1,0:T(8,128)}', space=vmem, size = 0x80000, scoped, tag = 'scratch operand']
  %s0 = inlined_call_operand.vmem [shape: f32[32,256], index: 0, kind: input, shape index: {}]
  %s1 = inlined_call_operand.vmem [shape: f32[256,512], index: 1, kind: input, shape index: {}]
  %s2 = inlined_call_operand.vmem [shape: f32[1,512], index: 2, kind: input, shape index: {}]
  %s3 = inlined_call_operand.vmem [shape: f32[256,128], index: 3, kind: input, shape index: {}]
  %s4 = inlined_call_operand.vmem [shape: f32[64,1], index: 4, kind: input, shape index: {}]
  %s5 = inlined_call_operand.vmem [shape: f32[128,64], index: 5, kind: input, shape index: {}]
  %s6 = inlined_call_operand.vmem [shape: f32[32,1], index: 6, kind: input, shape index: {}]
  %s7 = inlined_call_operand.vmem [shape: f32[64,32], index: 7, kind: input, shape index: {}]
  %s8 = inlined_call_operand.vmem [shape: f32[16,1], index: 8, kind: input, shape index: {}]
  %s9 = inlined_call_operand.vmem [shape: f32[12,16], index: 9, kind: input, shape index: {}]
  %s10 = inlined_call_operand.vmem [shape: f32[12,1], index: 10, kind: input, shape index: {}]
  %s11 = inlined_call_operand.vmem [shape: f32[12,8192], index: 11, kind: output, shape index: {}]
  %s12 = sld [smem:[#allocation0]]
  $region54: #{conv_decoder_forward.1} parent=0
    _
  %s14 = ssub.s32 1, %s12
  %s15 = scalar_select 0, %s14, %s12
  // Predicated region
  $region2: #{conv_decoder_forward.1} parent=0 // pred_check
    _
  $region3: #{conv_decoder_forward.1} parent=0 // pred_check_branch
    %17 = sbr.rel (0) target = $region5
  $region4: #{conv_decoder_forward.1} parent=0 // pred_region
    _
  $region5: #{conv_decoder_forward.1} parent=0 // pred_fallthru
    _
  // Predicated region
  $region6: #{conv_decoder_forward.1} parent=0 // pred_check
    _
  $region7: #{conv_decoder_forward.1} parent=0 // pred_check_branch
    %19 = sbr.rel (0) target = $region9
  $region8: #{conv_decoder_forward.1} parent=0 // pred_region
    _
  $region9: #{conv_decoder_forward.1} parent=0 // pred_fallthru
    _
  // Predicated region
  $region10: #{conv_decoder_forward.1} parent=0 // pred_check
    _
  $region11: #{conv_decoder_forward.1} parent=0 // pred_check_branch
    %21 = sbr.rel (0) target = $region13
  $region12: #{conv_decoder_forward.1} parent=0 // pred_region
    _
  $region13: #{conv_decoder_forward.1} parent=0 // pred_fallthru
    _
  // Predicated region
  $region14: #{conv_decoder_forward.1} parent=0 // pred_check
    _
  $region15: #{conv_decoder_forward.1} parent=0 // pred_check_branch
    %23 = sbr.rel (0) target = $region17
  $region16: #{conv_decoder_forward.1} parent=0 // pred_region
    _
  $region17: #{conv_decoder_forward.1} parent=0 // pred_fallthru
    _
  // Predicated region
  $region18: #{conv_decoder_forward.1} parent=0 // pred_check
    _
  $region19: #{conv_decoder_forward.1} parent=0 // pred_check_branch
    %25 = sbr.rel (0) target = $region21
  $region20: #{conv_decoder_forward.1} parent=0 // pred_region
    _
  $region21: #{conv_decoder_forward.1} parent=0 // pred_fallthru
    _
  // Predicated region
  $region22: #{conv_decoder_forward.1} parent=0 // pred_check
    _
  $region23: #{conv_decoder_forward.1} parent=0 // pred_check_branch
    %27 = sbr.rel (0) target = $region25
  $region24: #{conv_decoder_forward.1} parent=0 // pred_region
    _
  $region25: #{conv_decoder_forward.1} parent=0 // pred_fallthru
    _
  // Predicated region
  $region26: #{conv_decoder_forward.1} parent=0 // pred_check
    _
  $region27: #{conv_decoder_forward.1} parent=0 // pred_check_branch
    %29 = sbr.rel (0) target = $region29
  $region28: #{conv_decoder_forward.1} parent=0 // pred_region
    _
  $region29: #{conv_decoder_forward.1} parent=0 // pred_fallthru
    _
  // Predicated region
  $region30: #{conv_decoder_forward.1} parent=0 // pred_check
    _
  $region31: #{conv_decoder_forward.1} parent=0 // pred_check_branch
    %31 = sbr.rel (0) target = $region33
  $region32: #{conv_decoder_forward.1} parent=0 // pred_region
    _
  $region33: #{conv_decoder_forward.1} parent=0 // pred_fallthru
    _
  // Predicated region
  $region34: #{conv_decoder_forward.1} parent=0 // pred_check
    _
  $region35: #{conv_decoder_forward.1} parent=0 // pred_check_branch
    %33 = sbr.rel (0) target = $region37
  $region36: #{conv_decoder_forward.1} parent=0 // pred_region
    _
  $region37: #{conv_decoder_forward.1} parent=0 // pred_fallthru
    _
  // Predicated region
  $region38: #{conv_decoder_forward.1} parent=0 // pred_check
    _
  $region39: #{conv_decoder_forward.1} parent=0 // pred_check_branch
    %35 = sbr.rel (0) target = $region41
  $region40: #{conv_decoder_forward.1} parent=0 // pred_region
    _
  $region41: #{conv_decoder_forward.1} parent=0 // pred_fallthru
    _
  // Predicated region
  $region42: #{conv_decoder_forward.1} parent=0 // pred_check
    _
  $region43: #{conv_decoder_forward.1} parent=0 // pred_check_branch
    %37 = sbr.rel (0) target = $region45
  $region44: #{conv_decoder_forward.1} parent=0 // pred_region
    _
  $region45: #{conv_decoder_forward.1} parent=0 // pred_fallthru
    _
  %v38 = vld [vmem:[%s0] sm:$0xff]
  %v39 = vld [vmem:[%s0 + $0x8] sm:$0xff]
  %v40 = vld [vmem:[%s0 + $0x10] sm:$0xff]
  %v41 = vld [vmem:[%s0 + $0x18] sm:$0xff]
  %v42 = vld [vmem:[%s0 + $0x20] sm:$0xff]
  %v43 = vld [vmem:[%s0 + $0x28] sm:$0xff]
  %v44 = vld [vmem:[%s0 + $0x30] sm:$0xff]
  %v45 = vld [vmem:[%s0 + $0x38] sm:$0xff]
  %v46 = vld [vmem:[%s1] sm:$0xff]
  %v47 = vld [vmem:[%s1 + $0x8] sm:$0xff]
  %v48 = vld [vmem:[%s1 + $0x10] sm:$0xff]
  %v49 = vld [vmem:[%s1 + $0x18] sm:$0xff]
  %v50 = vld [vmem:[%s1 + $0x20] sm:$0xff]
  %v51 = vld [vmem:[%s1 + $0x28] sm:$0xff]
  %v52 = vld [vmem:[%s1 + $0x30] sm:$0xff]
  %v53 = vld [vmem:[%s1 + $0x38] sm:$0xff]
  %v54 = vld [vmem:[%s1 + $0x40] sm:$0xff]
  %v55 = vld [vmem:[%s1 + $0x48] sm:$0xff]
  %v56 = vld [vmem:[%s1 + $0x50] sm:$0xff]
  %v57 = vld [vmem:[%s1 + $0x58] sm:$0xff]
  %v58 = vld [vmem:[%s1 + $0x60] sm:$0xff]
  %v59 = vld [vmem:[%s1 + $0x68] sm:$0xff]
  %v60 = vld [vmem:[%s1 + $0x70] sm:$0xff]
  %v61 = vld [vmem:[%s1 + $0x78] sm:$0xff]
  %v62 = vld [vmem:[%s1 + $0x80] sm:$0xff]
  %v63 = vld [vmem:[%s1 + $0x88] sm:$0xff]
  %v64 = vld [vmem:[%s1 + $0x90] sm:$0xff]
  %v65 = vld [vmem:[%s1 + $0x98] sm:$0xff]
  %v66 = vld [vmem:[%s1 + $0xa0] sm:$0xff]
  %v67 = vld [vmem:[%s1 + $0xa8] sm:$0xff]
  %v68 = vld [vmem:[%s1 + $0xb0] sm:$0xff]
  %v69 = vld [vmem:[%s1 + $0xb8] sm:$0xff]
  %v70 = vld [vmem:[%s1 + $0xc0] sm:$0xff]
  %v71 = vld [vmem:[%s1 + $0xc8] sm:$0xff]
  %v72 = vld [vmem:[%s1 + $0xd0] sm:$0xff]
  %v73 = vld [vmem:[%s1 + $0xd8] sm:$0xff]
  %v74 = vld [vmem:[%s1 + $0xe0] sm:$0xff]
  %v75 = vld [vmem:[%s1 + $0xe8] sm:$0xff]
  %v76 = vld [vmem:[%s1 + $0xf0] sm:$0xff]
  %v77 = vld [vmem:[%s1 + $0xf8] sm:$0xff]
  %v78 = vld [vmem:[%s1 + $0x100] sm:$0xff]
  %v79 = vld [vmem:[%s1 + $0x108] sm:$0xff]
  %v80 = vld [vmem:[%s1 + $0x110] sm:$0xff]
  %v81 = vld [vmem:[%s1 + $0x118] sm:$0xff]
  %v82 = vld [vmem:[%s1 + $0x120] sm:$0xff]
  %v83 = vld [vmem:[%s1 + $0x128] sm:$0xff]
  %v84 = vld [vmem:[%s1 + $0x130] sm:$0xff]
  %v85 = vld [vmem:[%s1 + $0x138] sm:$0xff]
  %v86 = vld [vmem:[%s1 + $0x140] sm:$0xff]
  %v87 = vld [vmem:[%s1 + $0x148] sm:$0xff]
  %v88 = vld [vmem:[%s1 + $0x150] sm:$0xff]
  %v89 = vld [vmem:[%s1 + $0x158] sm:$0xff]
  %v90 = vld [vmem:[%s1 + $0x160] sm:$0xff]
  %v91 = vld [vmem:[%s1 + $0x168] sm:$0xff]
  %v92 = vld [vmem:[%s1 + $0x170] sm:$0xff]
  %v93 = vld [vmem:[%s1 + $0x178] sm:$0xff]
  %v94 = vld [vmem:[%s1 + $0x180] sm:$0xff]
  %v95 = vld [vmem:[%s1 + $0x188] sm:$0xff]
  %v96 = vld [vmem:[%s1 + $0x190] sm:$0xff]
  %v97 = vld [vmem:[%s1 + $0x198] sm:$0xff]
  %v98 = vld [vmem:[%s1 + $0x1a0] sm:$0xff]
  %v99 = vld [vmem:[%s1 + $0x1a8] sm:$0xff]
  %v100 = vld [vmem:[%s1 + $0x1b0] sm:$0xff]
  %v101 = vld [vmem:[%s1 + $0x1b8] sm:$0xff]
  %v102 = vld [vmem:[%s1 + $0x1c0] sm:$0xff]
  %v103 = vld [vmem:[%s1 + $0x1c8] sm:$0xff]
  %v104 = vld [vmem:[%s1 + $0x1d0] sm:$0xff]
  %v105 = vld [vmem:[%s1 + $0x1d8] sm:$0xff]
  %v106 = vld [vmem:[%s1 + $0x1e0] sm:$0xff]
  %v107 = vld [vmem:[%s1 + $0x1e8] sm:$0xff]
  %v108 = vld [vmem:[%s1 + $0x1f0] sm:$0xff]
  %v109 = vld [vmem:[%s1 + $0x1f8] sm:$0xff]
  %v110 = vld [vmem:[%s1 + $0x200] sm:$0xff]
  %v111 = vld [vmem:[%s1 + $0x208] sm:$0xff]
  %v112 = vld [vmem:[%s1 + $0x210] sm:$0xff]
  %v113 = vld [vmem:[%s1 + $0x218] sm:$0xff]
  %v114 = vld [vmem:[%s1 + $0x220] sm:$0xff]
  %v115 = vld [vmem:[%s1 + $0x228] sm:$0xff]
  %v116 = vld [vmem:[%s1 + $0x230] sm:$0xff]
  %v117 = vld [vmem:[%s1 + $0x238] sm:$0xff]
  %v118 = vld [vmem:[%s1 + $0x240] sm:$0xff]
  %v119 = vld [vmem:[%s1 + $0x248] sm:$0xff]
  %v120 = vld [vmem:[%s1 + $0x250] sm:$0xff]
  %v121 = vld [vmem:[%s1 + $0x258] sm:$0xff]
  %v122 = vld [vmem:[%s1 + $0x260] sm:$0xff]
  %v123 = vld [vmem:[%s1 + $0x268] sm:$0xff]
  %v124 = vld [vmem:[%s1 + $0x270] sm:$0xff]
  %v125 = vld [vmem:[%s1 + $0x278] sm:$0xff]
  %v126 = vld [vmem:[%s1 + $0x280] sm:$0xff]
  %v127 = vld [vmem:[%s1 + $0x288] sm:$0xff]
  %v128 = vld [vmem:[%s1 + $0x290] sm:$0xff]
  %v129 = vld [vmem:[%s1 + $0x298] sm:$0xff]
  %v130 = vld [vmem:[%s1 + $0x2a0] sm:$0xff]
  %v131 = vld [vmem:[%s1 + $0x2a8] sm:$0xff]
  %v132 = vld [vmem:[%s1 + $0x2b0] sm:$0xff]
  %v133 = vld [vmem:[%s1 + $0x2b8] sm:$0xff]
  %v134 = vld [vmem:[%s1 + $0x2c0] sm:$0xff]
  %v135 = vld [vmem:[%s1 + $0x2c8] sm:$0xff]
  %v136 = vld [vmem:[%s1 + $0x2d0] sm:$0xff]
  %v137 = vld [vmem:[%s1 + $0x2d8] sm:$0xff]
  %v138 = vld [vmem:[%s1 + $0x2e0] sm:$0xff]
  %v139 = vld [vmem:[%s1 + $0x2e8] sm:$0xff]
  %v140 = vld [vmem:[%s1 + $0x2f0] sm:$0xff]
  %v141 = vld [vmem:[%s1 + $0x2f8] sm:$0xff]
  %v142 = vld [vmem:[%s1 + $0x300] sm:$0xff]
  %v143 = vld [vmem:[%s1 + $0x308] sm:$0xff]
  %v144 = vld [vmem:[%s1 + $0x310] sm:$0xff]
  %v145 = vld [vmem:[%s1 + $0x318] sm:$0xff]
  %v146 = vld [vmem:[%s1 + $0x320] sm:$0xff]
  %v147 = vld [vmem:[%s1 + $0x328] sm:$0xff]
  %v148 = vld [vmem:[%s1 + $0x330] sm:$0xff]
  %v149 = vld [vmem:[%s1 + $0x338] sm:$0xff]
  %v150 = vld [vmem:[%s1 + $0x340] sm:$0xff]
  %v151 = vld [vmem:[%s1 + $0x348] sm:$0xff]
  %v152 = vld [vmem:[%s1 + $0x350] sm:$0xff]
  %v153 = vld [vmem:[%s1 + $0x358] sm:$0xff]
  %v154 = vld [vmem:[%s1 + $0x360] sm:$0xff]
  %v155 = vld [vmem:[%s1 + $0x368] sm:$0xff]
  %v156 = vld [vmem:[%s1 + $0x370] sm:$0xff]
  %v157 = vld [vmem:[%s1 + $0x378] sm:$0xff]
  %v158 = vld [vmem:[%s1 + $0x380] sm:$0xff]
  %v159 = vld [vmem:[%s1 + $0x388] sm:$0xff]
  %v160 = vld [vmem:[%s1 + $0x390] sm:$0xff]
  %v161 = vld [vmem:[%s1 + $0x398] sm:$0xff]
  %v162 = vld [vmem:[%s1 + $0x3a0] sm:$0xff]
  %v163 = vld [vmem:[%s1 + $0x3a8] sm:$0xff]
  %v164 = vld [vmem:[%s1 + $0x3b0] sm:$0xff]
  %v165 = vld [vmem:[%s1 + $0x3b8] sm:$0xff]
  %v166 = vld [vmem:[%s1 + $0x3c0] sm:$0xff]
  %v167 = vld [vmem:[%s1 + $0x3c8] sm:$0xff]
  %v168 = vld [vmem:[%s1 + $0x3d0] sm:$0xff]
  %v169 = vld [vmem:[%s1 + $0x3d8] sm:$0xff]
  %v170 = vld [vmem:[%s1 + $0x3e0] sm:$0xff]
  %v171 = vld [vmem:[%s1 + $0x3e8] sm:$0xff]
  %v172 = vld [vmem:[%s1 + $0x3f0] sm:$0xff]
  %v173 = vld [vmem:[%s1 + $0x3f8] sm:$0xff]
  %v174 = vld [vmem:[%s2] sm:$0xf]
  %v176 = vperm.slane %v174, 0
  %v177 = vperm.slane %v174, 1
  %v178 = vperm.slane %v174, 2
  %v179 = vperm.slane %v174, 3
  %184 = vmatpush.msra.mxu0 %v106
  %185 = vmatpush.msra.mxu0 %v102
  %186 = vmatpush.msra.mxu0 %v98
  %187 = vmatpush.msra.mxu0 %v94
  %188 = vmatpush.msra.mxu0 %v90
  %189 = vmatpush.msra.mxu0 %v86
  %190 = vmatpush.msra.mxu0 %v82
  %191 = vmatpush.msra.mxu0 %v78
  %192 = vmatpush.msra.mxu0 %v74
  %193 = vmatpush.msra.mxu0 %v70
  %194 = vmatpush.msra.mxu0 %v66
  %195 = vmatpush.msra.mxu0 %v62
  %196 = vmatpush.msra.mxu0 %v58
  %197 = vmatpush.msra.mxu0 %v54
  %198 = vmatpush.msra.mxu0 %v50
  %199 = vmatpush.msra.mxu0 %v46
  %200 = vmatmul.f32.gmra.mxu0 %v38
  %v201 = vpop.f32.mrf.mxu0
  %v202 = vadd.f32 %v176, %v201
  %203 = vmatmul.f32.gmra.mxu0 %v40
  %v204 = vpop.f32.mrf.mxu0
  %v205 = vadd.f32 %v176, %v204
  %206 = vmatmul.f32.gmra.mxu0 %v42
  %v207 = vpop.f32.mrf.mxu0
  %v208 = vadd.f32 %v176, %v207
  %209 = vmatmul.f32.gmra.mxu0 %v44
  %v210 = vpop.f32.mrf.mxu0
  %v211 = vadd.f32 %v176, %v210
  %212 = vdwg.mxu0
  %213 = vmatpush.msra.mxu0 %v170
  %214 = vmatpush.msra.mxu0 %v166
  %215 = vmatpush.msra.mxu0 %v162
  %216 = vmatpush.msra.mxu0 %v158
  %217 = vmatpush.msra.mxu0 %v154
  %218 = vmatpush.msra.mxu0 %v150
  %219 = vmatpush.msra.mxu0 %v146
  %220 = vmatpush.msra.mxu0 %v142
  %221 = vmatpush.msra.mxu0 %v138
  %222 = vmatpush.msra.mxu0 %v134
  %223 = vmatpush.msra.mxu0 %v130
  %224 = vmatpush.msra.mxu0 %v126
  %225 = vmatpush.msra.mxu0 %v122
  %226 = vmatpush.msra.mxu0 %v118
  %227 = vmatpush.msra.mxu0 %v114
  %228 = vmatpush.msra.mxu0 %v110
  %229 = vmatmul.f32.gmra.mxu0 %v39
  %v230 = vpop.f32.mrf.mxu0
  %v231 = vadd.f32 %v202, %v230
  %232 = vmatmul.f32.gmra.mxu0 %v41
  %v233 = vpop.f32.mrf.mxu0
  %v234 = vadd.f32 %v205, %v233
  %235 = vmatmul.f32.gmra.mxu0 %v43
  %v236 = vpop.f32.mrf.mxu0
  %v237 = vadd.f32 %v208, %v236
  %238 = vmatmul.f32.gmra.mxu0 %v45
  %v239 = vpop.f32.mrf.mxu0
  %v240 = vadd.f32 %v211, %v239
  %241 = vdwg.mxu0
  %242 = vmatpush.msra.mxu0 %v107
  %243 = vmatpush.msra.mxu0 %v103
  %244 = vmatpush.msra.mxu0 %v99
  %245 = vmatpush.msra.mxu0 %v95
  %246 = vmatpush.msra.mxu0 %v91
  %247 = vmatpush.msra.mxu0 %v87
  %248 = vmatpush.msra.mxu0 %v83
  %249 = vmatpush.msra.mxu0 %v79
  %250 = vmatpush.msra.mxu0 %v75
  %251 = vmatpush.msra.mxu0 %v71
  %252 = vmatpush.msra.mxu0 %v67
  %253 = vmatpush.msra.mxu0 %v63
  %254 = vmatpush.msra.mxu0 %v59
  %255 = vmatpush.msra.mxu0 %v55
  %256 = vmatpush.msra.mxu0 %v51
  %257 = vmatpush.msra.mxu0 %v47
  %258 = vmatmul.f32.gmra.mxu0 %v38
  %v259 = vpop.f32.mrf.mxu0
  %v260 = vadd.f32 %v177, %v259
  %261 = vmatmul.f32.gmra.mxu0 %v40
  %v262 = vpop.f32.mrf.mxu0
  %v263 = vadd.f32 %v177, %v262
  %264 = vmatmul.f32.gmra.mxu0 %v42
  %v265 = vpop.f32.mrf.mxu0
  %v266 = vadd.f32 %v177, %v265
  %267 = vmatmul.f32.gmra.mxu0 %v44
  %v268 = vpop.f32.mrf.mxu0
  %v269 = vadd.f32 %v177, %v268
  %270 = vdwg.mxu0
  %271 = vmatpush.msra.mxu0 %v171
  %272 = vmatpush.msra.mxu0 %v167
  %273 = vmatpush.msra.mxu0 %v163
  %274 = vmatpush.msra.mxu0 %v159
  %275 = vmatpush.msra.mxu0 %v155
  %276 = vmatpush.msra.mxu0 %v151
  %277 = vmatpush.msra.mxu0 %v147
  %278 = vmatpush.msra.mxu0 %v143
  %279 = vmatpush.msra.mxu0 %v139
  %280 = vmatpush.msra.mxu0 %v135
  %281 = vmatpush.msra.mxu0 %v131
  %282 = vmatpush.msra.mxu0 %v127
  %283 = vmatpush.msra.mxu0 %v123
  %284 = vmatpush.msra.mxu0 %v119
  %285 = vmatpush.msra.mxu0 %v115
  %286 = vmatpush.msra.mxu0 %v111
  %287 = vmatmul.f32.gmra.mxu0 %v39
  %v288 = vpop.f32.mrf.mxu0
  %v289 = vadd.f32 %v260, %v288
  %290 = vmatmul.f32.gmra.mxu0 %v41
  %v291 = vpop.f32.mrf.mxu0
  %v292 = vadd.f32 %v263, %v291
  %293 = vmatmul.f32.gmra.mxu0 %v43
  %v294 = vpop.f32.mrf.mxu0
  %v295 = vadd.f32 %v266, %v294
  %296 = vmatmul.f32.gmra.mxu0 %v45
  %v297 = vpop.f32.mrf.mxu0
  %v298 = vadd.f32 %v269, %v297
  %299 = vdwg.mxu0
  %300 = vmatpush.msra.mxu0 %v108
  %301 = vmatpush.msra.mxu0 %v104
  %302 = vmatpush.msra.mxu0 %v100
  %303 = vmatpush.msra.mxu0 %v96
  %304 = vmatpush.msra.mxu0 %v92
  %305 = vmatpush.msra.mxu0 %v88
  %306 = vmatpush.msra.mxu0 %v84
  %307 = vmatpush.msra.mxu0 %v80
  %308 = vmatpush.msra.mxu0 %v76
  %309 = vmatpush.msra.mxu0 %v72
  %310 = vmatpush.msra.mxu0 %v68
  %311 = vmatpush.msra.mxu0 %v64
  %312 = vmatpush.msra.mxu0 %v60
  %313 = vmatpush.msra.mxu0 %v56
  %314 = vmatpush.msra.mxu0 %v52
  %315 = vmatpush.msra.mxu0 %v48
  %316 = vmatmul.f32.gmra.mxu0 %v38
  %v317 = vpop.f32.mrf.mxu0
  %v318 = vadd.f32 %v178, %v317
  %319 = vmatmul.f32.gmra.mxu0 %v40
  %v320 = vpop.f32.mrf.mxu0
  %v321 = vadd.f32 %v178, %v320
  %322 = vmatmul.f32.gmra.mxu0 %v42
  %v323 = vpop.f32.mrf.mxu0
  %v324 = vadd.f32 %v178, %v323
  %325 = vmatmul.f32.gmra.mxu0 %v44
  %v326 = vpop.f32.mrf.mxu0
  %v327 = vadd.f32 %v178, %v326
  %328 = vdwg.mxu0
  %329 = vmatpush.msra.mxu0 %v172
  %330 = vmatpush.msra.mxu0 %v168
  %331 = vmatpush.msra.mxu0 %v164
  %332 = vmatpush.msra.mxu0 %v160
  %333 = vmatpush.msra.mxu0 %v156
  %334 = vmatpush.msra.mxu0 %v152
  %335 = vmatpush.msra.mxu0 %v148
  %336 = vmatpush.msra.mxu0 %v144
  %337 = vmatpush.msra.mxu0 %v140
  %338 = vmatpush.msra.mxu0 %v136
  %339 = vmatpush.msra.mxu0 %v132
  %340 = vmatpush.msra.mxu0 %v128
  %341 = vmatpush.msra.mxu0 %v124
  %342 = vmatpush.msra.mxu0 %v120
  %343 = vmatpush.msra.mxu0 %v116
  %344 = vmatpush.msra.mxu0 %v112
  %345 = vmatmul.f32.gmra.mxu0 %v39
  %v346 = vpop.f32.mrf.mxu0
  %v347 = vadd.f32 %v318, %v346
  %348 = vmatmul.f32.gmra.mxu0 %v41
  %v349 = vpop.f32.mrf.mxu0
  %v350 = vadd.f32 %v321, %v349
  %351 = vmatmul.f32.gmra.mxu0 %v43
  %v352 = vpop.f32.mrf.mxu0
  %v353 = vadd.f32 %v324, %v352
  %354 = vmatmul.f32.gmra.mxu0 %v45
  %v355 = vpop.f32.mrf.mxu0
  %v356 = vadd.f32 %v327, %v355
  %357 = vdwg.mxu0
  %358 = vmatpush.msra.mxu0 %v109
  %359 = vmatpush.msra.mxu0 %v105
  %360 = vmatpush.msra.mxu0 %v101
  %361 = vmatpush.msra.mxu0 %v97
  %362 = vmatpush.msra.mxu0 %v93
  %363 = vmatpush.msra.mxu0 %v89
  %364 = vmatpush.msra.mxu0 %v85
  %365 = vmatpush.msra.mxu0 %v81
  %366 = vmatpush.msra.mxu0 %v77
  %367 = vmatpush.msra.mxu0 %v73
  %368 = vmatpush.msra.mxu0 %v69
  %369 = vmatpush.msra.mxu0 %v65
  %370 = vmatpush.msra.mxu0 %v61
  %371 = vmatpush.msra.mxu0 %v57
  %372 = vmatpush.msra.mxu0 %v53
  %373 = vmatpush.msra.mxu0 %v49
  %374 = vmatmul.f32.gmra.mxu0 %v38
  %v375 = vpop.f32.mrf.mxu0
  %v376 = vadd.f32 %v179, %v375
  %377 = vmatmul.f32.gmra.mxu0 %v40
  %v378 = vpop.f32.mrf.mxu0
  %v379 = vadd.f32 %v179, %v378
  %380 = vmatmul.f32.gmra.mxu0 %v42
  %v381 = vpop.f32.mrf.mxu0
  %v382 = vadd.f32 %v179, %v381
  %383 = vmatmul.f32.gmra.mxu0 %v44
  %v384 = vpop.f32.mrf.mxu0
  %v385 = vadd.f32 %v179, %v384
  %386 = vdwg.mxu0
  %387 = vmatpush.msra.mxu0 %v173
  %388 = vmatpush.msra.mxu0 %v169
  %389 = vmatpush.msra.mxu0 %v165
  %390 = vmatpush.msra.mxu0 %v161
  %391 = vmatpush.msra.mxu0 %v157
  %392 = vmatpush.msra.mxu0 %v153
  %393 = vmatpush.msra.mxu0 %v149
  %394 = vmatpush.msra.mxu0 %v145
  %395 = vmatpush.msra.mxu0 %v141
  %396 = vmatpush.msra.mxu0 %v137
  %397 = vmatpush.msra.mxu0 %v133
  %398 = vmatpush.msra.mxu0 %v129
  %399 = vmatpush.msra.mxu0 %v125
  %400 = vmatpush.msra.mxu0 %v121
  %401 = vmatpush.msra.mxu0 %v117
  %402 = vmatpush.msra.mxu0 %v113
  %403 = vmatmul.f32.gmra.mxu0 %v39
  %v404 = vpop.f32.mrf.mxu0
  %v405 = vadd.f32 %v376, %v404
  %406 = vmatmul.f32.gmra.mxu0 %v41
  %v407 = vpop.f32.mrf.mxu0
  %v408 = vadd.f32 %v379, %v407
  %409 = vmatmul.f32.gmra.mxu0 %v43
  %v410 = vpop.f32.mrf.mxu0
  %v411 = vadd.f32 %v382, %v410
  %412 = vmatmul.f32.gmra.mxu0 %v45
  %v413 = vpop.f32.mrf.mxu0
  %v414 = vadd.f32 %v385, %v413
  %415 = vdwg.mxu0
  %v416 = vmax.f32 %v231, 0.0
  %v417 = vmax.f32 %v289, 0.0
  %v418 = vmax.f32 %v347, 0.0
  %v419 = vmax.f32 %v405, 0.0
  %v420 = vmax.f32 %v234, 0.0
  %v421 = vmax.f32 %v292, 0.0
  %v422 = vmax.f32 %v350, 0.0
  %v423 = vmax.f32 %v408, 0.0
  %v424 = vmax.f32 %v237, 0.0
  %v425 = vmax.f32 %v295, 0.0
  %v426 = vmax.f32 %v353, 0.0
  %v427 = vmax.f32 %v411, 0.0
  %v428 = vmax.f32 %v240, 0.0
  %v429 = vmax.f32 %v298, 0.0
  %v430 = vmax.f32 %v356, 0.0
  %v431 = vmax.f32 %v414, 0.0
  %v432 = vld [vmem:[%s3] sm:$0xff]
  %v433 = vld [vmem:[%s3 + $0x8] sm:$0xff]
  %v434 = vld [vmem:[%s3 + $0x10] sm:$0xff]
  %v435 = vld [vmem:[%s3 + $0x18] sm:$0xff]
  %v436 = vld [vmem:[%s3 + $0x20] sm:$0xff]
  %v437 = vld [vmem:[%s3 + $0x28] sm:$0xff]
  %v438 = vld [vmem:[%s3 + $0x30] sm:$0xff]
  %v439 = vld [vmem:[%s3 + $0x38] sm:$0xff]
  %v440 = vld [vmem:[%s3 + $0x40] sm:$0xff]
  %v441 = vld [vmem:[%s3 + $0x48] sm:$0xff]
  %v442 = vld [vmem:[%s3 + $0x50] sm:$0xff]
  %v443 = vld [vmem:[%s3 + $0x58] sm:$0xff]
  %v444 = vld [vmem:[%s3 + $0x60] sm:$0xff]
  %v445 = vld [vmem:[%s3 + $0x68] sm:$0xff]
  %v446 = vld [vmem:[%s3 + $0x70] sm:$0xff]
  %v447 = vld [vmem:[%s3 + $0x78] sm:$0xff]
  %v448 = vld [vmem:[%s3 + $0x80] sm:$0xff]
  %v449 = vld [vmem:[%s3 + $0x88] sm:$0xff]
  %v450 = vld [vmem:[%s3 + $0x90] sm:$0xff]
  %v451 = vld [vmem:[%s3 + $0x98] sm:$0xff]
  %v452 = vld [vmem:[%s3 + $0xa0] sm:$0xff]
  %v453 = vld [vmem:[%s3 + $0xa8] sm:$0xff]
  %v454 = vld [vmem:[%s3 + $0xb0] sm:$0xff]
  %v455 = vld [vmem:[%s3 + $0xb8] sm:$0xff]
  %v456 = vld [vmem:[%s3 + $0xc0] sm:$0xff]
  %v457 = vld [vmem:[%s3 + $0xc8] sm:$0xff]
  %v458 = vld [vmem:[%s3 + $0xd0] sm:$0xff]
  %v459 = vld [vmem:[%s3 + $0xd8] sm:$0xff]
  %v460 = vld [vmem:[%s3 + $0xe0] sm:$0xff]
  %v461 = vld [vmem:[%s3 + $0xe8] sm:$0xff]
  %v462 = vld [vmem:[%s3 + $0xf0] sm:$0xff]
  %v463 = vld [vmem:[%s3 + $0xf8] sm:$0xff]
  %464 = vmatpush.xpose.msra.mxu0 %v431
  %465 = vmatpush.xpose.msra.mxu0 %v427
  %466 = vmatpush.xpose.msra.mxu0 %v423
  %467 = vmatpush.xpose.msra.mxu0 %v419
  %468 = vmatpush.xpose.msra.mxu0 %v430
  %469 = vmatpush.xpose.msra.mxu0 %v426
  %470 = vmatpush.xpose.msra.mxu0 %v422
  %471 = vmatpush.xpose.msra.mxu0 %v418
  %472 = vmatpush.xpose.msra.mxu0 %v429
  %473 = vmatpush.xpose.msra.mxu0 %v425
  %474 = vmatpush.xpose.msra.mxu0 %v421
  %475 = vmatpush.xpose.msra.mxu0 %v417
  %476 = vmatpush.xpose.msra.mxu0 %v428
  %477 = vmatpush.xpose.msra.mxu0 %v424
  %478 = vmatpush.xpose.msra.mxu0 %v420
  %479 = vmatpush.xpose.msra.mxu0 %v416
  %480 = vmatmul.f32.gmra.mxu0 %v432
  %v481 = vpop.f32.mrf.mxu0
  %v482 = vadd.f32 0.0, %v481
  %483 = vmatmul.f32.gmra.mxu0 %v433
  %v484 = vpop.f32.mrf.mxu0
  %v485 = vadd.f32 0.0, %v484
  %486 = vmatmul.f32.gmra.mxu0 %v434
  %v487 = vpop.f32.mrf.mxu0
  %v488 = vadd.f32 0.0, %v487
  %489 = vmatmul.f32.gmra.mxu0 %v435
  %v490 = vpop.f32.mrf.mxu0
  %v491 = vadd.f32 0.0, %v490
  %492 = vmatmul.f32.gmra.mxu0 %v436
  %v493 = vpop.f32.mrf.mxu0
  %v494 = vadd.f32 0.0, %v493
  %495 = vmatmul.f32.gmra.mxu0 %v437
  %v496 = vpop.f32.mrf.mxu0
  %v497 = vadd.f32 0.0, %v496
  %498 = vmatmul.f32.gmra.mxu0 %v438
  %v499 = vpop.f32.mrf.mxu0
  %v500 = vadd.f32 0.0, %v499
  %501 = vmatmul.f32.gmra.mxu0 %v439
  %v502 = vpop.f32.mrf.mxu0
  %v503 = vadd.f32 0.0, %v502
  %504 = vmatmul.f32.gmra.mxu0 %v440
  %v505 = vpop.f32.mrf.mxu0
  %v506 = vadd.f32 0.0, %v505
  %507 = vmatmul.f32.gmra.mxu0 %v441
  %v508 = vpop.f32.mrf.mxu0
  %v509 = vadd.f32 0.0, %v508
  %510 = vmatmul.f32.gmra.mxu0 %v442
  %v511 = vpop.f32.mrf.mxu0
  %v512 = vadd.f32 0.0, %v511
  %513 = vmatmul.f32.gmra.mxu0 %v443
  %v514 = vpop.f32.mrf.mxu0
  %v515 = vadd.f32 0.0, %v514
  %516 = vmatmul.f32.gmra.mxu0 %v444
  %v517 = vpop.f32.mrf.mxu0
  %v518 = vadd.f32 0.0, %v517
  %519 = vmatmul.f32.gmra.mxu0 %v445
  %v520 = vpop.f32.mrf.mxu0
  %v521 = vadd.f32 0.0, %v520
  %522 = vmatmul.f32.gmra.mxu0 %v446
  %v523 = vpop.f32.mrf.mxu0
  %v524 = vadd.f32 0.0, %v523
  %525 = vmatmul.f32.gmra.mxu0 %v447
  %v526 = vpop.f32.mrf.mxu0
  %v527 = vadd.f32 0.0, %v526
  %528 = vmatmul.f32.gmra.mxu0 %v448
  %v529 = vpop.f32.mrf.mxu0
  %v530 = vadd.f32 0.0, %v529
  %531 = vmatmul.f32.gmra.mxu0 %v449
  %v532 = vpop.f32.mrf.mxu0
  %v533 = vadd.f32 0.0, %v532
  %534 = vmatmul.f32.gmra.mxu0 %v450
  %v535 = vpop.f32.mrf.mxu0
  %v536 = vadd.f32 0.0, %v535
  %537 = vmatmul.f32.gmra.mxu0 %v451
  %v538 = vpop.f32.mrf.mxu0
  %v539 = vadd.f32 0.0, %v538
  %540 = vmatmul.f32.gmra.mxu0 %v452
  %v541 = vpop.f32.mrf.mxu0
  %v542 = vadd.f32 0.0, %v541
  %543 = vmatmul.f32.gmra.mxu0 %v453
  %v544 = vpop.f32.mrf.mxu0
  %v545 = vadd.f32 0.0, %v544
  %546 = vmatmul.f32.gmra.mxu0 %v454
  %v547 = vpop.f32.mrf.mxu0
  %v548 = vadd.f32 0.0, %v547
  %549 = vmatmul.f32.gmra.mxu0 %v455
  %v550 = vpop.f32.mrf.mxu0
  %v551 = vadd.f32 0.0, %v550
  %552 = vmatmul.f32.gmra.mxu0 %v456
  %v553 = vpop.f32.mrf.mxu0
  %v554 = vadd.f32 0.0, %v553
  %555 = vmatmul.f32.gmra.mxu0 %v457
  %v556 = vpop.f32.mrf.mxu0
  %v557 = vadd.f32 0.0, %v556
  %558 = vmatmul.f32.gmra.mxu0 %v458
  %v559 = vpop.f32.mrf.mxu0
  %v560 = vadd.f32 0.0, %v559
  %561 = vmatmul.f32.gmra.mxu0 %v459
  %v562 = vpop.f32.mrf.mxu0
  %v563 = vadd.f32 0.0, %v562
  %564 = vmatmul.f32.gmra.mxu0 %v460
  %v565 = vpop.f32.mrf.mxu0
  %v566 = vadd.f32 0.0, %v565
  %567 = vmatmul.f32.gmra.mxu0 %v461
  %v568 = vpop.f32.mrf.mxu0
  %v569 = vadd.f32 0.0, %v568
  %570 = vmatmul.f32.gmra.mxu0 %v462
  %v571 = vpop.f32.mrf.mxu0
  %v572 = vadd.f32 0.0, %v571
  %573 = vmatmul.f32.gmra.mxu0 %v463
  %v574 = vpop.f32.mrf.mxu0
  %v575 = vadd.f32 0.0, %v574
  %576 = vdwg.mxu0
  %v577 = vld [vmem:[%s4] sm:$0xff]
  %v578 = vld [vmem:[%s4 + $0x8] sm:$0xff]
  %v579 = vld [vmem:[%s4 + $0x10] sm:$0xff]
  %v580 = vld [vmem:[%s4 + $0x18] sm:$0xff]
  %v581 = vld [vmem:[%s4 + $0x20] sm:$0xff]
  %v582 = vld [vmem:[%s4 + $0x28] sm:$0xff]
  %v583 = vld [vmem:[%s4 + $0x30] sm:$0xff]
  %v584 = vld [vmem:[%s4 + $0x38] sm:$0xff]
  %586 = vset.pattern.permute.xlu0 0
  %587 = vperm.xlu0 %586, %v577
  %v588 = vpop.permute.xlu0 %587
  %591 = vset.pattern.permute.xlu0 0
  %592 = vperm.xlu0 %591, %v578
  %v593 = vpop.permute.xlu0 %592
  %596 = vset.pattern.permute.xlu0 0
  %597 = vperm.xlu0 %596, %v579
  %v598 = vpop.permute.xlu0 %597
  %601 = vset.pattern.permute.xlu0 0
  %602 = vperm.xlu0 %601, %v580
  %v603 = vpop.permute.xlu0 %602
  %606 = vset.pattern.permute.xlu0 0
  %607 = vperm.xlu0 %606, %v581
  %v608 = vpop.permute.xlu0 %607
  %611 = vset.pattern.permute.xlu0 0
  %612 = vperm.xlu0 %611, %v582
  %v613 = vpop.permute.xlu0 %612
  %616 = vset.pattern.permute.xlu0 0
  %617 = vperm.xlu0 %616, %v583
  %v618 = vpop.permute.xlu0 %617
  %621 = vset.pattern.permute.xlu0 0
  %622 = vperm.xlu0 %621, %v584
  %v623 = vpop.permute.xlu0 %622
  %v625 = vadd.f32 %v482, %v588
  %v626 = vadd.f32 %v485, %v593
  %v627 = vadd.f32 %v488, %v598
  %v628 = vadd.f32 %v491, %v603
  %v629 = vadd.f32 %v494, %v608
  %v630 = vadd.f32 %v497, %v613
  %v631 = vadd.f32 %v500, %v618
  %v632 = vadd.f32 %v503, %v623
  %v633 = vmax.f32 %v625, 0.0
  %v634 = vmax.f32 %v626, 0.0
  %v635 = vmax.f32 %v627, 0.0
  %v636 = vmax.f32 %v628, 0.0
  %v637 = vmax.f32 %v629, 0.0
  %v638 = vmax.f32 %v630, 0.0
  %v639 = vmax.f32 %v631, 0.0
  %v640 = vmax.f32 %v632, 0.0
  %641 = vst [vmem:[#allocation2] sm:$0xff] %v633
  %642 = vst [vmem:[#allocation2 + $0x20] sm:$0xff] %v634
  %643 = vst [vmem:[#allocation2 + $0x40] sm:$0xff] %v635
  %644 = vst [vmem:[#allocation2 + $0x60] sm:$0xff] %v636
  %645 = vst [vmem:[#allocation2 + $0x80] sm:$0xff] %v637
  %646 = vst [vmem:[#allocation2 + $0xa0] sm:$0xff] %v638
  %647 = vst [vmem:[#allocation2 + $0xc0] sm:$0xff] %v639
  %648 = vst [vmem:[#allocation2 + $0xe0] sm:$0xff] %v640
  %v649 = vld [vmem:[%s4] sm:$0xff]
  %v650 = vld [vmem:[%s4 + $0x8] sm:$0xff]
  %v651 = vld [vmem:[%s4 + $0x10] sm:$0xff]
  %v652 = vld [vmem:[%s4 + $0x18] sm:$0xff]
  %v653 = vld [vmem:[%s4 + $0x20] sm:$0xff]
  %v654 = vld [vmem:[%s4 + $0x28] sm:$0xff]
  %v655 = vld [vmem:[%s4 + $0x30] sm:$0xff]
  %v656 = vld [vmem:[%s4 + $0x38] sm:$0xff]
  %658 = vset.pattern.permute.xlu0 0
  %659 = vperm.xlu0 %658, %v649
  %v660 = vpop.permute.xlu0 %659
  %663 = vset.pattern.permute.xlu0 0
  %664 = vperm.xlu0 %663, %v650
  %v665 = vpop.permute.xlu0 %664
  %668 = vset.pattern.permute.xlu0 0
  %669 = vperm.xlu0 %668, %v651
  %v670 = vpop.permute.xlu0 %669
  %673 = vset.pattern.permute.xlu0 0
  %674 = vperm.xlu0 %673, %v652
  %v675 = vpop.permute.xlu0 %674
  %678 = vset.pattern.permute.xlu0 0
  %679 = vperm.xlu0 %678, %v653
  %v680 = vpop.permute.xlu0 %679
  %683 = vset.pattern.permute.xlu0 0
  %684 = vperm.xlu0 %683, %v654
  %v685 = vpop.permute.xlu0 %684
  %688 = vset.pattern.permute.xlu0 0
  %689 = vperm.xlu0 %688, %v655
  %v690 = vpop.permute.xlu0 %689
  %693 = vset.pattern.permute.xlu0 0
  %694 = vperm.xlu0 %693, %v656
  %v695 = vpop.permute.xlu0 %694
  %v697 = vadd.f32 %v506, %v660
  %v698 = vadd.f32 %v509, %v665
  %v699 = vadd.f32 %v512, %v670
  %v700 = vadd.f32 %v515, %v675
  %v701 = vadd.f32 %v518, %v680
  %v702 = vadd.f32 %v521, %v685
  %v703 = vadd.f32 %v524, %v690
  %v704 = vadd.f32 %v527, %v695
  %v705 = vmax.f32 %v697, 0.0
  %v706 = vmax.f32 %v698, 0.0
  %v707 = vmax.f32 %v699, 0.0
  %v708 = vmax.f32 %v700, 0.0
  %v709 = vmax.f32 %v701, 0.0
  %v710 = vmax.f32 %v702, 0.0
  %v711 = vmax.f32 %v703, 0.0
  %v712 = vmax.f32 %v704, 0.0
  %713 = vst [vmem:[#allocation2 + $0x8] sm:$0xff] %v705
  %714 = vst [vmem:[#allocation2 + $0x28] sm:$0xff] %v706
  %715 = vst [vmem:[#allocation2 + $0x48] sm:$0xff] %v707
  %716 = vst [vmem:[#allocation2 + $0x68] sm:$0xff] %v708
  %717 = vst [vmem:[#allocation2 + $0x88] sm:$0xff] %v709
  %718 = vst [vmem:[#allocation2 + $0xa8] sm:$0xff] %v710
  %719 = vst [vmem:[#allocation2 + $0xc8] sm:$0xff] %v711
  %720 = vst [vmem:[#allocation2 + $0xe8] sm:$0xff] %v712
  %v721 = vld [vmem:[%s4] sm:$0xff]
  %v722 = vld [vmem:[%s4 + $0x8] sm:$0xff]
  %v723 = vld [vmem:[%s4 + $0x10] sm:$0xff]
  %v724 = vld [vmem:[%s4 + $0x18] sm:$0xff]
  %v725 = vld [vmem:[%s4 + $0x20] sm:$0xff]
  %v726 = vld [vmem:[%s4 + $0x28] sm:$0xff]
  %v727 = vld [vmem:[%s4 + $0x30] sm:$0xff]
  %v728 = vld [vmem:[%s4 + $0x38] sm:$0xff]
  %730 = vset.pattern.permute.xlu0 0
  %731 = vperm.xlu0 %730, %v721
  %v732 = vpop.permute.xlu0 %731
  %735 = vset.pattern.permute.xlu0 0
  %736 = vperm.xlu0 %735, %v722
  %v737 = vpop.permute.xlu0 %736
  %740 = vset.pattern.permute.xlu0 0
  %741 = vperm.xlu0 %740, %v723
  %v742 = vpop.permute.xlu0 %741
  %745 = vset.pattern.permute.xlu0 0
  %746 = vperm.xlu0 %745, %v724
  %v747 = vpop.permute.xlu0 %746
  %750 = vset.pattern.permute.xlu0 0
  %751 = vperm.xlu0 %750, %v725
  %v752 = vpop.permute.xlu0 %751
  %755 = vset.pattern.permute.xlu0 0
  %756 = vperm.xlu0 %755, %v726
  %v757 = vpop.permute.xlu0 %756
  %760 = vset.pattern.permute.xlu0 0
  %761 = vperm.xlu0 %760, %v727
  %v762 = vpop.permute.xlu0 %761
  %765 = vset.pattern.permute.xlu0 0
  %766 = vperm.xlu0 %765, %v728
  %v767 = vpop.permute.xlu0 %766
  %v769 = vadd.f32 %v530, %v732
  %v770 = vadd.f32 %v533, %v737
  %v771 = vadd.f32 %v536, %v742
  %v772 = vadd.f32 %v539, %v747
  %v773 = vadd.f32 %v542, %v752
  %v774 = vadd.f32 %v545, %v757
  %v775 = vadd.f32 %v548, %v762
  %v776 = vadd.f32 %v551, %v767
  %v777 = vmax.f32 %v769, 0.0
  %v778 = vmax.f32 %v770, 0.0
  %v779 = vmax.f32 %v771, 0.0
  %v780 = vmax.f32 %v772, 0.0
  %v781 = vmax.f32 %v773, 0.0
  %v782 = vmax.f32 %v774, 0.0
  %v783 = vmax.f32 %v775, 0.0
  %v784 = vmax.f32 %v776, 0.0
  %785 = vst [vmem:[#allocation2 + $0x10] sm:$0xff] %v777
  %786 = vst [vmem:[#allocation2 + $0x30] sm:$0xff] %v778
  %787 = vst [vmem:[#allocation2 + $0x50] sm:$0xff] %v779
  %788 = vst [vmem:[#allocation2 + $0x70] sm:$0xff] %v780
  %789 = vst [vmem:[#allocation2 + $0x90] sm:$0xff] %v781
  %790 = vst [vmem:[#allocation2 + $0xb0] sm:$0xff] %v782
  %791 = vst [vmem:[#allocation2 + $0xd0] sm:$0xff] %v783
  %792 = vst [vmem:[#allocation2 + $0xf0] sm:$0xff] %v784
  %v793 = vld [vmem:[%s4] sm:$0xff]
  %v794 = vld [vmem:[%s4 + $0x8] sm:$0xff]
  %v795 = vld [vmem:[%s4 + $0x10] sm:$0xff]
  %v796 = vld [vmem:[%s4 + $0x18] sm:$0xff]
  %v797 = vld [vmem:[%s4 + $0x20] sm:$0xff]
  %v798 = vld [vmem:[%s4 + $0x28] sm:$0xff]
  %v799 = vld [vmem:[%s4 + $0x30] sm:$0xff]
  %v800 = vld [vmem:[%s4 + $0x38] sm:$0xff]
  %802 = vset.pattern.permute.xlu0 0
  %803 = vperm.xlu0 %802, %v793
  %v804 = vpop.permute.xlu0 %803
  %807 = vset.pattern.permute.xlu0 0
  %808 = vperm.xlu0 %807, %v794
  %v809 = vpop.permute.xlu0 %808
  %812 = vset.pattern.permute.xlu0 0
  %813 = vperm.xlu0 %812, %v795
  %v814 = vpop.permute.xlu0 %813
  %817 = vset.pattern.permute.xlu0 0
  %818 = vperm.xlu0 %817, %v796
  %v819 = vpop.permute.xlu0 %818
  %822 = vset.pattern.permute.xlu0 0
  %823 = vperm.xlu0 %822, %v797
  %v824 = vpop.permute.xlu0 %823
  %827 = vset.pattern.permute.xlu0 0
  %828 = vperm.xlu0 %827, %v798
  %v829 = vpop.permute.xlu0 %828
  %832 = vset.pattern.permute.xlu0 0
  %833 = vperm.xlu0 %832, %v799
  %v834 = vpop.permute.xlu0 %833
  %837 = vset.pattern.permute.xlu0 0
  %838 = vperm.xlu0 %837, %v800
  %v839 = vpop.permute.xlu0 %838
  %v841 = vadd.f32 %v554, %v804
  %v842 = vadd.f32 %v557, %v809
  %v843 = vadd.f32 %v560, %v814
  %v844 = vadd.f32 %v563, %v819
  %v845 = vadd.f32 %v566, %v824
  %v846 = vadd.f32 %v569, %v829
  %v847 = vadd.f32 %v572, %v834
  %v848 = vadd.f32 %v575, %v839
  %v849 = vmax.f32 %v841, 0.0
  %v850 = vmax.f32 %v842, 0.0
  %v851 = vmax.f32 %v843, 0.0
  %v852 = vmax.f32 %v844, 0.0
  %v853 = vmax.f32 %v845, 0.0
  %v854 = vmax.f32 %v846, 0.0
  %v855 = vmax.f32 %v847, 0.0
  %v856 = vmax.f32 %v848, 0.0
  %857 = vst [vmem:[#allocation2 + $0x18] sm:$0xff] %v849
  %858 = vst [vmem:[#allocation2 + $0x38] sm:$0xff] %v850
  %859 = vst [vmem:[#allocation2 + $0x58] sm:$0xff] %v851
  %860 = vst [vmem:[#allocation2 + $0x78] sm:$0xff] %v852
  %861 = vst [vmem:[#allocation2 + $0x98] sm:$0xff] %v853
  %862 = vst [vmem:[#allocation2 + $0xb8] sm:$0xff] %v854
  %863 = vst [vmem:[#allocation2 + $0xd8] sm:$0xff] %v855
  %864 = vst [vmem:[#allocation2 + $0xf8] sm:$0xff] %v856
  %v865 = vld [vmem:[%s5] sm:$0xff]
  %v866 = vld [vmem:[%s5 + $0x8] sm:$0xff]
  %v867 = vld [vmem:[%s5 + $0x10] sm:$0xff]
  %v868 = vld [vmem:[%s5 + $0x18] sm:$0xff]
  %v869 = vld [vmem:[%s5 + $0x20] sm:$0xff]
  %v870 = vld [vmem:[%s5 + $0x28] sm:$0xff]
  %v871 = vld [vmem:[%s5 + $0x30] sm:$0xff]
  %v872 = vld [vmem:[%s5 + $0x38] sm:$0xff]
  %v873 = vld [vmem:[%s5 + $0x40] sm:$0xff]
  %v874 = vld [vmem:[%s5 + $0x48] sm:$0xff]
  %v875 = vld [vmem:[%s5 + $0x50] sm:$0xff]
  %v876 = vld [vmem:[%s5 + $0x58] sm:$0xff]
  %v877 = vld [vmem:[%s5 + $0x60] sm:$0xff]
  %v878 = vld [vmem:[%s5 + $0x68] sm:$0xff]
  %v879 = vld [vmem:[%s5 + $0x70] sm:$0xff]
  %v880 = vld [vmem:[%s5 + $0x78] sm:$0xff]
  %v881 = vld [vmem:[#allocation2] sm:$0xff]
  %v882 = vld [vmem:[#allocation2 + $0x8] sm:$0xff]
  %v883 = vld [vmem:[#allocation2 + $0x20] sm:$0xff]
  %v884 = vld [vmem:[#allocation2 + $0x28] sm:$0xff]
  %v885 = vld [vmem:[#allocation2 + $0x40] sm:$0xff]
  %v886 = vld [vmem:[#allocation2 + $0x48] sm:$0xff]
  %v887 = vld [vmem:[#allocation2 + $0x60] sm:$0xff]
  %v888 = vld [vmem:[#allocation2 + $0x68] sm:$0xff]
  %v889 = vld [vmem:[#allocation2 + $0x80] sm:$0xff]
  %v890 = vld [vmem:[#allocation2 + $0x88] sm:$0xff]
  %v891 = vld [vmem:[#allocation2 + $0xa0] sm:$0xff]
  %v892 = vld [vmem:[#allocation2 + $0xa8] sm:$0xff]
  %v893 = vld [vmem:[#allocation2 + $0xc0] sm:$0xff]
  %v894 = vld [vmem:[#allocation2 + $0xc8] sm:$0xff]
  %v895 = vld [vmem:[#allocation2 + $0xe0] sm:$0xff]
  %v896 = vld [vmem:[#allocation2 + $0xe8] sm:$0xff]
  %vm897 = vcmask 523264
  %v899 = vsel %vm897, %v865, 0
  %v902 = vsel %vm897, %v866, 0
  %v905 = vsel %vm897, %v867, 0
  %v908 = vsel %vm897, %v868, 0
  %v911 = vsel %vm897, %v869, 0
  %v914 = vsel %vm897, %v870, 0
  %v917 = vsel %vm897, %v871, 0
  %v920 = vsel %vm897, %v872, 0
  %v923 = vsel %vm897, %v873, 0
  %v926 = vsel %vm897, %v874, 0
  %v929 = vsel %vm897, %v875, 0
  %v932 = vsel %vm897, %v876, 0
  %v935 = vsel %vm897, %v877, 0
  %v938 = vsel %vm897, %v878, 0
  %v941 = vsel %vm897, %v879, 0
  %v944 = vsel %vm897, %v880, 0
  %946 = vmatpush.msra.mxu0 0.0
  %947 = vmatpush.msra.mxu0 0.0
  %948 = vmatpush.msra.mxu0 0.0
  %949 = vmatpush.msra.mxu0 0.0
  %950 = vmatpush.msra.mxu0 0.0
  %951 = vmatpush.msra.mxu0 0.0
  %952 = vmatpush.msra.mxu0 0.0
  %953 = vmatpush.msra.mxu0 0.0
  %954 = vmatpush.msra.mxu0 %v895
  %955 = vmatpush.msra.mxu0 %v893
  %956 = vmatpush.msra.mxu0 %v891
  %957 = vmatpush.msra.mxu0 %v889
  %958 = vmatpush.msra.mxu0 %v887
  %959 = vmatpush.msra.mxu0 %v885
  %960 = vmatpush.msra.mxu0 %v883
  %961 = vmatpush.msra.mxu0 %v881
  %962 = vmatmul.f32.gmra.mxu0 %v899
  %v963 = vpop.f32.mrf.mxu0
  %v964 = vadd.f32 0.0, %v963
  %965 = vmatmul.f32.gmra.mxu0 %v902
  %v966 = vpop.f32.mrf.mxu0
  %v967 = vadd.f32 0.0, %v966
  %968 = vmatmul.f32.gmra.mxu0 %v905
  %v969 = vpop.f32.mrf.mxu0
  %v970 = vadd.f32 0.0, %v969
  %971 = vmatmul.f32.gmra.mxu0 %v908
  %v972 = vpop.f32.mrf.mxu0
  %v973 = vadd.f32 0.0, %v972
  %974 = vmatmul.f32.gmra.mxu0 %v911
  %v975 = vpop.f32.mrf.mxu0
  %v976 = vadd.f32 0.0, %v975
  %977 = vmatmul.f32.gmra.mxu0 %v914
  %v978 = vpop.f32.mrf.mxu0
  %v979 = vadd.f32 0.0, %v978
  %980 = vmatmul.f32.gmra.mxu0 %v917
  %v981 = vpop.f32.mrf.mxu0
  %v982 = vadd.f32 0.0, %v981
  %983 = vmatmul.f32.gmra.mxu0 %v920
  %v984 = vpop.f32.mrf.mxu0
  %v985 = vadd.f32 0.0, %v984
  %986 = vmatmul.f32.gmra.mxu0 %v923
  %v987 = vpop.f32.mrf.mxu0
  %v988 = vadd.f32 0.0, %v987
  %989 = vmatmul.f32.gmra.mxu0 %v926
  %v990 = vpop.f32.mrf.mxu0
  %v991 = vadd.f32 0.0, %v990
  %992 = vmatmul.f32.gmra.mxu0 %v929
  %v993 = vpop.f32.mrf.mxu0
  %v994 = vadd.f32 0.0, %v993
  %995 = vmatmul.f32.gmra.mxu0 %v932
  %v996 = vpop.f32.mrf.mxu0
  %v997 = vadd.f32 0.0, %v996
  %998 = vmatmul.f32.gmra.mxu0 %v935
  %v999 = vpop.f32.mrf.mxu0
  %v1000 = vadd.f32 0.0, %v999
  %1001 = vmatmul.f32.gmra.mxu0 %v938
  %v1002 = vpop.f32.mrf.mxu0
  %v1003 = vadd.f32 0.0, %v1002
  %1004 = vmatmul.f32.gmra.mxu0 %v941
  %v1005 = vpop.f32.mrf.mxu0
  %v1006 = vadd.f32 0.0, %v1005
  %1007 = vmatmul.f32.gmra.mxu0 %v944
  %v1008 = vpop.f32.mrf.mxu0
  %v1009 = vadd.f32 0.0, %v1008
  %1010 = vdwg.mxu0
  %1011 = vmatpush.msra.mxu0 0.0
  %1012 = vmatpush.msra.mxu0 0.0
  %1013 = vmatpush.msra.mxu0 0.0
  %1014 = vmatpush.msra.mxu0 0.0
  %1015 = vmatpush.msra.mxu0 0.0
  %1016 = vmatpush.msra.mxu0 0.0
  %1017 = vmatpush.msra.mxu0 0.0
  %1018 = vmatpush.msra.mxu0 0.0
  %1019 = vmatpush.msra.mxu0 %v896
  %1020 = vmatpush.msra.mxu0 %v894
  %1021 = vmatpush.msra.mxu0 %v892
  %1022 = vmatpush.msra.mxu0 %v890
  %1023 = vmatpush.msra.mxu0 %v888
  %1024 = vmatpush.msra.mxu0 %v886
  %1025 = vmatpush.msra.mxu0 %v884
  %1026 = vmatpush.msra.mxu0 %v882
  %1027 = vmatmul.f32.gmra.mxu0 %v899
  %v1028 = vpop.f32.mrf.mxu0
  %v1029 = vadd.f32 0.0, %v1028
  %1030 = vmatmul.f32.gmra.mxu0 %v902
  %v1031 = vpop.f32.mrf.mxu0
  %v1032 = vadd.f32 0.0, %v1031
  %1033 = vmatmul.f32.gmra.mxu0 %v905
  %v1034 = vpop.f32.mrf.mxu0
  %v1035 = vadd.f32 0.0, %v1034
  %1036 = vmatmul.f32.gmra.mxu0 %v908
  %v1037 = vpop.f32.mrf.mxu0
  %v1038 = vadd.f32 0.0, %v1037
  %1039 = vmatmul.f32.gmra.mxu0 %v911
  %v1040 = vpop.f32.mrf.mxu0
  %v1041 = vadd.f32 0.0, %v1040
  %1042 = vmatmul.f32.gmra.mxu0 %v914
  %v1043 = vpop.f32.mrf.mxu0
  %v1044 = vadd.f32 0.0, %v1043
  %1045 = vmatmul.f32.gmra.mxu0 %v917
  %v1046 = vpop.f32.mrf.mxu0
  %v1047 = vadd.f32 0.0, %v1046
  %1048 = vmatmul.f32.gmra.mxu0 %v920
  %v1049 = vpop.f32.mrf.mxu0
  %v1050 = vadd.f32 0.0, %v1049
  %1051 = vmatmul.f32.gmra.mxu0 %v923
  %v1052 = vpop.f32.mrf.mxu0
  %v1053 = vadd.f32 0.0, %v1052
  %1054 = vmatmul.f32.gmra.mxu0 %v926
  %v1055 = vpop.f32.mrf.mxu0
  %v1056 = vadd.f32 0.0, %v1055
  %1057 = vmatmul.f32.gmra.mxu0 %v929
  %v1058 = vpop.f32.mrf.mxu0
  %v1059 = vadd.f32 0.0, %v1058
  %1060 = vmatmul.f32.gmra.mxu0 %v932
  %v1061 = vpop.f32.mrf.mxu0
  %v1062 = vadd.f32 0.0, %v1061
  %1063 = vmatmul.f32.gmra.mxu0 %v935
  %v1064 = vpop.f32.mrf.mxu0
  %v1065 = vadd.f32 0.0, %v1064
  %1066 = vmatmul.f32.gmra.mxu0 %v938
  %v1067 = vpop.f32.mrf.mxu0
  %v1068 = vadd.f32 0.0, %v1067
  %1069 = vmatmul.f32.gmra.mxu0 %v941
  %v1070 = vpop.f32.mrf.mxu0
  %v1071 = vadd.f32 0.0, %v1070
  %1072 = vmatmul.f32.gmra.mxu0 %v944
  %v1073 = vpop.f32.mrf.mxu0
  %v1074 = vadd.f32 0.0, %v1073
  %1075 = vdwg.mxu0
  %v1076 = vld [vmem:[%s6] sm:$0xff]
  %v1077 = vld [vmem:[%s6 + $0x8] sm:$0xff]
  %v1078 = vld [vmem:[%s6 + $0x10] sm:$0xff]
  %v1079 = vld [vmem:[%s6 + $0x18] sm:$0xff]
  %1081 = vset.pattern.permute.xlu0 0
  %1082 = vperm.xlu0 %1081, %v1076
  %v1083 = vpop.permute.xlu0 %1082
  %1086 = vset.pattern.permute.xlu0 0
  %1087 = vperm.xlu0 %1086, %v1077
  %v1088 = vpop.permute.xlu0 %1087
  %1091 = vset.pattern.permute.xlu0 0
  %1092 = vperm.xlu0 %1091, %v1078
  %v1093 = vpop.permute.xlu0 %1092
  %1096 = vset.pattern.permute.xlu0 0
  %1097 = vperm.xlu0 %1096, %v1079
  %v1098 = vpop.permute.xlu0 %1097
  %v1100 = vadd.f32 %v964, %v1083
  %v1101 = vadd.f32 %v1029, %v1083
  %v1102 = vadd.f32 %v967, %v1088
  %v1103 = vadd.f32 %v1032, %v1088
  %v1104 = vadd.f32 %v970, %v1093
  %v1105 = vadd.f32 %v1035, %v1093
  %v1106 = vadd.f32 %v973, %v1098
  %v1107 = vadd.f32 %v1038, %v1098
  %v1108 = vmax.f32 %v1100, 0.0
  %v1109 = vmax.f32 %v1101, 0.0
  %v1110 = vmax.f32 %v1102, 0.0
  %v1111 = vmax.f32 %v1103, 0.0
  %v1112 = vmax.f32 %v1104, 0.0
  %v1113 = vmax.f32 %v1105, 0.0
  %v1114 = vmax.f32 %v1106, 0.0
  %v1115 = vmax.f32 %v1107, 0.0
  %1116 = vst [vmem:[#allocation3] sm:$0xff] %v1108
  %1117 = vst [vmem:[#allocation3 + $0x8] sm:$0xff] %v1109
  %1118 = vst [vmem:[#allocation3 + $0x80] sm:$0xff] %v1110
  %1119 = vst [vmem:[#allocation3 + $0x88] sm:$0xff] %v1111
  %1120 = vst [vmem:[#allocation3 + $0x100] sm:$0xff] %v1112
  %1121 = vst [vmem:[#allocation3 + $0x108] sm:$0xff] %v1113
  %1122 = vst [vmem:[#allocation3 + $0x180] sm:$0xff] %v1114
  %1123 = vst [vmem:[#allocation3 + $0x188] sm:$0xff] %v1115
  %v1124 = vld [vmem:[%s6] sm:$0xff]
  %v1125 = vld [vmem:[%s6 + $0x8] sm:$0xff]
  %v1126 = vld [vmem:[%s6 + $0x10] sm:$0xff]
  %v1127 = vld [vmem:[%s6 + $0x18] sm:$0xff]
  %1129 = vset.pattern.permute.xlu0 0
  %1130 = vperm.xlu0 %1129, %v1124
  %v1131 = vpop.permute.xlu0 %1130
  %1134 = vset.pattern.permute.xlu0 0
  %1135 = vperm.xlu0 %1134, %v1125
  %v1136 = vpop.permute.xlu0 %1135
  %1139 = vset.pattern.permute.xlu0 0
  %1140 = vperm.xlu0 %1139, %v1126
  %v1141 = vpop.permute.xlu0 %1140
  %1144 = vset.pattern.permute.xlu0 0
  %1145 = vperm.xlu0 %1144, %v1127
  %v1146 = vpop.permute.xlu0 %1145
  %v1148 = vadd.f32 %v976, %v1131
  %v1149 = vadd.f32 %v1041, %v1131
  %v1150 = vadd.f32 %v979, %v1136
  %v1151 = vadd.f32 %v1044, %v1136
  %v1152 = vadd.f32 %v982, %v1141
  %v1153 = vadd.f32 %v1047, %v1141
  %v1154 = vadd.f32 %v985, %v1146
  %v1155 = vadd.f32 %v1050, %v1146
  %v1156 = vmax.f32 %v1148, 0.0
  %v1157 = vmax.f32 %v1149, 0.0
  %v1158 = vmax.f32 %v1150, 0.0
  %v1159 = vmax.f32 %v1151, 0.0
  %v1160 = vmax.f32 %v1152, 0.0
  %v1161 = vmax.f32 %v1153, 0.0
  %v1162 = vmax.f32 %v1154, 0.0
  %v1163 = vmax.f32 %v1155, 0.0
  %1164 = vst [vmem:[#allocation3 + $0x20] sm:$0xff] %v1156
  %1165 = vst [vmem:[#allocation3 + $0x28] sm:$0xff] %v1157
  %1166 = vst [vmem:[#allocation3 + $0xa0] sm:$0xff] %v1158
  %1167 = vst [vmem:[#allocation3 + $0xa8] sm:$0xff] %v1159
  %1168 = vst [vmem:[#allocation3 + $0x120] sm:$0xff] %v1160
  %1169 = vst [vmem:[#allocation3 + $0x128] sm:$0xff] %v1161
  %1170 = vst [vmem:[#allocation3 + $0x1a0] sm:$0xff] %v1162
  %1171 = vst [vmem:[#allocation3 + $0x1a8] sm:$0xff] %v1163
  %v1172 = vld [vmem:[%s6] sm:$0xff]
  %v1173 = vld [vmem:[%s6 + $0x8] sm:$0xff]
  %v1174 = vld [vmem:[%s6 + $0x10] sm:$0xff]
  %v1175 = vld [vmem:[%s6 + $0x18] sm:$0xff]
  %1177 = vset.pattern.permute.xlu0 0
  %1178 = vperm.xlu0 %1177, %v1172
  %v1179 = vpop.permute.xlu0 %1178
  %1182 = vset.pattern.permute.xlu0 0
  %1183 = vperm.xlu0 %1182, %v1173
  %v1184 = vpop.permute.xlu0 %1183
  %1187 = vset.pattern.permute.xlu0 0
  %1188 = vperm.xlu0 %1187, %v1174
  %v1189 = vpop.permute.xlu0 %1188
  %1192 = vset.pattern.permute.xlu0 0
  %1193 = vperm.xlu0 %1192, %v1175
  %v1194 = vpop.permute.xlu0 %1193
  %v1196 = vadd.f32 %v988, %v1179
  %v1197 = vadd.f32 %v1053, %v1179
  %v1198 = vadd.f32 %v991, %v1184
  %v1199 = vadd.f32 %v1056, %v1184
  %v1200 = vadd.f32 %v994, %v1189
  %v1201 = vadd.f32 %v1059, %v1189
  %v1202 = vadd.f32 %v997, %v1194
  %v1203 = vadd.f32 %v1062, %v1194
  %v1204 = vmax.f32 %v1196, 0.0
  %v1205 = vmax.f32 %v1197, 0.0
  %v1206 = vmax.f32 %v1198, 0.0
  %v1207 = vmax.f32 %v1199, 0.0
  %v1208 = vmax.f32 %v1200, 0.0
  %v1209 = vmax.f32 %v1201, 0.0
  %v1210 = vmax.f32 %v1202, 0.0
  %v1211 = vmax.f32 %v1203, 0.0
  %1212 = vst [vmem:[#allocation3 + $0x40] sm:$0xff] %v1204
  %1213 = vst [vmem:[#allocation3 + $0x48] sm:$0xff] %v1205
  %1214 = vst [vmem:[#allocation3 + $0xc0] sm:$0xff] %v1206
  %1215 = vst [vmem:[#allocation3 + $0xc8] sm:$0xff] %v1207
  %1216 = vst [vmem:[#allocation3 + $0x140] sm:$0xff] %v1208
  %1217 = vst [vmem:[#allocation3 + $0x148] sm:$0xff] %v1209
  %1218 = vst [vmem:[#allocation3 + $0x1c0] sm:$0xff] %v1210
  %1219 = vst [vmem:[#allocation3 + $0x1c8] sm:$0xff] %v1211
  %v1220 = vld [vmem:[%s6] sm:$0xff]
  %v1221 = vld [vmem:[%s6 + $0x8] sm:$0xff]
  %v1222 = vld [vmem:[%s6 + $0x10] sm:$0xff]
  %v1223 = vld [vmem:[%s6 + $0x18] sm:$0xff]
  %1225 = vset.pattern.permute.xlu0 0
  %1226 = vperm.xlu0 %1225, %v1220
  %v1227 = vpop.permute.xlu0 %1226
  %1230 = vset.pattern.permute.xlu0 0
  %1231 = vperm.xlu0 %1230, %v1221
  %v1232 = vpop.permute.xlu0 %1231
  %1235 = vset.pattern.permute.xlu0 0
  %1236 = vperm.xlu0 %1235, %v1222
  %v1237 = vpop.permute.xlu0 %1236
  %1240 = vset.pattern.permute.xlu0 0
  %1241 = vperm.xlu0 %1240, %v1223
  %v1242 = vpop.permute.xlu0 %1241
  %v1244 = vadd.f32 %v1000, %v1227
  %v1245 = vadd.f32 %v1065, %v1227
  %v1246 = vadd.f32 %v1003, %v1232
  %v1247 = vadd.f32 %v1068, %v1232
  %v1248 = vadd.f32 %v1006, %v1237
  %v1249 = vadd.f32 %v1071, %v1237
  %v1250 = vadd.f32 %v1009, %v1242
  %v1251 = vadd.f32 %v1074, %v1242
  %v1252 = vmax.f32 %v1244, 0.0
  %v1253 = vmax.f32 %v1245, 0.0
  %v1254 = vmax.f32 %v1246, 0.0
  %v1255 = vmax.f32 %v1247, 0.0
  %v1256 = vmax.f32 %v1248, 0.0
  %v1257 = vmax.f32 %v1249, 0.0
  %v1258 = vmax.f32 %v1250, 0.0
  %v1259 = vmax.f32 %v1251, 0.0
  %1260 = vst [vmem:[#allocation3 + $0x60] sm:$0xff] %v1252
  %1261 = vst [vmem:[#allocation3 + $0x68] sm:$0xff] %v1253
  %1262 = vst [vmem:[#allocation3 + $0xe0] sm:$0xff] %v1254
  %1263 = vst [vmem:[#allocation3 + $0xe8] sm:$0xff] %v1255
  %1264 = vst [vmem:[#allocation3 + $0x160] sm:$0xff] %v1256
  %1265 = vst [vmem:[#allocation3 + $0x168] sm:$0xff] %v1257
  %1266 = vst [vmem:[#allocation3 + $0x1e0] sm:$0xff] %v1258
  %1267 = vst [vmem:[#allocation3 + $0x1e8] sm:$0xff] %v1259
  %v1268 = vld [vmem:[%s5] sm:$0xff]
  %v1269 = vld [vmem:[%s5 + $0x8] sm:$0xff]
  %v1270 = vld [vmem:[%s5 + $0x10] sm:$0xff]
  %v1271 = vld [vmem:[%s5 + $0x18] sm:$0xff]
  %v1272 = vld [vmem:[%s5 + $0x20] sm:$0xff]
  %v1273 = vld [vmem:[%s5 + $0x28] sm:$0xff]
  %v1274 = vld [vmem:[%s5 + $0x30] sm:$0xff]
  %v1275 = vld [vmem:[%s5 + $0x38] sm:$0xff]
  %v1276 = vld [vmem:[%s5 + $0x40] sm:$0xff]
  %v1277 = vld [vmem:[%s5 + $0x48] sm:$0xff]
  %v1278 = vld [vmem:[%s5 + $0x50] sm:$0xff]
  %v1279 = vld [vmem:[%s5 + $0x58] sm:$0xff]
  %v1280 = vld [vmem:[%s5 + $0x60] sm:$0xff]
  %v1281 = vld [vmem:[%s5 + $0x68] sm:$0xff]
  %v1282 = vld [vmem:[%s5 + $0x70] sm:$0xff]
  %v1283 = vld [vmem:[%s5 + $0x78] sm:$0xff]
  %v1284 = vld [vmem:[#allocation2 + $0x10] sm:$0xff]
  %v1285 = vld [vmem:[#allocation2 + $0x18] sm:$0xff]
  %v1286 = vld [vmem:[#allocation2 + $0x30] sm:$0xff]
  %v1287 = vld [vmem:[#allocation2 + $0x38] sm:$0xff]
  %v1288 = vld [vmem:[#allocation2 + $0x50] sm:$0xff]
  %v1289 = vld [vmem:[#allocation2 + $0x58] sm:$0xff]
  %v1290 = vld [vmem:[#allocation2 + $0x70] sm:$0xff]
  %v1291 = vld [vmem:[#allocation2 + $0x78] sm:$0xff]
  %v1292 = vld [vmem:[#allocation2 + $0x90] sm:$0xff]
  %v1293 = vld [vmem:[#allocation2 + $0x98] sm:$0xff]
  %v1294 = vld [vmem:[#allocation2 + $0xb0] sm:$0xff]
  %v1295 = vld [vmem:[#allocation2 + $0xb8] sm:$0xff]
  %v1296 = vld [vmem:[#allocation2 + $0xd0] sm:$0xff]
  %v1297 = vld [vmem:[#allocation2 + $0xd8] sm:$0xff]
  %v1298 = vld [vmem:[#allocation2 + $0xf0] sm:$0xff]
  %v1299 = vld [vmem:[#allocation2 + $0xf8] sm:$0xff]
  %v1301 = vsel %vm897, %v1268, 0
  %v1304 = vsel %vm897, %v1269, 0
  %v1307 = vsel %vm897, %v1270, 0
  %v1310 = vsel %vm897, %v1271, 0
  %v1313 = vsel %vm897, %v1272, 0
  %v1316 = vsel %vm897, %v1273, 0
  %v1319 = vsel %vm897, %v1274, 0
  %v1322 = vsel %vm897, %v1275, 0
  %v1325 = vsel %vm897, %v1276, 0
  %v1328 = vsel %vm897, %v1277, 0
  %v1331 = vsel %vm897, %v1278, 0
  %v1334 = vsel %vm897, %v1279, 0
  %v1337 = vsel %vm897, %v1280, 0
  %v1340 = vsel %vm897, %v1281, 0
  %v1343 = vsel %vm897, %v1282, 0
  %v1346 = vsel %vm897, %v1283, 0
  %1348 = vmatpush.msra.mxu0 0.0
  %1349 = vmatpush.msra.mxu0 0.0
  %1350 = vmatpush.msra.mxu0 0.0
  %1351 = vmatpush.msra.mxu0 0.0
  %1352 = vmatpush.msra.mxu0 0.0
  %1353 = vmatpush.msra.mxu0 0.0
  %1354 = vmatpush.msra.mxu0 0.0
  %1355 = vmatpush.msra.mxu0 0.0
  %1356 = vmatpush.msra.mxu0 %v1298
  %1357 = vmatpush.msra.mxu0 %v1296
  %1358 = vmatpush.msra.mxu0 %v1294
  %1359 = vmatpush.msra.mxu0 %v1292
  %1360 = vmatpush.msra.mxu0 %v1290
  %1361 = vmatpush.msra.mxu0 %v1288
  %1362 = vmatpush.msra.mxu0 %v1286
  %1363 = vmatpush.msra.mxu0 %v1284
  %1364 = vmatmul.f32.gmra.mxu0 %v1301
  %v1365 = vpop.f32.mrf.mxu0
  %v1366 = vadd.f32 0.0, %v1365
  %1367 = vmatmul.f32.gmra.mxu0 %v1304
  %v1368 = vpop.f32.mrf.mxu0
  %v1369 = vadd.f32 0.0, %v1368
  %1370 = vmatmul.f32.gmra.mxu0 %v1307
  %v1371 = vpop.f32.mrf.mxu0
  %v1372 = vadd.f32 0.0, %v1371
  %1373 = vmatmul.f32.gmra.mxu0 %v1310
  %v1374 = vpop.f32.mrf.mxu0
  %v1375 = vadd.f32 0.0, %v1374
  %1376 = vmatmul.f32.gmra.mxu0 %v1313
  %v1377 = vpop.f32.mrf.mxu0
  %v1378 = vadd.f32 0.0, %v1377
  %1379 = vmatmul.f32.gmra.mxu0 %v1316
  %v1380 = vpop.f32.mrf.mxu0
  %v1381 = vadd.f32 0.0, %v1380
  %1382 = vmatmul.f32.gmra.mxu0 %v1319
  %v1383 = vpop.f32.mrf.mxu0
  %v1384 = vadd.f32 0.0, %v1383
  %1385 = vmatmul.f32.gmra.mxu0 %v1322
  %v1386 = vpop.f32.mrf.mxu0
  %v1387 = vadd.f32 0.0, %v1386
  %1388 = vmatmul.f32.gmra.mxu0 %v1325
  %v1389 = vpop.f32.mrf.mxu0
  %v1390 = vadd.f32 0.0, %v1389
  %1391 = vmatmul.f32.gmra.mxu0 %v1328
  %v1392 = vpop.f32.mrf.mxu0
  %v1393 = vadd.f32 0.0, %v1392
  %1394 = vmatmul.f32.gmra.mxu0 %v1331
  %v1395 = vpop.f32.mrf.mxu0
  %v1396 = vadd.f32 0.0, %v1395
  %1397 = vmatmul.f32.gmra.mxu0 %v1334
  %v1398 = vpop.f32.mrf.mxu0
  %v1399 = vadd.f32 0.0, %v1398
  %1400 = vmatmul.f32.gmra.mxu0 %v1337
  %v1401 = vpop.f32.mrf.mxu0
  %v1402 = vadd.f32 0.0, %v1401
  %1403 = vmatmul.f32.gmra.mxu0 %v1340
  %v1404 = vpop.f32.mrf.mxu0
  %v1405 = vadd.f32 0.0, %v1404
  %1406 = vmatmul.f32.gmra.mxu0 %v1343
  %v1407 = vpop.f32.mrf.mxu0
  %v1408 = vadd.f32 0.0, %v1407
  %1409 = vmatmul.f32.gmra.mxu0 %v1346
  %v1410 = vpop.f32.mrf.mxu0
  %v1411 = vadd.f32 0.0, %v1410
  %1412 = vdwg.mxu0
  %1413 = vmatpush.msra.mxu0 0.0
  %1414 = vmatpush.msra.mxu0 0.0
  %1415 = vmatpush.msra.mxu0 0.0
  %1416 = vmatpush.msra.mxu0 0.0
  %1417 = vmatpush.msra.mxu0 0.0
  %1418 = vmatpush.msra.mxu0 0.0
  %1419 = vmatpush.msra.mxu0 0.0
  %1420 = vmatpush.msra.mxu0 0.0
  %1421 = vmatpush.msra.mxu0 %v1299
  %1422 = vmatpush.msra.mxu0 %v1297
  %1423 = vmatpush.msra.mxu0 %v1295
  %1424 = vmatpush.msra.mxu0 %v1293
  %1425 = vmatpush.msra.mxu0 %v1291
  %1426 = vmatpush.msra.mxu0 %v1289
  %1427 = vmatpush.msra.mxu0 %v1287
  %1428 = vmatpush.msra.mxu0 %v1285
  %1429 = vmatmul.f32.gmra.mxu0 %v1301
  %v1430 = vpop.f32.mrf.mxu0
  %v1431 = vadd.f32 0.0, %v1430
  %1432 = vmatmul.f32.gmra.mxu0 %v1304
  %v1433 = vpop.f32.mrf.mxu0
  %v1434 = vadd.f32 0.0, %v1433
  %1435 = vmatmul.f32.gmra.mxu0 %v1307
  %v1436 = vpop.f32.mrf.mxu0
  %v1437 = vadd.f32 0.0, %v1436
  %1438 = vmatmul.f32.gmra.mxu0 %v1310
  %v1439 = vpop.f32.mrf.mxu0
  %v1440 = vadd.f32 0.0, %v1439
  %1441 = vmatmul.f32.gmra.mxu0 %v1313
  %v1442 = vpop.f32.mrf.mxu0
  %v1443 = vadd.f32 0.0, %v1442
  %1444 = vmatmul.f32.gmra.mxu0 %v1316
  %v1445 = vpop.f32.mrf.mxu0
  %v1446 = vadd.f32 0.0, %v1445
  %1447 = vmatmul.f32.gmra.mxu0 %v1319
  %v1448 = vpop.f32.mrf.mxu0
  %v1449 = vadd.f32 0.0, %v1448
  %1450 = vmatmul.f32.gmra.mxu0 %v1322
  %v1451 = vpop.f32.mrf.mxu0
  %v1452 = vadd.f32 0.0, %v1451
  %1453 = vmatmul.f32.gmra.mxu0 %v1325
  %v1454 = vpop.f32.mrf.mxu0
  %v1455 = vadd.f32 0.0, %v1454
  %1456 = vmatmul.f32.gmra.mxu0 %v1328
  %v1457 = vpop.f32.mrf.mxu0
  %v1458 = vadd.f32 0.0, %v1457
  %1459 = vmatmul.f32.gmra.mxu0 %v1331
  %v1460 = vpop.f32.mrf.mxu0
  %v1461 = vadd.f32 0.0, %v1460
  %1462 = vmatmul.f32.gmra.mxu0 %v1334
  %v1463 = vpop.f32.mrf.mxu0
  %v1464 = vadd.f32 0.0, %v1463
  %1465 = vmatmul.f32.gmra.mxu0 %v1337
  %v1466 = vpop.f32.mrf.mxu0
  %v1467 = vadd.f32 0.0, %v1466
  %1468 = vmatmul.f32.gmra.mxu0 %v1340
  %v1469 = vpop.f32.mrf.mxu0
  %v1470 = vadd.f32 0.0, %v1469
  %1471 = vmatmul.f32.gmra.mxu0 %v1343
  %v1472 = vpop.f32.mrf.mxu0
  %v1473 = vadd.f32 0.0, %v1472
  %1474 = vmatmul.f32.gmra.mxu0 %v1346
  %v1475 = vpop.f32.mrf.mxu0
  %v1476 = vadd.f32 0.0, %v1475
  %1477 = vdwg.mxu0
  %v1478 = vld [vmem:[%s6] sm:$0xff]
  %v1479 = vld [vmem:[%s6 + $0x8] sm:$0xff]
  %v1480 = vld [vmem:[%s6 + $0x10] sm:$0xff]
  %v1481 = vld [vmem:[%s6 + $0x18] sm:$0xff]
  %1483 = vset.pattern.permute.xlu0 0
  %1484 = vperm.xlu0 %1483, %v1478
  %v1485 = vpop.permute.xlu0 %1484
  %1488 = vset.pattern.permute.xlu0 0
  %1489 = vperm.xlu0 %1488, %v1479
  %v1490 = vpop.permute.xlu0 %1489
  %1493 = vset.pattern.permute.xlu0 0
  %1494 = vperm.xlu0 %1493, %v1480
  %v1495 = vpop.permute.xlu0 %1494
  %1498 = vset.pattern.permute.xlu0 0
  %1499 = vperm.xlu0 %1498, %v1481
  %v1500 = vpop.permute.xlu0 %1499
  %v1502 = vadd.f32 %v1366, %v1485
  %v1503 = vadd.f32 %v1431, %v1485
  %v1504 = vadd.f32 %v1369, %v1490
  %v1505 = vadd.f32 %v1434, %v1490
  %v1506 = vadd.f32 %v1372, %v1495
  %v1507 = vadd.f32 %v1437, %v1495
  %v1508 = vadd.f32 %v1375, %v1500
  %v1509 = vadd.f32 %v1440, %v1500
  %v1510 = vmax.f32 %v1502, 0.0
  %v1511 = vmax.f32 %v1503, 0.0
  %v1512 = vmax.f32 %v1504, 0.0
  %v1513 = vmax.f32 %v1505, 0.0
  %v1514 = vmax.f32 %v1506, 0.0
  %v1515 = vmax.f32 %v1507, 0.0
  %v1516 = vmax.f32 %v1508, 0.0
  %v1517 = vmax.f32 %v1509, 0.0
  %1518 = vst [vmem:[#allocation3 + $0x10] sm:$0xff] %v1510
  %1519 = vst [vmem:[#allocation3 + $0x18] sm:$0xff] %v1511
  %1520 = vst [vmem:[#allocation3 + $0x90] sm:$0xff] %v1512
  %1521 = vst [vmem:[#allocation3 + $0x98] sm:$0xff] %v1513
  %1522 = vst [vmem:[#allocation3 + $0x110] sm:$0xff] %v1514
  %1523 = vst [vmem:[#allocation3 + $0x118] sm:$0xff] %v1515
  %1524 = vst [vmem:[#allocation3 + $0x190] sm:$0xff] %v1516
  %1525 = vst [vmem:[#allocation3 + $0x198] sm:$0xff] %v1517
  %v1526 = vld [vmem:[%s6] sm:$0xff]
  %v1527 = vld [vmem:[%s6 + $0x8] sm:$0xff]
  %v1528 = vld [vmem:[%s6 + $0x10] sm:$0xff]
  %v1529 = vld [vmem:[%s6 + $0x18] sm:$0xff]
  %1531 = vset.pattern.permute.xlu0 0
  %1532 = vperm.xlu0 %1531, %v1526
  %v1533 = vpop.permute.xlu0 %1532
  %1536 = vset.pattern.permute.xlu0 0
  %1537 = vperm.xlu0 %1536, %v1527
  %v1538 = vpop.permute.xlu0 %1537
  %1541 = vset.pattern.permute.xlu0 0
  %1542 = vperm.xlu0 %1541, %v1528
  %v1543 = vpop.permute.xlu0 %1542
  %1546 = vset.pattern.permute.xlu0 0
  %1547 = vperm.xlu0 %1546, %v1529
  %v1548 = vpop.permute.xlu0 %1547
  %v1550 = vadd.f32 %v1378, %v1533
  %v1551 = vadd.f32 %v1443, %v1533
  %v1552 = vadd.f32 %v1381, %v1538
  %v1553 = vadd.f32 %v1446, %v1538
  %v1554 = vadd.f32 %v1384, %v1543
  %v1555 = vadd.f32 %v1449, %v1543
  %v1556 = vadd.f32 %v1387, %v1548
  %v1557 = vadd.f32 %v1452, %v1548
  %v1558 = vmax.f32 %v1550, 0.0
  %v1559 = vmax.f32 %v1551, 0.0
  %v1560 = vmax.f32 %v1552, 0.0
  %v1561 = vmax.f32 %v1553, 0.0
  %v1562 = vmax.f32 %v1554, 0.0
  %v1563 = vmax.f32 %v1555, 0.0
  %v1564 = vmax.f32 %v1556, 0.0
  %v1565 = vmax.f32 %v1557, 0.0
  %1566 = vst [vmem:[#allocation3 + $0x30] sm:$0xff] %v1558
  %1567 = vst [vmem:[#allocation3 + $0x38] sm:$0xff] %v1559
  %1568 = vst [vmem:[#allocation3 + $0xb0] sm:$0xff] %v1560
  %1569 = vst [vmem:[#allocation3 + $0xb8] sm:$0xff] %v1561
  %1570 = vst [vmem:[#allocation3 + $0x130] sm:$0xff] %v1562
  %1571 = vst [vmem:[#allocation3 + $0x138] sm:$0xff] %v1563
  %1572 = vst [vmem:[#allocation3 + $0x1b0] sm:$0xff] %v1564
  %1573 = vst [vmem:[#allocation3 + $0x1b8] sm:$0xff] %v1565
  %v1574 = vld [vmem:[%s6] sm:$0xff]
  %v1575 = vld [vmem:[%s6 + $0x8] sm:$0xff]
  %v1576 = vld [vmem:[%s6 + $0x10] sm:$0xff]
  %v1577 = vld [vmem:[%s6 + $0x18] sm:$0xff]
  %1579 = vset.pattern.permute.xlu0 0
  %1580 = vperm.xlu0 %1579, %v1574
  %v1581 = vpop.permute.xlu0 %1580
  %1584 = vset.pattern.permute.xlu0 0
  %1585 = vperm.xlu0 %1584, %v1575
  %v1586 = vpop.permute.xlu0 %1585
  %1589 = vset.pattern.permute.xlu0 0
  %1590 = vperm.xlu0 %1589, %v1576
  %v1591 = vpop.permute.xlu0 %1590
  %1594 = vset.pattern.permute.xlu0 0
  %1595 = vperm.xlu0 %1594, %v1577
  %v1596 = vpop.permute.xlu0 %1595
  %v1598 = vadd.f32 %v1390, %v1581
  %v1599 = vadd.f32 %v1455, %v1581
  %v1600 = vadd.f32 %v1393, %v1586
  %v1601 = vadd.f32 %v1458, %v1586
  %v1602 = vadd.f32 %v1396, %v1591
  %v1603 = vadd.f32 %v1461, %v1591
  %v1604 = vadd.f32 %v1399, %v1596
  %v1605 = vadd.f32 %v1464, %v1596
  %v1606 = vmax.f32 %v1598, 0.0
  %v1607 = vmax.f32 %v1599, 0.0
  %v1608 = vmax.f32 %v1600, 0.0
  %v1609 = vmax.f32 %v1601, 0.0
  %v1610 = vmax.f32 %v1602, 0.0
  %v1611 = vmax.f32 %v1603, 0.0
  %v1612 = vmax.f32 %v1604, 0.0
  %v1613 = vmax.f32 %v1605, 0.0
  %1614 = vst [vmem:[#allocation3 + $0x50] sm:$0xff] %v1606
  %1615 = vst [vmem:[#allocation3 + $0x58] sm:$0xff] %v1607
  %1616 = vst [vmem:[#allocation3 + $0xd0] sm:$0xff] %v1608
  %1617 = vst [vmem:[#allocation3 + $0xd8] sm:$0xff] %v1609
  %1618 = vst [vmem:[#allocation3 + $0x150] sm:$0xff] %v1610
  %1619 = vst [vmem:[#allocation3 + $0x158] sm:$0xff] %v1611
  %1620 = vst [vmem:[#allocation3 + $0x1d0] sm:$0xff] %v1612
  %1621 = vst [vmem:[#allocation3 + $0x1d8] sm:$0xff] %v1613
  %v1622 = vld [vmem:[%s6] sm:$0xff]
  %v1623 = vld [vmem:[%s6 + $0x8] sm:$0xff]
  %v1624 = vld [vmem:[%s6 + $0x10] sm:$0xff]
  %v1625 = vld [vmem:[%s6 + $0x18] sm:$0xff]
  %1627 = vset.pattern.permute.xlu0 0
  %1628 = vperm.xlu0 %1627, %v1622
  %v1629 = vpop.permute.xlu0 %1628
  %1632 = vset.pattern.permute.xlu0 0
  %1633 = vperm.xlu0 %1632, %v1623
  %v1634 = vpop.permute.xlu0 %1633
  %1637 = vset.pattern.permute.xlu0 0
  %1638 = vperm.xlu0 %1637, %v1624
  %v1639 = vpop.permute.xlu0 %1638
  %1642 = vset.pattern.permute.xlu0 0
  %1643 = vperm.xlu0 %1642, %v1625
  %v1644 = vpop.permute.xlu0 %1643
  %v1646 = vadd.f32 %v1402, %v1629
  %v1647 = vadd.f32 %v1467, %v1629
  %v1648 = vadd.f32 %v1405, %v1634
  %v1649 = vadd.f32 %v1470, %v1634
  %v1650 = vadd.f32 %v1408, %v1639
  %v1651 = vadd.f32 %v1473, %v1639
  %v1652 = vadd.f32 %v1411, %v1644
  %v1653 = vadd.f32 %v1476, %v1644
  %v1654 = vmax.f32 %v1646, 0.0
  %v1655 = vmax.f32 %v1647, 0.0
  %v1656 = vmax.f32 %v1648, 0.0
  %v1657 = vmax.f32 %v1649, 0.0
  %v1658 = vmax.f32 %v1650, 0.0
  %v1659 = vmax.f32 %v1651, 0.0
  %v1660 = vmax.f32 %v1652, 0.0
  %v1661 = vmax.f32 %v1653, 0.0
  %1662 = vst [vmem:[#allocation3 + $0x70] sm:$0xff] %v1654
  %1663 = vst [vmem:[#allocation3 + $0x78] sm:$0xff] %v1655
  %1664 = vst [vmem:[#allocation3 + $0xf0] sm:$0xff] %v1656
  %1665 = vst [vmem:[#allocation3 + $0xf8] sm:$0xff] %v1657
  %1666 = vst [vmem:[#allocation3 + $0x170] sm:$0xff] %v1658
  %1667 = vst [vmem:[#allocation3 + $0x178] sm:$0xff] %v1659
  %1668 = vst [vmem:[#allocation3 + $0x1f0] sm:$0xff] %v1660
  %1669 = vst [vmem:[#allocation3 + $0x1f8] sm:$0xff] %v1661
  %v1670 = vld [vmem:[%s7] sm:$0xff]
  %v1671 = vld [vmem:[%s7 + $0x8] sm:$0xff]
  %v1672 = vld [vmem:[%s7 + $0x10] sm:$0xff]
  %v1673 = vld [vmem:[%s7 + $0x18] sm:$0xff]
  %v1674 = vld [vmem:[%s7 + $0x20] sm:$0xff]
  %v1675 = vld [vmem:[%s7 + $0x28] sm:$0xff]
  %v1676 = vld [vmem:[%s7 + $0x30] sm:$0xff]
  %v1677 = vld [vmem:[%s7 + $0x38] sm:$0xff]
  %v1678 = vld [vmem:[#allocation3] sm:$0xff]
  %v1679 = vld [vmem:[#allocation3 + $0x8] sm:$0xff]
  %v1680 = vld [vmem:[#allocation3 + $0x10] sm:$0xff]
  %v1681 = vld [vmem:[#allocation3 + $0x18] sm:$0xff]
  %v1682 = vld [vmem:[#allocation3 + $0x80] sm:$0xff]
  %v1683 = vld [vmem:[#allocation3 + $0x88] sm:$0xff]
  %v1684 = vld [vmem:[#allocation3 + $0x90] sm:$0xff]
  %v1685 = vld [vmem:[#allocation3 + $0x98] sm:$0xff]
  %v1686 = vld [vmem:[#allocation3 + $0x100] sm:$0xff]
  %v1687 = vld [vmem:[#allocation3 + $0x108] sm:$0xff]
  %v1688 = vld [vmem:[#allocation3 + $0x110] sm:$0xff]
  %v1689 = vld [vmem:[#allocation3 + $0x118] sm:$0xff]
  %v1690 = vld [vmem:[#allocation3 + $0x180] sm:$0xff]
  %v1691 = vld [vmem:[#allocation3 + $0x188] sm:$0xff]
  %v1692 = vld [vmem:[#allocation3 + $0x190] sm:$0xff]
  %v1693 = vld [vmem:[#allocation3 + $0x198] sm:$0xff]
  %vm1694 = vcmask 261120
  %v1696 = vsel %vm1694, %v1670, 0
  %v1699 = vsel %vm1694, %v1671, 0
  %v1702 = vsel %vm1694, %v1672, 0
  %v1705 = vsel %vm1694, %v1673, 0
  %v1708 = vsel %vm1694, %v1674, 0
  %v1711 = vsel %vm1694, %v1675, 0
  %v1714 = vsel %vm1694, %v1676, 0
  %v1717 = vsel %vm1694, %v1677, 0
  %1719 = vmatpush.msra.mxu0 0.0
  %1720 = vmatpush.msra.mxu0 0.0
  %1721 = vmatpush.msra.mxu0 0.0
  %1722 = vmatpush.msra.mxu0 0.0
  %1723 = vmatpush.msra.mxu0 0.0
  %1724 = vmatpush.msra.mxu0 0.0
  %1725 = vmatpush.msra.mxu0 0.0
  %1726 = vmatpush.msra.mxu0 0.0
  %1727 = vmatpush.msra.mxu0 0.0
  %1728 = vmatpush.msra.mxu0 0.0
  %1729 = vmatpush.msra.mxu0 0.0
  %1730 = vmatpush.msra.mxu0 0.0
  %1731 = vmatpush.msra.mxu0 %v1690
  %1732 = vmatpush.msra.mxu0 %v1686
  %1733 = vmatpush.msra.mxu0 %v1682
  %1734 = vmatpush.msra.mxu0 %v1678
  %1735 = vmatmul.f32.gmra.mxu0 %v1696
  %v1736 = vpop.f32.mrf.mxu0
  %v1737 = vadd.f32 0.0, %v1736
  %1738 = vmatmul.f32.gmra.mxu0 %v1699
  %v1739 = vpop.f32.mrf.mxu0
  %v1740 = vadd.f32 0.0, %v1739
  %1741 = vmatmul.f32.gmra.mxu0 %v1702
  %v1742 = vpop.f32.mrf.mxu0
  %v1743 = vadd.f32 0.0, %v1742
  %1744 = vmatmul.f32.gmra.mxu0 %v1705
  %v1745 = vpop.f32.mrf.mxu0
  %v1746 = vadd.f32 0.0, %v1745
  %1747 = vmatmul.f32.gmra.mxu0 %v1708
  %v1748 = vpop.f32.mrf.mxu0
  %v1749 = vadd.f32 0.0, %v1748
  %1750 = vmatmul.f32.gmra.mxu0 %v1711
  %v1751 = vpop.f32.mrf.mxu0
  %v1752 = vadd.f32 0.0, %v1751
  %1753 = vmatmul.f32.gmra.mxu0 %v1714
  %v1754 = vpop.f32.mrf.mxu0
  %v1755 = vadd.f32 0.0, %v1754
  %1756 = vmatmul.f32.gmra.mxu0 %v1717
  %v1757 = vpop.f32.mrf.mxu0
  %v1758 = vadd.f32 0.0, %v1757
  %1759 = vdwg.mxu0
  %1760 = vmatpush.msra.mxu0 0.0
  %1761 = vmatpush.msra.mxu0 0.0
  %1762 = vmatpush.msra.mxu0 0.0
  %1763 = vmatpush.msra.mxu0 0.0
  %1764 = vmatpush.msra.mxu0 0.0
  %1765 = vmatpush.msra.mxu0 0.0
  %1766 = vmatpush.msra.mxu0 0.0
  %1767 = vmatpush.msra.mxu0 0.0
  %1768 = vmatpush.msra.mxu0 0.0
  %1769 = vmatpush.msra.mxu0 0.0
  %1770 = vmatpush.msra.mxu0 0.0
  %1771 = vmatpush.msra.mxu0 0.0
  %1772 = vmatpush.msra.mxu0 %v1691
  %1773 = vmatpush.msra.mxu0 %v1687
  %1774 = vmatpush.msra.mxu0 %v1683
  %1775 = vmatpush.msra.mxu0 %v1679
  %1776 = vmatmul.f32.gmra.mxu0 %v1696
  %v1777 = vpop.f32.mrf.mxu0
  %v1778 = vadd.f32 0.0, %v1777
  %1779 = vmatmul.f32.gmra.mxu0 %v1699
  %v1780 = vpop.f32.mrf.mxu0
  %v1781 = vadd.f32 0.0, %v1780
  %1782 = vmatmul.f32.gmra.mxu0 %v1702
  %v1783 = vpop.f32.mrf.mxu0
  %v1784 = vadd.f32 0.0, %v1783
  %1785 = vmatmul.f32.gmra.mxu0 %v1705
  %v1786 = vpop.f32.mrf.mxu0
  %v1787 = vadd.f32 0.0, %v1786
  %1788 = vmatmul.f32.gmra.mxu0 %v1708
  %v1789 = vpop.f32.mrf.mxu0
  %v1790 = vadd.f32 0.0, %v1789
  %1791 = vmatmul.f32.gmra.mxu0 %v1711
  %v1792 = vpop.f32.mrf.mxu0
  %v1793 = vadd.f32 0.0, %v1792
  %1794 = vmatmul.f32.gmra.mxu0 %v1714
  %v1795 = vpop.f32.mrf.mxu0
  %v1796 = vadd.f32 0.0, %v1795
  %1797 = vmatmul.f32.gmra.mxu0 %v1717
  %v1798 = vpop.f32.mrf.mxu0
  %v1799 = vadd.f32 0.0, %v1798
  %1800 = vdwg.mxu0
  %1801 = vmatpush.msra.mxu0 0.0
  %1802 = vmatpush.msra.mxu0 0.0
  %1803 = vmatpush.msra.mxu0 0.0
  %1804 = vmatpush.msra.mxu0 0.0
  %1805 = vmatpush.msra.mxu0 0.0
  %1806 = vmatpush.msra.mxu0 0.0
  %1807 = vmatpush.msra.mxu0 0.0
  %1808 = vmatpush.msra.mxu0 0.0
  %1809 = vmatpush.msra.mxu0 0.0
  %1810 = vmatpush.msra.mxu0 0.0
  %1811 = vmatpush.msra.mxu0 0.0
  %1812 = vmatpush.msra.mxu0 0.0
  %1813 = vmatpush.msra.mxu0 %v1692
  %1814 = vmatpush.msra.mxu0 %v1688
  %1815 = vmatpush.msra.mxu0 %v1684
  %1816 = vmatpush.msra.mxu0 %v1680
  %1817 = vmatmul.f32.gmra.mxu0 %v1696
  %v1818 = vpop.f32.mrf.mxu0
  %v1819 = vadd.f32 0.0, %v1818
  %1820 = vmatmul.f32.gmra.mxu0 %v1699
  %v1821 = vpop.f32.mrf.mxu0
  %v1822 = vadd.f32 0.0, %v1821
  %1823 = vmatmul.f32.gmra.mxu0 %v1702
  %v1824 = vpop.f32.mrf.mxu0
  %v1825 = vadd.f32 0.0, %v1824
  %1826 = vmatmul.f32.gmra.mxu0 %v1705
  %v1827 = vpop.f32.mrf.mxu0
  %v1828 = vadd.f32 0.0, %v1827
  %1829 = vmatmul.f32.gmra.mxu0 %v1708
  %v1830 = vpop.f32.mrf.mxu0
  %v1831 = vadd.f32 0.0, %v1830
  %1832 = vmatmul.f32.gmra.mxu0 %v1711
  %v1833 = vpop.f32.mrf.mxu0
  %v1834 = vadd.f32 0.0, %v1833
  %1835 = vmatmul.f32.gmra.mxu0 %v1714
  %v1836 = vpop.f32.mrf.mxu0
  %v1837 = vadd.f32 0.0, %v1836
  %1838 = vmatmul.f32.gmra.mxu0 %v1717
  %v1839 = vpop.f32.mrf.mxu0
  %v1840 = vadd.f32 0.0, %v1839
  %1841 = vdwg.mxu0
  %1842 = vmatpush.msra.mxu0 0.0
  %1843 = vmatpush.msra.mxu0 0.0
  %1844 = vmatpush.msra.mxu0 0.0
  %1845 = vmatpush.msra.mxu0 0.0
  %1846 = vmatpush.msra.mxu0 0.0
  %1847 = vmatpush.msra.mxu0 0.0
  %1848 = vmatpush.msra.mxu0 0.0
  %1849 = vmatpush.msra.mxu0 0.0
  %1850 = vmatpush.msra.mxu0 0.0
  %1851 = vmatpush.msra.mxu0 0.0
  %1852 = vmatpush.msra.mxu0 0.0
  %1853 = vmatpush.msra.mxu0 0.0
  %1854 = vmatpush.msra.mxu0 %v1693
  %1855 = vmatpush.msra.mxu0 %v1689
  %1856 = vmatpush.msra.mxu0 %v1685
  %1857 = vmatpush.msra.mxu0 %v1681
  %1858 = vmatmul.f32.gmra.mxu0 %v1696
  %v1859 = vpop.f32.mrf.mxu0
  %v1860 = vadd.f32 0.0, %v1859
  %1861 = vmatmul.f32.gmra.mxu0 %v1699
  %v1862 = vpop.f32.mrf.mxu0
  %v1863 = vadd.f32 0.0, %v1862
  %1864 = vmatmul.f32.gmra.mxu0 %v1702
  %v1865 = vpop.f32.mrf.mxu0
  %v1866 = vadd.f32 0.0, %v1865
  %1867 = vmatmul.f32.gmra.mxu0 %v1705
  %v1868 = vpop.f32.mrf.mxu0
  %v1869 = vadd.f32 0.0, %v1868
  %1870 = vmatmul.f32.gmra.mxu0 %v1708
  %v1871 = vpop.f32.mrf.mxu0
  %v1872 = vadd.f32 0.0, %v1871
  %1873 = vmatmul.f32.gmra.mxu0 %v1711
  %v1874 = vpop.f32.mrf.mxu0
  %v1875 = vadd.f32 0.0, %v1874
  %1876 = vmatmul.f32.gmra.mxu0 %v1714
  %v1877 = vpop.f32.mrf.mxu0
  %v1878 = vadd.f32 0.0, %v1877
  %1879 = vmatmul.f32.gmra.mxu0 %v1717
  %v1880 = vpop.f32.mrf.mxu0
  %v1881 = vadd.f32 0.0, %v1880
  %1882 = vdwg.mxu0
  %v1883 = vld [vmem:[%s8] sm:$0xff]
  %v1884 = vld [vmem:[%s8 + $0x8] sm:$0xff]
  %1886 = vset.pattern.permute.xlu0 0
  %1887 = vperm.xlu0 %1886, %v1883
  %v1888 = vpop.permute.xlu0 %1887
  %1891 = vset.pattern.permute.xlu0 0
  %1892 = vperm.xlu0 %1891, %v1884
  %v1893 = vpop.permute.xlu0 %1892
  %v1895 = vadd.f32 %v1737, %v1888
  %v1896 = vadd.f32 %v1778, %v1888
  %v1897 = vadd.f32 %v1819, %v1888
  %v1898 = vadd.f32 %v1860, %v1888
  %v1899 = vadd.f32 %v1740, %v1893
  %v1900 = vadd.f32 %v1781, %v1893
  %v1901 = vadd.f32 %v1822, %v1893
  %v1902 = vadd.f32 %v1863, %v1893
  %v1903 = vmax.f32 %v1895, 0.0
  %v1904 = vmax.f32 %v1896, 0.0
  %v1905 = vmax.f32 %v1897, 0.0
  %v1906 = vmax.f32 %v1898, 0.0
  %v1907 = vmax.f32 %v1899, 0.0
  %v1908 = vmax.f32 %v1900, 0.0
  %v1909 = vmax.f32 %v1901, 0.0
  %v1910 = vmax.f32 %v1902, 0.0
  %1911 = vst [vmem:[#allocation4] sm:$0xff] %v1903
  %1912 = vst [vmem:[#allocation4 + $0x8] sm:$0xff] %v1904
  %1913 = vst [vmem:[#allocation4 + $0x10] sm:$0xff] %v1905
  %1914 = vst [vmem:[#allocation4 + $0x18] sm:$0xff] %v1906
  %1915 = vst [vmem:[#allocation4 + $0x200] sm:$0xff] %v1907
  %1916 = vst [vmem:[#allocation4 + $0x208] sm:$0xff] %v1908
  %1917 = vst [vmem:[#allocation4 + $0x210] sm:$0xff] %v1909
  %1918 = vst [vmem:[#allocation4 + $0x218] sm:$0xff] %v1910
  %v1919 = vld [vmem:[%s8] sm:$0xff]
  %v1920 = vld [vmem:[%s8 + $0x8] sm:$0xff]
  %1922 = vset.pattern.permute.xlu0 0
  %1923 = vperm.xlu0 %1922, %v1919
  %v1924 = vpop.permute.xlu0 %1923
  %1927 = vset.pattern.permute.xlu0 0
  %1928 = vperm.xlu0 %1927, %v1920
  %v1929 = vpop.permute.xlu0 %1928
  %v1931 = vadd.f32 %v1743, %v1924
  %v1932 = vadd.f32 %v1784, %v1924
  %v1933 = vadd.f32 %v1825, %v1924
  %v1934 = vadd.f32 %v1866, %v1924
  %v1935 = vadd.f32 %v1746, %v1929
  %v1936 = vadd.f32 %v1787, %v1929
  %v1937 = vadd.f32 %v1828, %v1929
  %v1938 = vadd.f32 %v1869, %v1929
  %v1939 = vmax.f32 %v1931, 0.0
  %v1940 = vmax.f32 %v1932, 0.0
  %v1941 = vmax.f32 %v1933, 0.0
  %v1942 = vmax.f32 %v1934, 0.0
  %v1943 = vmax.f32 %v1935, 0.0
  %v1944 = vmax.f32 %v1936, 0.0
  %v1945 = vmax.f32 %v1937, 0.0
  %v1946 = vmax.f32 %v1938, 0.0
  %1947 = vst [vmem:[#allocation4 + $0x80] sm:$0xff] %v1939
  %1948 = vst [vmem:[#allocation4 + $0x88] sm:$0xff] %v1940
  %1949 = vst [vmem:[#allocation4 + $0x90] sm:$0xff] %v1941
  %1950 = vst [vmem:[#allocation4 + $0x98] sm:$0xff] %v1942
  %1951 = vst [vmem:[#allocation4 + $0x280] sm:$0xff] %v1943
  %1952 = vst [vmem:[#allocation4 + $0x288] sm:$0xff] %v1944
  %1953 = vst [vmem:[#allocation4 + $0x290] sm:$0xff] %v1945
  %1954 = vst [vmem:[#allocation4 + $0x298] sm:$0xff] %v1946
  %v1955 = vld [vmem:[%s8] sm:$0xff]
  %v1956 = vld [vmem:[%s8 + $0x8] sm:$0xff]
  %1958 = vset.pattern.permute.xlu0 0
  %1959 = vperm.xlu0 %1958, %v1955
  %v1960 = vpop.permute.xlu0 %1959
  %1963 = vset.pattern.permute.xlu0 0
  %1964 = vperm.xlu0 %1963, %v1956
  %v1965 = vpop.permute.xlu0 %1964
  %v1967 = vadd.f32 %v1749, %v1960
  %v1968 = vadd.f32 %v1790, %v1960
  %v1969 = vadd.f32 %v1831, %v1960
  %v1970 = vadd.f32 %v1872, %v1960
  %v1971 = vadd.f32 %v1752, %v1965
  %v1972 = vadd.f32 %v1793, %v1965
  %v1973 = vadd.f32 %v1834, %v1965
  %v1974 = vadd.f32 %v1875, %v1965
  %v1975 = vmax.f32 %v1967, 0.0
  %v1976 = vmax.f32 %v1968, 0.0
  %v1977 = vmax.f32 %v1969, 0.0
  %v1978 = vmax.f32 %v1970, 0.0
  %v1979 = vmax.f32 %v1971, 0.0
  %v1980 = vmax.f32 %v1972, 0.0
  %v1981 = vmax.f32 %v1973, 0.0
  %v1982 = vmax.f32 %v1974, 0.0
  %1983 = vst [vmem:[#allocation4 + $0x100] sm:$0xff] %v1975
  %1984 = vst [vmem:[#allocation4 + $0x108] sm:$0xff] %v1976
  %1985 = vst [vmem:[#allocation4 + $0x110] sm:$0xff] %v1977
  %1986 = vst [vmem:[#allocation4 + $0x118] sm:$0xff] %v1978
  %1987 = vst [vmem:[#allocation4 + $0x300] sm:$0xff] %v1979
  %1988 = vst [vmem:[#allocation4 + $0x308] sm:$0xff] %v1980
  %1989 = vst [vmem:[#allocation4 + $0x310] sm:$0xff] %v1981
  %1990 = vst [vmem:[#allocation4 + $0x318] sm:$0xff] %v1982
  %v1991 = vld [vmem:[%s8] sm:$0xff]
  %v1992 = vld [vmem:[%s8 + $0x8] sm:$0xff]
  %1994 = vset.pattern.permute.xlu0 0
  %1995 = vperm.xlu0 %1994, %v1991
  %v1996 = vpop.permute.xlu0 %1995
  %1999 = vset.pattern.permute.xlu0 0
  %2000 = vperm.xlu0 %1999, %v1992
  %v2001 = vpop.permute.xlu0 %2000
  %v2003 = vadd.f32 %v1755, %v1996
  %v2004 = vadd.f32 %v1796, %v1996
  %v2005 = vadd.f32 %v1837, %v1996
  %v2006 = vadd.f32 %v1878, %v1996
  %v2007 = vadd.f32 %v1758, %v2001
  %v2008 = vadd.f32 %v1799, %v2001
  %v2009 = vadd.f32 %v1840, %v2001
  %v2010 = vadd.f32 %v1881, %v2001
  %v2011 = vmax.f32 %v2003, 0.0
  %v2012 = vmax.f32 %v2004, 0.0
  %v2013 = vmax.f32 %v2005, 0.0
  %v2014 = vmax.f32 %v2006, 0.0
  %v2015 = vmax.f32 %v2007, 0.0
  %v2016 = vmax.f32 %v2008, 0.0
  %v2017 = vmax.f32 %v2009, 0.0
  %v2018 = vmax.f32 %v2010, 0.0
  %2019 = vst [vmem:[#allocation4 + $0x180] sm:$0xff] %v2011
  %2020 = vst [vmem:[#allocation4 + $0x188] sm:$0xff] %v2012
  %2021 = vst [vmem:[#allocation4 + $0x190] sm:$0xff] %v2013
  %2022 = vst [vmem:[#allocation4 + $0x198] sm:$0xff] %v2014
  %2023 = vst [vmem:[#allocation4 + $0x380] sm:$0xff] %v2015
  %2024 = vst [vmem:[#allocation4 + $0x388] sm:$0xff] %v2016
  %2025 = vst [vmem:[#allocation4 + $0x390] sm:$0xff] %v2017
  %2026 = vst [vmem:[#allocation4 + $0x398] sm:$0xff] %v2018
  %v2027 = vld [vmem:[%s7] sm:$0xff]
  %v2028 = vld [vmem:[%s7 + $0x8] sm:$0xff]
  %v2029 = vld [vmem:[%s7 + $0x10] sm:$0xff]
  %v2030 = vld [vmem:[%s7 + $0x18] sm:$0xff]
  %v2031 = vld [vmem:[%s7 + $0x20] sm:$0xff]
  %v2032 = vld [vmem:[%s7 + $0x28] sm:$0xff]
  %v2033 = vld [vmem:[%s7 + $0x30] sm:$0xff]
  %v2034 = vld [vmem:[%s7 + $0x38] sm:$0xff]
  %v2035 = vld [vmem:[#allocation3 + $0x20] sm:$0xff]
  %v2036 = vld [vmem:[#allocation3 + $0x28] sm:$0xff]
  %v2037 = vld [vmem:[#allocation3 + $0x30] sm:$0xff]
  %v2038 = vld [vmem:[#allocation3 + $0x38] sm:$0xff]
  %v2039 = vld [vmem:[#allocation3 + $0xa0] sm:$0xff]
  %v2040 = vld [vmem:[#allocation3 + $0xa8] sm:$0xff]
  %v2041 = vld [vmem:[#allocation3 + $0xb0] sm:$0xff]
  %v2042 = vld [vmem:[#allocation3 + $0xb8] sm:$0xff]
  %v2043 = vld [vmem:[#allocation3 + $0x120] sm:$0xff]
  %v2044 = vld [vmem:[#allocation3 + $0x128] sm:$0xff]
  %v2045 = vld [vmem:[#allocation3 + $0x130] sm:$0xff]
  %v2046 = vld [vmem:[#allocation3 + $0x138] sm:$0xff]
  %v2047 = vld [vmem:[#allocation3 + $0x1a0] sm:$0xff]
  %v2048 = vld [vmem:[#allocation3 + $0x1a8] sm:$0xff]
  %v2049 = vld [vmem:[#allocation3 + $0x1b0] sm:$0xff]
  %v2050 = vld [vmem:[#allocation3 + $0x1b8] sm:$0xff]
  %v2052 = vsel %vm1694, %v2027, 0
  %v2055 = vsel %vm1694, %v2028, 0
  %v2058 = vsel %vm1694, %v2029, 0
  %v2061 = vsel %vm1694, %v2030, 0
  %v2064 = vsel %vm1694, %v2031, 0
  %v2067 = vsel %vm1694, %v2032, 0
  %v2070 = vsel %vm1694, %v2033, 0
  %v2073 = vsel %vm1694, %v2034, 0
  %2075 = vmatpush.msra.mxu0 0.0
  %2076 = vmatpush.msra.mxu0 0.0
  %2077 = vmatpush.msra.mxu0 0.0
  %2078 = vmatpush.msra.mxu0 0.0
  %2079 = vmatpush.msra.mxu0 0.0
  %2080 = vmatpush.msra.mxu0 0.0
  %2081 = vmatpush.msra.mxu0 0.0
  %2082 = vmatpush.msra.mxu0 0.0
  %2083 = vmatpush.msra.mxu0 0.0
  %2084 = vmatpush.msra.mxu0 0.0
  %2085 = vmatpush.msra.mxu0 0.0
  %2086 = vmatpush.msra.mxu0 0.0
  %2087 = vmatpush.msra.mxu0 %v2047
  %2088 = vmatpush.msra.mxu0 %v2043
  %2089 = vmatpush.msra.mxu0 %v2039
  %2090 = vmatpush.msra.mxu0 %v2035
  %2091 = vmatmul.f32.gmra.mxu0 %v2052
  %v2092 = vpop.f32.mrf.mxu0
  %v2093 = vadd.f32 0.0, %v2092
  %2094 = vmatmul.f32.gmra.mxu0 %v2055
  %v2095 = vpop.f32.mrf.mxu0
  %v2096 = vadd.f32 0.0, %v2095
  %2097 = vmatmul.f32.gmra.mxu0 %v2058
  %v2098 = vpop.f32.mrf.mxu0
  %v2099 = vadd.f32 0.0, %v2098
  %2100 = vmatmul.f32.gmra.mxu0 %v2061
  %v2101 = vpop.f32.mrf.mxu0
  %v2102 = vadd.f32 0.0, %v2101
  %2103 = vmatmul.f32.gmra.mxu0 %v2064
  %v2104 = vpop.f32.mrf.mxu0
  %v2105 = vadd.f32 0.0, %v2104
  %2106 = vmatmul.f32.gmra.mxu0 %v2067
  %v2107 = vpop.f32.mrf.mxu0
  %v2108 = vadd.f32 0.0, %v2107
  %2109 = vmatmul.f32.gmra.mxu0 %v2070
  %v2110 = vpop.f32.mrf.mxu0
  %v2111 = vadd.f32 0.0, %v2110
  %2112 = vmatmul.f32.gmra.mxu0 %v2073
  %v2113 = vpop.f32.mrf.mxu0
  %v2114 = vadd.f32 0.0, %v2113
  %2115 = vdwg.mxu0
  %2116 = vmatpush.msra.mxu0 0.0
  %2117 = vmatpush.msra.mxu0 0.0
  %2118 = vmatpush.msra.mxu0 0.0
  %2119 = vmatpush.msra.mxu0 0.0
  %2120 = vmatpush.msra.mxu0 0.0
  %2121 = vmatpush.msra.mxu0 0.0
  %2122 = vmatpush.msra.mxu0 0.0
  %2123 = vmatpush.msra.mxu0 0.0
  %2124 = vmatpush.msra.mxu0 0.0
  %2125 = vmatpush.msra.mxu0 0.0
  %2126 = vmatpush.msra.mxu0 0.0
  %2127 = vmatpush.msra.mxu0 0.0
  %2128 = vmatpush.msra.mxu0 %v2048
  %2129 = vmatpush.msra.mxu0 %v2044
  %2130 = vmatpush.msra.mxu0 %v2040
  %2131 = vmatpush.msra.mxu0 %v2036
  %2132 = vmatmul.f32.gmra.mxu0 %v2052
  %v2133 = vpop.f32.mrf.mxu0
  %v2134 = vadd.f32 0.0, %v2133
  %2135 = vmatmul.f32.gmra.mxu0 %v2055
  %v2136 = vpop.f32.mrf.mxu0
  %v2137 = vadd.f32 0.0, %v2136
  %2138 = vmatmul.f32.gmra.mxu0 %v2058
  %v2139 = vpop.f32.mrf.mxu0
  %v2140 = vadd.f32 0.0, %v2139
  %2141 = vmatmul.f32.gmra.mxu0 %v2061
  %v2142 = vpop.f32.mrf.mxu0
  %v2143 = vadd.f32 0.0, %v2142
  %2144 = vmatmul.f32.gmra.mxu0 %v2064
  %v2145 = vpop.f32.mrf.mxu0
  %v2146 = vadd.f32 0.0, %v2145
  %2147 = vmatmul.f32.gmra.mxu0 %v2067
  %v2148 = vpop.f32.mrf.mxu0
  %v2149 = vadd.f32 0.0, %v2148
  %2150 = vmatmul.f32.gmra.mxu0 %v2070
  %v2151 = vpop.f32.mrf.mxu0
  %v2152 = vadd.f32 0.0, %v2151
  %2153 = vmatmul.f32.gmra.mxu0 %v2073
  %v2154 = vpop.f32.mrf.mxu0
  %v2155 = vadd.f32 0.0, %v2154
  %2156 = vdwg.mxu0
  %2157 = vmatpush.msra.mxu0 0.0
  %2158 = vmatpush.msra.mxu0 0.0
  %2159 = vmatpush.msra.mxu0 0.0
  %2160 = vmatpush.msra.mxu0 0.0
  %2161 = vmatpush.msra.mxu0 0.0
  %2162 = vmatpush.msra.mxu0 0.0
  %2163 = vmatpush.msra.mxu0 0.0
  %2164 = vmatpush.msra.mxu0 0.0
  %2165 = vmatpush.msra.mxu0 0.0
  %2166 = vmatpush.msra.mxu0 0.0
  %2167 = vmatpush.msra.mxu0 0.0
  %2168 = vmatpush.msra.mxu0 0.0
  %2169 = vmatpush.msra.mxu0 %v2049
  %2170 = vmatpush.msra.mxu0 %v2045
  %2171 = vmatpush.msra.mxu0 %v2041
  %2172 = vmatpush.msra.mxu0 %v2037
  %2173 = vmatmul.f32.gmra.mxu0 %v2052
  %v2174 = vpop.f32.mrf.mxu0
  %v2175 = vadd.f32 0.0, %v2174
  %2176 = vmatmul.f32.gmra.mxu0 %v2055
  %v2177 = vpop.f32.mrf.mxu0
  %v2178 = vadd.f32 0.0, %v2177
  %2179 = vmatmul.f32.gmra.mxu0 %v2058
  %v2180 = vpop.f32.mrf.mxu0
  %v2181 = vadd.f32 0.0, %v2180
  %2182 = vmatmul.f32.gmra.mxu0 %v2061
  %v2183 = vpop.f32.mrf.mxu0
  %v2184 = vadd.f32 0.0, %v2183
  %2185 = vmatmul.f32.gmra.mxu0 %v2064
  %v2186 = vpop.f32.mrf.mxu0
  %v2187 = vadd.f32 0.0, %v2186
  %2188 = vmatmul.f32.gmra.mxu0 %v2067
  %v2189 = vpop.f32.mrf.mxu0
  %v2190 = vadd.f32 0.0, %v2189
  %2191 = vmatmul.f32.gmra.mxu0 %v2070
  %v2192 = vpop.f32.mrf.mxu0
  %v2193 = vadd.f32 0.0, %v2192
  %2194 = vmatmul.f32.gmra.mxu0 %v2073
  %v2195 = vpop.f32.mrf.mxu0
  %v2196 = vadd.f32 0.0, %v2195
  %2197 = vdwg.mxu0
  %2198 = vmatpush.msra.mxu0 0.0
  %2199 = vmatpush.msra.mxu0 0.0
  %2200 = vmatpush.msra.mxu0 0.0
  %2201 = vmatpush.msra.mxu0 0.0
  %2202 = vmatpush.msra.mxu0 0.0
  %2203 = vmatpush.msra.mxu0 0.0
  %2204 = vmatpush.msra.mxu0 0.0
  %2205 = vmatpush.msra.mxu0 0.0
  %2206 = vmatpush.msra.mxu0 0.0
  %2207 = vmatpush.msra.mxu0 0.0
  %2208 = vmatpush.msra.mxu0 0.0
  %2209 = vmatpush.msra.mxu0 0.0
  %2210 = vmatpush.msra.mxu0 %v2050
  %2211 = vmatpush.msra.mxu0 %v2046
  %2212 = vmatpush.msra.mxu0 %v2042
  %2213 = vmatpush.msra.mxu0 %v2038
  %2214 = vmatmul.f32.gmra.mxu0 %v2052
  %v2215 = vpop.f32.mrf.mxu0
  %v2216 = vadd.f32 0.0, %v2215
  %2217 = vmatmul.f32.gmra.mxu0 %v2055
  %v2218 = vpop.f32.mrf.mxu0
  %v2219 = vadd.f32 0.0, %v2218
  %2220 = vmatmul.f32.gmra.mxu0 %v2058
  %v2221 = vpop.f32.mrf.mxu0
  %v2222 = vadd.f32 0.0, %v2221
  %2223 = vmatmul.f32.gmra.mxu0 %v2061
  %v2224 = vpop.f32.mrf.mxu0
  %v2225 = vadd.f32 0.0, %v2224
  %2226 = vmatmul.f32.gmra.mxu0 %v2064
  %v2227 = vpop.f32.mrf.mxu0
  %v2228 = vadd.f32 0.0, %v2227
  %2229 = vmatmul.f32.gmra.mxu0 %v2067
  %v2230 = vpop.f32.mrf.mxu0
  %v2231 = vadd.f32 0.0, %v2230
  %2232 = vmatmul.f32.gmra.mxu0 %v2070
  %v2233 = vpop.f32.mrf.mxu0
  %v2234 = vadd.f32 0.0, %v2233
  %2235 = vmatmul.f32.gmra.mxu0 %v2073
  %v2236 = vpop.f32.mrf.mxu0
  %v2237 = vadd.f32 0.0, %v2236
  %2238 = vdwg.mxu0
  %v2239 = vld [vmem:[%s8] sm:$0xff]
  %v2240 = vld [vmem:[%s8 + $0x8] sm:$0xff]
  %2242 = vset.pattern.permute.xlu0 0
  %2243 = vperm.xlu0 %2242, %v2239
  %v2244 = vpop.permute.xlu0 %2243
  %2247 = vset.pattern.permute.xlu0 0
  %2248 = vperm.xlu0 %2247, %v2240
  %v2249 = vpop.permute.xlu0 %2248
  %v2251 = vadd.f32 %v2093, %v2244
  %v2252 = vadd.f32 %v2134, %v2244
  %v2253 = vadd.f32 %v2175, %v2244
  %v2254 = vadd.f32 %v2216, %v2244
  %v2255 = vadd.f32 %v2096, %v2249
  %v2256 = vadd.f32 %v2137, %v2249
  %v2257 = vadd.f32 %v2178, %v2249
  %v2258 = vadd.f32 %v2219, %v2249
  %v2259 = vmax.f32 %v2251, 0.0
  %v2260 = vmax.f32 %v2252, 0.0
  %v2261 = vmax.f32 %v2253, 0.0
  %v2262 = vmax.f32 %v2254, 0.0
  %v2263 = vmax.f32 %v2255, 0.0
  %v2264 = vmax.f32 %v2256, 0.0
  %v2265 = vmax.f32 %v2257, 0.0
  %v2266 = vmax.f32 %v2258, 0.0
  %2267 = vst [vmem:[#allocation4 + $0x20] sm:$0xff] %v2259
  %2268 = vst [vmem:[#allocation4 + $0x28] sm:$0xff] %v2260
  %2269 = vst [vmem:[#allocation4 + $0x30] sm:$0xff] %v2261
  %2270 = vst [vmem:[#allocation4 + $0x38] sm:$0xff] %v2262
  %2271 = vst [vmem:[#allocation4 + $0x220] sm:$0xff] %v2263
  %2272 = vst [vmem:[#allocation4 + $0x228] sm:$0xff] %v2264
  %2273 = vst [vmem:[#allocation4 + $0x230] sm:$0xff] %v2265
  %2274 = vst [vmem:[#allocation4 + $0x238] sm:$0xff] %v2266
  %v2275 = vld [vmem:[%s8] sm:$0xff]
  %v2276 = vld [vmem:[%s8 + $0x8] sm:$0xff]
  %2278 = vset.pattern.permute.xlu0 0
  %2279 = vperm.xlu0 %2278, %v2275
  %v2280 = vpop.permute.xlu0 %2279
  %2283 = vset.pattern.permute.xlu0 0
  %2284 = vperm.xlu0 %2283, %v2276
  %v2285 = vpop.permute.xlu0 %2284
  %v2287 = vadd.f32 %v2099, %v2280
  %v2288 = vadd.f32 %v2140, %v2280
  %v2289 = vadd.f32 %v2181, %v2280
  %v2290 = vadd.f32 %v2222, %v2280
  %v2291 = vadd.f32 %v2102, %v2285
  %v2292 = vadd.f32 %v2143, %v2285
  %v2293 = vadd.f32 %v2184, %v2285
  %v2294 = vadd.f32 %v2225, %v2285
  %v2295 = vmax.f32 %v2287, 0.0
  %v2296 = vmax.f32 %v2288, 0.0
  %v2297 = vmax.f32 %v2289, 0.0
  %v2298 = vmax.f32 %v2290, 0.0
  %v2299 = vmax.f32 %v2291, 0.0
  %v2300 = vmax.f32 %v2292, 0.0
  %v2301 = vmax.f32 %v2293, 0.0
  %v2302 = vmax.f32 %v2294, 0.0
  %2303 = vst [vmem:[#allocation4 + $0xa0] sm:$0xff] %v2295
  %2304 = vst [vmem:[#allocation4 + $0xa8] sm:$0xff] %v2296
  %2305 = vst [vmem:[#allocation4 + $0xb0] sm:$0xff] %v2297
  %2306 = vst [vmem:[#allocation4 + $0xb8] sm:$0xff] %v2298
  %2307 = vst [vmem:[#allocation4 + $0x2a0] sm:$0xff] %v2299
  %2308 = vst [vmem:[#allocation4 + $0x2a8] sm:$0xff] %v2300
  %2309 = vst [vmem:[#allocation4 + $0x2b0] sm:$0xff] %v2301
  %2310 = vst [vmem:[#allocation4 + $0x2b8] sm:$0xff] %v2302
  %v2311 = vld [vmem:[%s8] sm:$0xff]
  %v2312 = vld [vmem:[%s8 + $0x8] sm:$0xff]
  %2314 = vset.pattern.permute.xlu0 0
  %2315 = vperm.xlu0 %2314, %v2311
  %v2316 = vpop.permute.xlu0 %2315
  %2319 = vset.pattern.permute.xlu0 0
  %2320 = vperm.xlu0 %2319, %v2312
  %v2321 = vpop.permute.xlu0 %2320
  %v2323 = vadd.f32 %v2105, %v2316
  %v2324 = vadd.f32 %v2146, %v2316
  %v2325 = vadd.f32 %v2187, %v2316
  %v2326 = vadd.f32 %v2228, %v2316
  %v2327 = vadd.f32 %v2108, %v2321
  %v2328 = vadd.f32 %v2149, %v2321
  %v2329 = vadd.f32 %v2190, %v2321
  %v2330 = vadd.f32 %v2231, %v2321
  %v2331 = vmax.f32 %v2323, 0.0
  %v2332 = vmax.f32 %v2324, 0.0
  %v2333 = vmax.f32 %v2325, 0.0
  %v2334 = vmax.f32 %v2326, 0.0
  %v2335 = vmax.f32 %v2327, 0.0
  %v2336 = vmax.f32 %v2328, 0.0
  %v2337 = vmax.f32 %v2329, 0.0
  %v2338 = vmax.f32 %v2330, 0.0
  %2339 = vst [vmem:[#allocation4 + $0x120] sm:$0xff] %v2331
  %2340 = vst [vmem:[#allocation4 + $0x128] sm:$0xff] %v2332
  %2341 = vst [vmem:[#allocation4 + $0x130] sm:$0xff] %v2333
  %2342 = vst [vmem:[#allocation4 + $0x138] sm:$0xff] %v2334
  %2343 = vst [vmem:[#allocation4 + $0x320] sm:$0xff] %v2335
  %2344 = vst [vmem:[#allocation4 + $0x328] sm:$0xff] %v2336
  %2345 = vst [vmem:[#allocation4 + $0x330] sm:$0xff] %v2337
  %2346 = vst [vmem:[#allocation4 + $0x338] sm:$0xff] %v2338
  %v2347 = vld [vmem:[%s8] sm:$0xff]
  %v2348 = vld [vmem:[%s8 + $0x8] sm:$0xff]
  %2350 = vset.pattern.permute.xlu0 0
  %2351 = vperm.xlu0 %2350, %v2347
  %v2352 = vpop.permute.xlu0 %2351
  %2355 = vset.pattern.permute.xlu0 0
  %2356 = vperm.xlu0 %2355, %v2348
  %v2357 = vpop.permute.xlu0 %2356
  %v2359 = vadd.f32 %v2111, %v2352
  %v2360 = vadd.f32 %v2152, %v2352
  %v2361 = vadd.f32 %v2193, %v2352
  %v2362 = vadd.f32 %v2234, %v2352
  %v2363 = vadd.f32 %v2114, %v2357
  %v2364 = vadd.f32 %v2155, %v2357
  %v2365 = vadd.f32 %v2196, %v2357
  %v2366 = vadd.f32 %v2237, %v2357
  %v2367 = vmax.f32 %v2359, 0.0
  %v2368 = vmax.f32 %v2360, 0.0
  %v2369 = vmax.f32 %v2361, 0.0
  %v2370 = vmax.f32 %v2362, 0.0
  %v2371 = vmax.f32 %v2363, 0.0
  %v2372 = vmax.f32 %v2364, 0.0
  %v2373 = vmax.f32 %v2365, 0.0
  %v2374 = vmax.f32 %v2366, 0.0
  %2375 = vst [vmem:[#allocation4 + $0x1a0] sm:$0xff] %v2367
  %2376 = vst [vmem:[#allocation4 + $0x1a8] sm:$0xff] %v2368
  %2377 = vst [vmem:[#allocation4 + $0x1b0] sm:$0xff] %v2369
  %2378 = vst [vmem:[#allocation4 + $0x1b8] sm:$0xff] %v2370
  %2379 = vst [vmem:[#allocation4 + $0x3a0] sm:$0xff] %v2371
  %2380 = vst [vmem:[#allocation4 + $0x3a8] sm:$0xff] %v2372
  %2381 = vst [vmem:[#allocation4 + $0x3b0] sm:$0xff] %v2373
  %2382 = vst [vmem:[#allocation4 + $0x3b8] sm:$0xff] %v2374
  %v2383 = vld [vmem:[%s7] sm:$0xff]
  %v2384 = vld [vmem:[%s7 + $0x8] sm:$0xff]
  %v2385 = vld [vmem:[%s7 + $0x10] sm:$0xff]
  %v2386 = vld [vmem:[%s7 + $0x18] sm:$0xff]
  %v2387 = vld [vmem:[%s7 + $0x20] sm:$0xff]
  %v2388 = vld [vmem:[%s7 + $0x28] sm:$0xff]
  %v2389 = vld [vmem:[%s7 + $0x30] sm:$0xff]
  %v2390 = vld [vmem:[%s7 + $0x38] sm:$0xff]
  %v2391 = vld [vmem:[#allocation3 + $0x40] sm:$0xff]
  %v2392 = vld [vmem:[#allocation3 + $0x48] sm:$0xff]
  %v2393 = vld [vmem:[#allocation3 + $0x50] sm:$0xff]
  %v2394 = vld [vmem:[#allocation3 + $0x58] sm:$0xff]
  %v2395 = vld [vmem:[#allocation3 + $0xc0] sm:$0xff]
  %v2396 = vld [vmem:[#allocation3 + $0xc8] sm:$0xff]
  %v2397 = vld [vmem:[#allocation3 + $0xd0] sm:$0xff]
  %v2398 = vld [vmem:[#allocation3 + $0xd8] sm:$0xff]
  %v2399 = vld [vmem:[#allocation3 + $0x140] sm:$0xff]
  %v2400 = vld [vmem:[#allocation3 + $0x148] sm:$0xff]
  %v2401 = vld [vmem:[#allocation3 + $0x150] sm:$0xff]
  %v2402 = vld [vmem:[#allocation3 + $0x158] sm:$0xff]
  %v2403 = vld [vmem:[#allocation3 + $0x1c0] sm:$0xff]
  %v2404 = vld [vmem:[#allocation3 + $0x1c8] sm:$0xff]
  %v2405 = vld [vmem:[#allocation3 + $0x1d0] sm:$0xff]
  %v2406 = vld [vmem:[#allocation3 + $0x1d8] sm:$0xff]
  %v2408 = vsel %vm1694, %v2383, 0
  %v2411 = vsel %vm1694, %v2384, 0
  %v2414 = vsel %vm1694, %v2385, 0
  %v2417 = vsel %vm1694, %v2386, 0
  %v2420 = vsel %vm1694, %v2387, 0
  %v2423 = vsel %vm1694, %v2388, 0
  %v2426 = vsel %vm1694, %v2389, 0
  %v2429 = vsel %vm1694, %v2390, 0
  %2431 = vmatpush.msra.mxu0 0.0
  %2432 = vmatpush.msra.mxu0 0.0
  %2433 = vmatpush.msra.mxu0 0.0
  %2434 = vmatpush.msra.mxu0 0.0
  %2435 = vmatpush.msra.mxu0 0.0
  %2436 = vmatpush.msra.mxu0 0.0
  %2437 = vmatpush.msra.mxu0 0.0
  %2438 = vmatpush.msra.mxu0 0.0
  %2439 = vmatpush.msra.mxu0 0.0
  %2440 = vmatpush.msra.mxu0 0.0
  %2441 = vmatpush.msra.mxu0 0.0
  %2442 = vmatpush.msra.mxu0 0.0
  %2443 = vmatpush.msra.mxu0 %v2403
  %2444 = vmatpush.msra.mxu0 %v2399
  %2445 = vmatpush.msra.mxu0 %v2395
  %2446 = vmatpush.msra.mxu0 %v2391
  %2447 = vmatmul.f32.gmra.mxu0 %v2408
  %v2448 = vpop.f32.mrf.mxu0
  %v2449 = vadd.f32 0.0, %v2448
  %2450 = vmatmul.f32.gmra.mxu0 %v2411
  %v2451 = vpop.f32.mrf.mxu0
  %v2452 = vadd.f32 0.0, %v2451
  %2453 = vmatmul.f32.gmra.mxu0 %v2414
  %v2454 = vpop.f32.mrf.mxu0
  %v2455 = vadd.f32 0.0, %v2454
  %2456 = vmatmul.f32.gmra.mxu0 %v2417
  %v2457 = vpop.f32.mrf.mxu0
  %v2458 = vadd.f32 0.0, %v2457
  %2459 = vmatmul.f32.gmra.mxu0 %v2420
  %v2460 = vpop.f32.mrf.mxu0
  %v2461 = vadd.f32 0.0, %v2460
  %2462 = vmatmul.f32.gmra.mxu0 %v2423
  %v2463 = vpop.f32.mrf.mxu0
  %v2464 = vadd.f32 0.0, %v2463
  %2465 = vmatmul.f32.gmra.mxu0 %v2426
  %v2466 = vpop.f32.mrf.mxu0
  %v2467 = vadd.f32 0.0, %v2466
  %2468 = vmatmul.f32.gmra.mxu0 %v2429
  %v2469 = vpop.f32.mrf.mxu0
  %v2470 = vadd.f32 0.0, %v2469
  %2471 = vdwg.mxu0
  %2472 = vmatpush.msra.mxu0 0.0
  %2473 = vmatpush.msra.mxu0 0.0
  %2474 = vmatpush.msra.mxu0 0.0
  %2475 = vmatpush.msra.mxu0 0.0
  %2476 = vmatpush.msra.mxu0 0.0
  %2477 = vmatpush.msra.mxu0 0.0
  %2478 = vmatpush.msra.mxu0 0.0
  %2479 = vmatpush.msra.mxu0 0.0
  %2480 = vmatpush.msra.mxu0 0.0
  %2481 = vmatpush.msra.mxu0 0.0
  %2482 = vmatpush.msra.mxu0 0.0
  %2483 = vmatpush.msra.mxu0 0.0
  %2484 = vmatpush.msra.mxu0 %v2404
  %2485 = vmatpush.msra.mxu0 %v2400
  %2486 = vmatpush.msra.mxu0 %v2396
  %2487 = vmatpush.msra.mxu0 %v2392
  %2488 = vmatmul.f32.gmra.mxu0 %v2408
  %v2489 = vpop.f32.mrf.mxu0
  %v2490 = vadd.f32 0.0, %v2489
  %2491 = vmatmul.f32.gmra.mxu0 %v2411
  %v2492 = vpop.f32.mrf.mxu0
  %v2493 = vadd.f32 0.0, %v2492
  %2494 = vmatmul.f32.gmra.mxu0 %v2414
  %v2495 = vpop.f32.mrf.mxu0
  %v2496 = vadd.f32 0.0, %v2495
  %2497 = vmatmul.f32.gmra.mxu0 %v2417
  %v2498 = vpop.f32.mrf.mxu0
  %v2499 = vadd.f32 0.0, %v2498
  %2500 = vmatmul.f32.gmra.mxu0 %v2420
  %v2501 = vpop.f32.mrf.mxu0
  %v2502 = vadd.f32 0.0, %v2501
  %2503 = vmatmul.f32.gmra.mxu0 %v2423
  %v2504 = vpop.f32.mrf.mxu0
  %v2505 = vadd.f32 0.0, %v2504
  %2506 = vmatmul.f32.gmra.mxu0 %v2426
  %v2507 = vpop.f32.mrf.mxu0
  %v2508 = vadd.f32 0.0, %v2507
  %2509 = vmatmul.f32.gmra.mxu0 %v2429
  %v2510 = vpop.f32.mrf.mxu0
  %v2511 = vadd.f32 0.0, %v2510
  %2512 = vdwg.mxu0
  %2513 = vmatpush.msra.mxu0 0.0
  %2514 = vmatpush.msra.mxu0 0.0
  %2515 = vmatpush.msra.mxu0 0.0
  %2516 = vmatpush.msra.mxu0 0.0
  %2517 = vmatpush.msra.mxu0 0.0
  %2518 = vmatpush.msra.mxu0 0.0
  %2519 = vmatpush.msra.mxu0 0.0
  %2520 = vmatpush.msra.mxu0 0.0
  %2521 = vmatpush.msra.mxu0 0.0
  %2522 = vmatpush.msra.mxu0 0.0
  %2523 = vmatpush.msra.mxu0 0.0
  %2524 = vmatpush.msra.mxu0 0.0
  %2525 = vmatpush.msra.mxu0 %v2405
  %2526 = vmatpush.msra.mxu0 %v2401
  %2527 = vmatpush.msra.mxu0 %v2397
  %2528 = vmatpush.msra.mxu0 %v2393
  %2529 = vmatmul.f32.gmra.mxu0 %v2408
  %v2530 = vpop.f32.mrf.mxu0
  %v2531 = vadd.f32 0.0, %v2530
  %2532 = vmatmul.f32.gmra.mxu0 %v2411
  %v2533 = vpop.f32.mrf.mxu0
  %v2534 = vadd.f32 0.0, %v2533
  %2535 = vmatmul.f32.gmra.mxu0 %v2414
  %v2536 = vpop.f32.mrf.mxu0
  %v2537 = vadd.f32 0.0, %v2536
  %2538 = vmatmul.f32.gmra.mxu0 %v2417
  %v2539 = vpop.f32.mrf.mxu0
  %v2540 = vadd.f32 0.0, %v2539
  %2541 = vmatmul.f32.gmra.mxu0 %v2420
  %v2542 = vpop.f32.mrf.mxu0
  %v2543 = vadd.f32 0.0, %v2542
  %2544 = vmatmul.f32.gmra.mxu0 %v2423
  %v2545 = vpop.f32.mrf.mxu0
  %v2546 = vadd.f32 0.0, %v2545
  %2547 = vmatmul.f32.gmra.mxu0 %v2426
  %v2548 = vpop.f32.mrf.mxu0
  %v2549 = vadd.f32 0.0, %v2548
  %2550 = vmatmul.f32.gmra.mxu0 %v2429
  %v2551 = vpop.f32.mrf.mxu0
  %v2552 = vadd.f32 0.0, %v2551
  %2553 = vdwg.mxu0
  %2554 = vmatpush.msra.mxu0 0.0
  %2555 = vmatpush.msra.mxu0 0.0
  %2556 = vmatpush.msra.mxu0 0.0
  %2557 = vmatpush.msra.mxu0 0.0
  %2558 = vmatpush.msra.mxu0 0.0
  %2559 = vmatpush.msra.mxu0 0.0
  %2560 = vmatpush.msra.mxu0 0.0
  %2561 = vmatpush.msra.mxu0 0.0
  %2562 = vmatpush.msra.mxu0 0.0
  %2563 = vmatpush.msra.mxu0 0.0
  %2564 = vmatpush.msra.mxu0 0.0
  %2565 = vmatpush.msra.mxu0 0.0
  %2566 = vmatpush.msra.mxu0 %v2406
  %2567 = vmatpush.msra.mxu0 %v2402
  %2568 = vmatpush.msra.mxu0 %v2398
  %2569 = vmatpush.msra.mxu0 %v2394
  %2570 = vmatmul.f32.gmra.mxu0 %v2408
  %v2571 = vpop.f32.mrf.mxu0
  %v2572 = vadd.f32 0.0, %v2571
  %2573 = vmatmul.f32.gmra.mxu0 %v2411
  %v2574 = vpop.f32.mrf.mxu0
  %v2575 = vadd.f32 0.0, %v2574
  %2576 = vmatmul.f32.gmra.mxu0 %v2414
  %v2577 = vpop.f32.mrf.mxu0
  %v2578 = vadd.f32 0.0, %v2577
  %2579 = vmatmul.f32.gmra.mxu0 %v2417
  %v2580 = vpop.f32.mrf.mxu0
  %v2581 = vadd.f32 0.0, %v2580
  %2582 = vmatmul.f32.gmra.mxu0 %v2420
  %v2583 = vpop.f32.mrf.mxu0
  %v2584 = vadd.f32 0.0, %v2583
  %2585 = vmatmul.f32.gmra.mxu0 %v2423
  %v2586 = vpop.f32.mrf.mxu0
  %v2587 = vadd.f32 0.0, %v2586
  %2588 = vmatmul.f32.gmra.mxu0 %v2426
  %v2589 = vpop.f32.mrf.mxu0
  %v2590 = vadd.f32 0.0, %v2589
  %2591 = vmatmul.f32.gmra.mxu0 %v2429
  %v2592 = vpop.f32.mrf.mxu0
  %v2593 = vadd.f32 0.0, %v2592
  %2594 = vdwg.mxu0
  %v2595 = vld [vmem:[%s8] sm:$0xff]
  %v2596 = vld [vmem:[%s8 + $0x8] sm:$0xff]
  %2598 = vset.pattern.permute.xlu0 0
  %2599 = vperm.xlu0 %2598, %v2595
  %v2600 = vpop.permute.xlu0 %2599
  %2603 = vset.pattern.permute.xlu0 0
  %2604 = vperm.xlu0 %2603, %v2596
  %v2605 = vpop.permute.xlu0 %2604
  %v2607 = vadd.f32 %v2449, %v2600
  %v2608 = vadd.f32 %v2490, %v2600
  %v2609 = vadd.f32 %v2531, %v2600
  %v2610 = vadd.f32 %v2572, %v2600
  %v2611 = vadd.f32 %v2452, %v2605
  %v2612 = vadd.f32 %v2493, %v2605
  %v2613 = vadd.f32 %v2534, %v2605
  %v2614 = vadd.f32 %v2575, %v2605
  %v2615 = vmax.f32 %v2607, 0.0
  %v2616 = vmax.f32 %v2608, 0.0
  %v2617 = vmax.f32 %v2609, 0.0
  %v2618 = vmax.f32 %v2610, 0.0
  %v2619 = vmax.f32 %v2611, 0.0
  %v2620 = vmax.f32 %v2612, 0.0
  %v2621 = vmax.f32 %v2613, 0.0
  %v2622 = vmax.f32 %v2614, 0.0
  %2623 = vst [vmem:[#allocation4 + $0x40] sm:$0xff] %v2615
  %2624 = vst [vmem:[#allocation4 + $0x48] sm:$0xff] %v2616
  %2625 = vst [vmem:[#allocation4 + $0x50] sm:$0xff] %v2617
  %2626 = vst [vmem:[#allocation4 + $0x58] sm:$0xff] %v2618
  %2627 = vst [vmem:[#allocation4 + $0x240] sm:$0xff] %v2619
  %2628 = vst [vmem:[#allocation4 + $0x248] sm:$0xff] %v2620
  %2629 = vst [vmem:[#allocation4 + $0x250] sm:$0xff] %v2621
  %2630 = vst [vmem:[#allocation4 + $0x258] sm:$0xff] %v2622
  %v2631 = vld [vmem:[%s8] sm:$0xff]
  %v2632 = vld [vmem:[%s8 + $0x8] sm:$0xff]
  %2634 = vset.pattern.permute.xlu0 0
  %2635 = vperm.xlu0 %2634, %v2631
  %v2636 = vpop.permute.xlu0 %2635
  %2639 = vset.pattern.permute.xlu0 0
  %2640 = vperm.xlu0 %2639, %v2632
  %v2641 = vpop.permute.xlu0 %2640
  %v2643 = vadd.f32 %v2455, %v2636
  %v2644 = vadd.f32 %v2496, %v2636
  %v2645 = vadd.f32 %v2537, %v2636
  %v2646 = vadd.f32 %v2578, %v2636
  %v2647 = vadd.f32 %v2458, %v2641
  %v2648 = vadd.f32 %v2499, %v2641
  %v2649 = vadd.f32 %v2540, %v2641
  %v2650 = vadd.f32 %v2581, %v2641
  %v2651 = vmax.f32 %v2643, 0.0
  %v2652 = vmax.f32 %v2644, 0.0
  %v2653 = vmax.f32 %v2645, 0.0
  %v2654 = vmax.f32 %v2646, 0.0
  %v2655 = vmax.f32 %v2647, 0.0
  %v2656 = vmax.f32 %v2648, 0.0
  %v2657 = vmax.f32 %v2649, 0.0
  %v2658 = vmax.f32 %v2650, 0.0
  %2659 = vst [vmem:[#allocation4 + $0xc0] sm:$0xff] %v2651
  %2660 = vst [vmem:[#allocation4 + $0xc8] sm:$0xff] %v2652
  %2661 = vst [vmem:[#allocation4 + $0xd0] sm:$0xff] %v2653
  %2662 = vst [vmem:[#allocation4 + $0xd8] sm:$0xff] %v2654
  %2663 = vst [vmem:[#allocation4 + $0x2c0] sm:$0xff] %v2655
  %2664 = vst [vmem:[#allocation4 + $0x2c8] sm:$0xff] %v2656
  %2665 = vst [vmem:[#allocation4 + $0x2d0] sm:$0xff] %v2657
  %2666 = vst [vmem:[#allocation4 + $0x2d8] sm:$0xff] %v2658
  %v2667 = vld [vmem:[%s8] sm:$0xff]
  %v2668 = vld [vmem:[%s8 + $0x8] sm:$0xff]
  %2670 = vset.pattern.permute.xlu0 0
  %2671 = vperm.xlu0 %2670, %v2667
  %v2672 = vpop.permute.xlu0 %2671
  %2675 = vset.pattern.permute.xlu0 0
  %2676 = vperm.xlu0 %2675, %v2668
  %v2677 = vpop.permute.xlu0 %2676
  %v2679 = vadd.f32 %v2461, %v2672
  %v2680 = vadd.f32 %v2502, %v2672
  %v2681 = vadd.f32 %v2543, %v2672
  %v2682 = vadd.f32 %v2584, %v2672
  %v2683 = vadd.f32 %v2464, %v2677
  %v2684 = vadd.f32 %v2505, %v2677
  %v2685 = vadd.f32 %v2546, %v2677
  %v2686 = vadd.f32 %v2587, %v2677
  %v2687 = vmax.f32 %v2679, 0.0
  %v2688 = vmax.f32 %v2680, 0.0
  %v2689 = vmax.f32 %v2681, 0.0
  %v2690 = vmax.f32 %v2682, 0.0
  %v2691 = vmax.f32 %v2683, 0.0
  %v2692 = vmax.f32 %v2684, 0.0
  %v2693 = vmax.f32 %v2685, 0.0
  %v2694 = vmax.f32 %v2686, 0.0
  %2695 = vst [vmem:[#allocation4 + $0x140] sm:$0xff] %v2687
  %2696 = vst [vmem:[#allocation4 + $0x148] sm:$0xff] %v2688
  %2697 = vst [vmem:[#allocation4 + $0x150] sm:$0xff] %v2689
  %2698 = vst [vmem:[#allocation4 + $0x158] sm:$0xff] %v2690
  %2699 = vst [vmem:[#allocation4 + $0x340] sm:$0xff] %v2691
  %2700 = vst [vmem:[#allocation4 + $0x348] sm:$0xff] %v2692
  %2701 = vst [vmem:[#allocation4 + $0x350] sm:$0xff] %v2693
  %2702 = vst [vmem:[#allocation4 + $0x358] sm:$0xff] %v2694
  %v2703 = vld [vmem:[%s8] sm:$0xff]
  %v2704 = vld [vmem:[%s8 + $0x8] sm:$0xff]
  %2706 = vset.pattern.permute.xlu0 0
  %2707 = vperm.xlu0 %2706, %v2703
  %v2708 = vpop.permute.xlu0 %2707
  %2711 = vset.pattern.permute.xlu0 0
  %2712 = vperm.xlu0 %2711, %v2704
  %v2713 = vpop.permute.xlu0 %2712
  %v2715 = vadd.f32 %v2467, %v2708
  %v2716 = vadd.f32 %v2508, %v2708
  %v2717 = vadd.f32 %v2549, %v2708
  %v2718 = vadd.f32 %v2590, %v2708
  %v2719 = vadd.f32 %v2470, %v2713
  %v2720 = vadd.f32 %v2511, %v2713
  %v2721 = vadd.f32 %v2552, %v2713
  %v2722 = vadd.f32 %v2593, %v2713
  %v2723 = vmax.f32 %v2715, 0.0
  %v2724 = vmax.f32 %v2716, 0.0
  %v2725 = vmax.f32 %v2717, 0.0
  %v2726 = vmax.f32 %v2718, 0.0
  %v2727 = vmax.f32 %v2719, 0.0
  %v2728 = vmax.f32 %v2720, 0.0
  %v2729 = vmax.f32 %v2721, 0.0
  %v2730 = vmax.f32 %v2722, 0.0
  %2731 = vst [vmem:[#allocation4 + $0x1c0] sm:$0xff] %v2723
  %2732 = vst [vmem:[#allocation4 + $0x1c8] sm:$0xff] %v2724
  %2733 = vst [vmem:[#allocation4 + $0x1d0] sm:$0xff] %v2725
  %2734 = vst [vmem:[#allocation4 + $0x1d8] sm:$0xff] %v2726
  %2735 = vst [vmem:[#allocation4 + $0x3c0] sm:$0xff] %v2727
  %2736 = vst [vmem:[#allocation4 + $0x3c8] sm:$0xff] %v2728
  %2737 = vst [vmem:[#allocation4 + $0x3d0] sm:$0xff] %v2729
  %2738 = vst [vmem:[#allocation4 + $0x3d8] sm:$0xff] %v2730
  %v2739 = vld [vmem:[%s7] sm:$0xff]
  %v2740 = vld [vmem:[%s7 + $0x8] sm:$0xff]
  %v2741 = vld [vmem:[%s7 + $0x10] sm:$0xff]
  %v2742 = vld [vmem:[%s7 + $0x18] sm:$0xff]
  %v2743 = vld [vmem:[%s7 + $0x20] sm:$0xff]
  %v2744 = vld [vmem:[%s7 + $0x28] sm:$0xff]
  %v2745 = vld [vmem:[%s7 + $0x30] sm:$0xff]
  %v2746 = vld [vmem:[%s7 + $0x38] sm:$0xff]
  %v2747 = vld [vmem:[#allocation3 + $0x60] sm:$0xff]
  %v2748 = vld [vmem:[#allocation3 + $0x68] sm:$0xff]
  %v2749 = vld [vmem:[#allocation3 + $0x70] sm:$0xff]
  %v2750 = vld [vmem:[#allocation3 + $0x78] sm:$0xff]
  %v2751 = vld [vmem:[#allocation3 + $0xe0] sm:$0xff]
  %v2752 = vld [vmem:[#allocation3 + $0xe8] sm:$0xff]
  %v2753 = vld [vmem:[#allocation3 + $0xf0] sm:$0xff]
  %v2754 = vld [vmem:[#allocation3 + $0xf8] sm:$0xff]
  %v2755 = vld [vmem:[#allocation3 + $0x160] sm:$0xff]
  %v2756 = vld [vmem:[#allocation3 + $0x168] sm:$0xff]
  %v2757 = vld [vmem:[#allocation3 + $0x170] sm:$0xff]
  %v2758 = vld [vmem:[#allocation3 + $0x178] sm:$0xff]
  %v2759 = vld [vmem:[#allocation3 + $0x1e0] sm:$0xff]
  %v2760 = vld [vmem:[#allocation3 + $0x1e8] sm:$0xff]
  %v2761 = vld [vmem:[#allocation3 + $0x1f0] sm:$0xff]
  %v2762 = vld [vmem:[#allocation3 + $0x1f8] sm:$0xff]
  %v2764 = vsel %vm1694, %v2739, 0
  %v2767 = vsel %vm1694, %v2740, 0
  %v2770 = vsel %vm1694, %v2741, 0
  %v2773 = vsel %vm1694, %v2742, 0
  %v2776 = vsel %vm1694, %v2743, 0
  %v2779 = vsel %vm1694, %v2744, 0
  %v2782 = vsel %vm1694, %v2745, 0
  %v2785 = vsel %vm1694, %v2746, 0
  %2787 = vmatpush.msra.mxu0 0.0
  %2788 = vmatpush.msra.mxu0 0.0
  %2789 = vmatpush.msra.mxu0 0.0
  %2790 = vmatpush.msra.mxu0 0.0
  %2791 = vmatpush.msra.mxu0 0.0
  %2792 = vmatpush.msra.mxu0 0.0
  %2793 = vmatpush.msra.mxu0 0.0
  %2794 = vmatpush.msra.mxu0 0.0
  %2795 = vmatpush.msra.mxu0 0.0
  %2796 = vmatpush.msra.mxu0 0.0
  %2797 = vmatpush.msra.mxu0 0.0
  %2798 = vmatpush.msra.mxu0 0.0
  %2799 = vmatpush.msra.mxu0 %v2759
  %2800 = vmatpush.msra.mxu0 %v2755
  %2801 = vmatpush.msra.mxu0 %v2751
  %2802 = vmatpush.msra.mxu0 %v2747
  %2803 = vmatmul.f32.gmra.mxu0 %v2764
  %v2804 = vpop.f32.mrf.mxu0
  %v2805 = vadd.f32 0.0, %v2804
  %2806 = vmatmul.f32.gmra.mxu0 %v2767
  %v2807 = vpop.f32.mrf.mxu0
  %v2808 = vadd.f32 0.0, %v2807
  %2809 = vmatmul.f32.gmra.mxu0 %v2770
  %v2810 = vpop.f32.mrf.mxu0
  %v2811 = vadd.f32 0.0, %v2810
  %2812 = vmatmul.f32.gmra.mxu0 %v2773
  %v2813 = vpop.f32.mrf.mxu0
  %v2814 = vadd.f32 0.0, %v2813
  %2815 = vmatmul.f32.gmra.mxu0 %v2776
  %v2816 = vpop.f32.mrf.mxu0
  %v2817 = vadd.f32 0.0, %v2816
  %2818 = vmatmul.f32.gmra.mxu0 %v2779
  %v2819 = vpop.f32.mrf.mxu0
  %v2820 = vadd.f32 0.0, %v2819
  %2821 = vmatmul.f32.gmra.mxu0 %v2782
  %v2822 = vpop.f32.mrf.mxu0
  %v2823 = vadd.f32 0.0, %v2822
  %2824 = vmatmul.f32.gmra.mxu0 %v2785
  %v2825 = vpop.f32.mrf.mxu0
  %v2826 = vadd.f32 0.0, %v2825
  %2827 = vdwg.mxu0
  %2828 = vmatpush.msra.mxu0 0.0
  %2829 = vmatpush.msra.mxu0 0.0
  %2830 = vmatpush.msra.mxu0 0.0
  %2831 = vmatpush.msra.mxu0 0.0
  %2832 = vmatpush.msra.mxu0 0.0
  %2833 = vmatpush.msra.mxu0 0.0
  %2834 = vmatpush.msra.mxu0 0.0
  %2835 = vmatpush.msra.mxu0 0.0
  %2836 = vmatpush.msra.mxu0 0.0
  %2837 = vmatpush.msra.mxu0 0.0
  %2838 = vmatpush.msra.mxu0 0.0
  %2839 = vmatpush.msra.mxu0 0.0
  %2840 = vmatpush.msra.mxu0 %v2760
  %2841 = vmatpush.msra.mxu0 %v2756
  %2842 = vmatpush.msra.mxu0 %v2752
  %2843 = vmatpush.msra.mxu0 %v2748
  %2844 = vmatmul.f32.gmra.mxu0 %v2764
  %v2845 = vpop.f32.mrf.mxu0
  %v2846 = vadd.f32 0.0, %v2845
  %2847 = vmatmul.f32.gmra.mxu0 %v2767
  %v2848 = vpop.f32.mrf.mxu0
  %v2849 = vadd.f32 0.0, %v2848
  %2850 = vmatmul.f32.gmra.mxu0 %v2770
  %v2851 = vpop.f32.mrf.mxu0
  %v2852 = vadd.f32 0.0, %v2851
  %2853 = vmatmul.f32.gmra.mxu0 %v2773
  %v2854 = vpop.f32.mrf.mxu0
  %v2855 = vadd.f32 0.0, %v2854
  %2856 = vmatmul.f32.gmra.mxu0 %v2776
  %v2857 = vpop.f32.mrf.mxu0
  %v2858 = vadd.f32 0.0, %v2857
  %2859 = vmatmul.f32.gmra.mxu0 %v2779
  %v2860 = vpop.f32.mrf.mxu0
  %v2861 = vadd.f32 0.0, %v2860
  %2862 = vmatmul.f32.gmra.mxu0 %v2782
  %v2863 = vpop.f32.mrf.mxu0
  %v2864 = vadd.f32 0.0, %v2863
  %2865 = vmatmul.f32.gmra.mxu0 %v2785
  %v2866 = vpop.f32.mrf.mxu0
  %v2867 = vadd.f32 0.0, %v2866
  %2868 = vdwg.mxu0
  %2869 = vmatpush.msra.mxu0 0.0
  %2870 = vmatpush.msra.mxu0 0.0
  %2871 = vmatpush.msra.mxu0 0.0
  %2872 = vmatpush.msra.mxu0 0.0
  %2873 = vmatpush.msra.mxu0 0.0
  %2874 = vmatpush.msra.mxu0 0.0
  %2875 = vmatpush.msra.mxu0 0.0
  %2876 = vmatpush.msra.mxu0 0.0
  %2877 = vmatpush.msra.mxu0 0.0
  %2878 = vmatpush.msra.mxu0 0.0
  %2879 = vmatpush.msra.mxu0 0.0
  %2880 = vmatpush.msra.mxu0 0.0
  %2881 = vmatpush.msra.mxu0 %v2761
  %2882 = vmatpush.msra.mxu0 %v2757
  %2883 = vmatpush.msra.mxu0 %v2753
  %2884 = vmatpush.msra.mxu0 %v2749
  %2885 = vmatmul.f32.gmra.mxu0 %v2764
  %v2886 = vpop.f32.mrf.mxu0
  %v2887 = vadd.f32 0.0, %v2886
  %2888 = vmatmul.f32.gmra.mxu0 %v2767
  %v2889 = vpop.f32.mrf.mxu0
  %v2890 = vadd.f32 0.0, %v2889
  %2891 = vmatmul.f32.gmra.mxu0 %v2770
  %v2892 = vpop.f32.mrf.mxu0
  %v2893 = vadd.f32 0.0, %v2892
  %2894 = vmatmul.f32.gmra.mxu0 %v2773
  %v2895 = vpop.f32.mrf.mxu0
  %v2896 = vadd.f32 0.0, %v2895
  %2897 = vmatmul.f32.gmra.mxu0 %v2776
  %v2898 = vpop.f32.mrf.mxu0
  %v2899 = vadd.f32 0.0, %v2898
  %2900 = vmatmul.f32.gmra.mxu0 %v2779
  %v2901 = vpop.f32.mrf.mxu0
  %v2902 = vadd.f32 0.0, %v2901
  %2903 = vmatmul.f32.gmra.mxu0 %v2782
  %v2904 = vpop.f32.mrf.mxu0
  %v2905 = vadd.f32 0.0, %v2904
  %2906 = vmatmul.f32.gmra.mxu0 %v2785
  %v2907 = vpop.f32.mrf.mxu0
  %v2908 = vadd.f32 0.0, %v2907
  %2909 = vdwg.mxu0
  %2910 = vmatpush.msra.mxu0 0.0
  %2911 = vmatpush.msra.mxu0 0.0
  %2912 = vmatpush.msra.mxu0 0.0
  %2913 = vmatpush.msra.mxu0 0.0
  %2914 = vmatpush.msra.mxu0 0.0
  %2915 = vmatpush.msra.mxu0 0.0
  %2916 = vmatpush.msra.mxu0 0.0
  %2917 = vmatpush.msra.mxu0 0.0
  %2918 = vmatpush.msra.mxu0 0.0
  %2919 = vmatpush.msra.mxu0 0.0
  %2920 = vmatpush.msra.mxu0 0.0
  %2921 = vmatpush.msra.mxu0 0.0
  %2922 = vmatpush.msra.mxu0 %v2762
  %2923 = vmatpush.msra.mxu0 %v2758
  %2924 = vmatpush.msra.mxu0 %v2754
  %2925 = vmatpush.msra.mxu0 %v2750
  %2926 = vmatmul.f32.gmra.mxu0 %v2764
  %v2927 = vpop.f32.mrf.mxu0
  %v2928 = vadd.f32 0.0, %v2927
  %2929 = vmatmul.f32.gmra.mxu0 %v2767
  %v2930 = vpop.f32.mrf.mxu0
  %v2931 = vadd.f32 0.0, %v2930
  %2932 = vmatmul.f32.gmra.mxu0 %v2770
  %v2933 = vpop.f32.mrf.mxu0
  %v2934 = vadd.f32 0.0, %v2933
  %2935 = vmatmul.f32.gmra.mxu0 %v2773
  %v2936 = vpop.f32.mrf.mxu0
  %v2937 = vadd.f32 0.0, %v2936
  %2938 = vmatmul.f32.gmra.mxu0 %v2776
  %v2939 = vpop.f32.mrf.mxu0
  %v2940 = vadd.f32 0.0, %v2939
  %2941 = vmatmul.f32.gmra.mxu0 %v2779
  %v2942 = vpop.f32.mrf.mxu0
  %v2943 = vadd.f32 0.0, %v2942
  %2944 = vmatmul.f32.gmra.mxu0 %v2782
  %v2945 = vpop.f32.mrf.mxu0
  %v2946 = vadd.f32 0.0, %v2945
  %2947 = vmatmul.f32.gmra.mxu0 %v2785
  %v2948 = vpop.f32.mrf.mxu0
  %v2949 = vadd.f32 0.0, %v2948
  %2950 = vdwg.mxu0
  %v2951 = vld [vmem:[%s8] sm:$0xff]
  %v2952 = vld [vmem:[%s8 + $0x8] sm:$0xff]
  %2954 = vset.pattern.permute.xlu0 0
  %2955 = vperm.xlu0 %2954, %v2951
  %v2956 = vpop.permute.xlu0 %2955
  %2959 = vset.pattern.permute.xlu0 0
  %2960 = vperm.xlu0 %2959, %v2952
  %v2961 = vpop.permute.xlu0 %2960
  %v2963 = vadd.f32 %v2805, %v2956
  %v2964 = vadd.f32 %v2846, %v2956
  %v2965 = vadd.f32 %v2887, %v2956
  %v2966 = vadd.f32 %v2928, %v2956
  %v2967 = vadd.f32 %v2808, %v2961
  %v2968 = vadd.f32 %v2849, %v2961
  %v2969 = vadd.f32 %v2890, %v2961
  %v2970 = vadd.f32 %v2931, %v2961
  %v2971 = vmax.f32 %v2963, 0.0
  %v2972 = vmax.f32 %v2964, 0.0
  %v2973 = vmax.f32 %v2965, 0.0
  %v2974 = vmax.f32 %v2966, 0.0
  %v2975 = vmax.f32 %v2967, 0.0
  %v2976 = vmax.f32 %v2968, 0.0
  %v2977 = vmax.f32 %v2969, 0.0
  %v2978 = vmax.f32 %v2970, 0.0
  %2979 = vst [vmem:[#allocation4 + $0x60] sm:$0xff] %v2971
  %2980 = vst [vmem:[#allocation4 + $0x68] sm:$0xff] %v2972
  %2981 = vst [vmem:[#allocation4 + $0x70] sm:$0xff] %v2973
  %2982 = vst [vmem:[#allocation4 + $0x78] sm:$0xff] %v2974
  %2983 = vst [vmem:[#allocation4 + $0x260] sm:$0xff] %v2975
  %2984 = vst [vmem:[#allocation4 + $0x268] sm:$0xff] %v2976
  %2985 = vst [vmem:[#allocation4 + $0x270] sm:$0xff] %v2977
  %2986 = vst [vmem:[#allocation4 + $0x278] sm:$0xff] %v2978
  %v2987 = vld [vmem:[%s8] sm:$0xff]
  %v2988 = vld [vmem:[%s8 + $0x8] sm:$0xff]
  %2990 = vset.pattern.permute.xlu0 0
  %2991 = vperm.xlu0 %2990, %v2987
  %v2992 = vpop.permute.xlu0 %2991
  %2995 = vset.pattern.permute.xlu0 0
  %2996 = vperm.xlu0 %2995, %v2988
  %v2997 = vpop.permute.xlu0 %2996
  %v2999 = vadd.f32 %v2811, %v2992
  %v3000 = vadd.f32 %v2852, %v2992
  %v3001 = vadd.f32 %v2893, %v2992
  %v3002 = vadd.f32 %v2934, %v2992
  %v3003 = vadd.f32 %v2814, %v2997
  %v3004 = vadd.f32 %v2855, %v2997
  %v3005 = vadd.f32 %v2896, %v2997
  %v3006 = vadd.f32 %v2937, %v2997
  %v3007 = vmax.f32 %v2999, 0.0
  %v3008 = vmax.f32 %v3000, 0.0
  %v3009 = vmax.f32 %v3001, 0.0
  %v3010 = vmax.f32 %v3002, 0.0
  %v3011 = vmax.f32 %v3003, 0.0
  %v3012 = vmax.f32 %v3004, 0.0
  %v3013 = vmax.f32 %v3005, 0.0
  %v3014 = vmax.f32 %v3006, 0.0
  %3015 = vst [vmem:[#allocation4 + $0xe0] sm:$0xff] %v3007
  %3016 = vst [vmem:[#allocation4 + $0xe8] sm:$0xff] %v3008
  %3017 = vst [vmem:[#allocation4 + $0xf0] sm:$0xff] %v3009
  %3018 = vst [vmem:[#allocation4 + $0xf8] sm:$0xff] %v3010
  %3019 = vst [vmem:[#allocation4 + $0x2e0] sm:$0xff] %v3011
  %3020 = vst [vmem:[#allocation4 + $0x2e8] sm:$0xff] %v3012
  %3021 = vst [vmem:[#allocation4 + $0x2f0] sm:$0xff] %v3013
  %3022 = vst [vmem:[#allocation4 + $0x2f8] sm:$0xff] %v3014
  %v3023 = vld [vmem:[%s8] sm:$0xff]
  %v3024 = vld [vmem:[%s8 + $0x8] sm:$0xff]
  %3026 = vset.pattern.permute.xlu0 0
  %3027 = vperm.xlu0 %3026, %v3023
  %v3028 = vpop.permute.xlu0 %3027
  %3031 = vset.pattern.permute.xlu0 0
  %3032 = vperm.xlu0 %3031, %v3024
  %v3033 = vpop.permute.xlu0 %3032
  %v3035 = vadd.f32 %v2817, %v3028
  %v3036 = vadd.f32 %v2858, %v3028
  %v3037 = vadd.f32 %v2899, %v3028
  %v3038 = vadd.f32 %v2940, %v3028
  %v3039 = vadd.f32 %v2820, %v3033
  %v3040 = vadd.f32 %v2861, %v3033
  %v3041 = vadd.f32 %v2902, %v3033
  %v3042 = vadd.f32 %v2943, %v3033
  %v3043 = vmax.f32 %v3035, 0.0
  %v3044 = vmax.f32 %v3036, 0.0
  %v3045 = vmax.f32 %v3037, 0.0
  %v3046 = vmax.f32 %v3038, 0.0
  %v3047 = vmax.f32 %v3039, 0.0
  %v3048 = vmax.f32 %v3040, 0.0
  %v3049 = vmax.f32 %v3041, 0.0
  %v3050 = vmax.f32 %v3042, 0.0
  %3051 = vst [vmem:[#allocation4 + $0x160] sm:$0xff] %v3043
  %3052 = vst [vmem:[#allocation4 + $0x168] sm:$0xff] %v3044
  %3053 = vst [vmem:[#allocation4 + $0x170] sm:$0xff] %v3045
  %3054 = vst [vmem:[#allocation4 + $0x178] sm:$0xff] %v3046
  %3055 = vst [vmem:[#allocation4 + $0x360] sm:$0xff] %v3047
  %3056 = vst [vmem:[#allocation4 + $0x368] sm:$0xff] %v3048
  %3057 = vst [vmem:[#allocation4 + $0x370] sm:$0xff] %v3049
  %3058 = vst [vmem:[#allocation4 + $0x378] sm:$0xff] %v3050
  %v3059 = vld [vmem:[%s8] sm:$0xff]
  %v3060 = vld [vmem:[%s8 + $0x8] sm:$0xff]
  %3062 = vset.pattern.permute.xlu0 0
  %3063 = vperm.xlu0 %3062, %v3059
  %v3064 = vpop.permute.xlu0 %3063
  %3067 = vset.pattern.permute.xlu0 0
  %3068 = vperm.xlu0 %3067, %v3060
  %v3069 = vpop.permute.xlu0 %3068
  %v3071 = vadd.f32 %v2823, %v3064
  %v3072 = vadd.f32 %v2864, %v3064
  %v3073 = vadd.f32 %v2905, %v3064
  %v3074 = vadd.f32 %v2946, %v3064
  %v3075 = vadd.f32 %v2826, %v3069
  %v3076 = vadd.f32 %v2867, %v3069
  %v3077 = vadd.f32 %v2908, %v3069
  %v3078 = vadd.f32 %v2949, %v3069
  %v3079 = vmax.f32 %v3071, 0.0
  %v3080 = vmax.f32 %v3072, 0.0
  %v3081 = vmax.f32 %v3073, 0.0
  %v3082 = vmax.f32 %v3074, 0.0
  %v3083 = vmax.f32 %v3075, 0.0
  %v3084 = vmax.f32 %v3076, 0.0
  %v3085 = vmax.f32 %v3077, 0.0
  %v3086 = vmax.f32 %v3078, 0.0
  %3087 = vst [vmem:[#allocation4 + $0x1e0] sm:$0xff] %v3079
  %3088 = vst [vmem:[#allocation4 + $0x1e8] sm:$0xff] %v3080
  %3089 = vst [vmem:[#allocation4 + $0x1f0] sm:$0xff] %v3081
  %3090 = vst [vmem:[#allocation4 + $0x1f8] sm:$0xff] %v3082
  %3091 = vst [vmem:[#allocation4 + $0x3e0] sm:$0xff] %v3083
  %3092 = vst [vmem:[#allocation4 + $0x3e8] sm:$0xff] %v3084
  %3093 = vst [vmem:[#allocation4 + $0x3f0] sm:$0xff] %v3085
  %3094 = vst [vmem:[#allocation4 + $0x3f8] sm:$0xff] %v3086
  %v3095 = vld [vmem:[%s9] sm:$0xff]
  %v3096 = vld [vmem:[%s9 + $0x8] sm:$0xf]
  %v3097 = vld [vmem:[#allocation4] sm:$0xff]
  %v3098 = vld [vmem:[#allocation4 + $0x8] sm:$0xff]
  %v3099 = vld [vmem:[#allocation4 + $0x10] sm:$0xff]
  %v3100 = vld [vmem:[#allocation4 + $0x18] sm:$0xff]
  %v3101 = vld [vmem:[#allocation4 + $0x20] sm:$0xff]
  %v3102 = vld [vmem:[#allocation4 + $0x28] sm:$0xff]
  %v3103 = vld [vmem:[#allocation4 + $0x30] sm:$0xff]
  %v3104 = vld [vmem:[#allocation4 + $0x38] sm:$0xff]
  %v3105 = vld [vmem:[#allocation4 + $0x200] sm:$0xff]
  %v3106 = vld [vmem:[#allocation4 + $0x208] sm:$0xff]
  %v3107 = vld [vmem:[#allocation4 + $0x210] sm:$0xff]
  %v3108 = vld [vmem:[#allocation4 + $0x218] sm:$0xff]
  %v3109 = vld [vmem:[#allocation4 + $0x220] sm:$0xff]
  %v3110 = vld [vmem:[#allocation4 + $0x228] sm:$0xff]
  %v3111 = vld [vmem:[#allocation4 + $0x230] sm:$0xff]
  %v3112 = vld [vmem:[#allocation4 + $0x238] sm:$0xff]
  %v3113 = vld [vmem:[%s10] sm:$0xff]
  %v3114 = vld [vmem:[%s10 + $0x8] sm:$0xf]
  %3116 = vset.pattern.permute.xlu0 0
  %3117 = vperm.xlu0 %3116, %v3113
  %v3118 = vpop.permute.xlu0 %3117
  %3121 = vset.pattern.permute.xlu0 0
  %3122 = vperm.xlu0 %3121, %v3114
  %v3123 = vpop.permute.xlu0 %3122
  %vm3125 = vcmask 130048
  %v3127 = vsel %vm3125, %v3095, 0
  %v3130 = vsel %vm3125, %v3096, 0
  %3132 = vmatpush.msra.mxu0 0.0
  %3133 = vmatpush.msra.mxu0 0.0
  %3134 = vmatpush.msra.mxu0 0.0
  %3135 = vmatpush.msra.mxu0 0.0
  %3136 = vmatpush.msra.mxu0 0.0
  %3137 = vmatpush.msra.mxu0 0.0
  %3138 = vmatpush.msra.mxu0 0.0
  %3139 = vmatpush.msra.mxu0 0.0
  %3140 = vmatpush.msra.mxu0 0.0
  %3141 = vmatpush.msra.mxu0 0.0
  %3142 = vmatpush.msra.mxu0 0.0
  %3143 = vmatpush.msra.mxu0 0.0
  %3144 = vmatpush.msra.mxu0 0.0
  %3145 = vmatpush.msra.mxu0 0.0
  %3146 = vmatpush.msra.mxu0 %v3105
  %3147 = vmatpush.msra.mxu0 %v3097
  %3148 = vmatmul.f32.gmra.mxu0 %v3127
  %v3149 = vpop.f32.mrf.mxu0
  %v3150 = vadd.f32 %v3118, %v3149
  %3151 = vmatmul.f32.gmra.mxu0 %v3130
  %v3152 = vpop.f32.mrf.mxu0
  %v3153 = vadd.f32 %v3123, %v3152
  %3154 = vdwg.mxu0
  %3155 = vmatpush.msra.mxu0 0.0
  %3156 = vmatpush.msra.mxu0 0.0
  %3157 = vmatpush.msra.mxu0 0.0
  %3158 = vmatpush.msra.mxu0 0.0
  %3159 = vmatpush.msra.mxu0 0.0
  %3160 = vmatpush.msra.mxu0 0.0
  %3161 = vmatpush.msra.mxu0 0.0
  %3162 = vmatpush.msra.mxu0 0.0
  %3163 = vmatpush.msra.mxu0 0.0
  %3164 = vmatpush.msra.mxu0 0.0
  %3165 = vmatpush.msra.mxu0 0.0
  %3166 = vmatpush.msra.mxu0 0.0
  %3167 = vmatpush.msra.mxu0 0.0
  %3168 = vmatpush.msra.mxu0 0.0
  %3169 = vmatpush.msra.mxu0 %v3106
  %3170 = vmatpush.msra.mxu0 %v3098
  %3171 = vmatmul.f32.gmra.mxu0 %v3127
  %v3172 = vpop.f32.mrf.mxu0
  %v3173 = vadd.f32 %v3118, %v3172
  %3174 = vmatmul.f32.gmra.mxu0 %v3130
  %v3175 = vpop.f32.mrf.mxu0
  %v3176 = vadd.f32 %v3123, %v3175
  %3177 = vdwg.mxu0
  %3178 = vmatpush.msra.mxu0 0.0
  %3179 = vmatpush.msra.mxu0 0.0
  %3180 = vmatpush.msra.mxu0 0.0
  %3181 = vmatpush.msra.mxu0 0.0
  %3182 = vmatpush.msra.mxu0 0.0
  %3183 = vmatpush.msra.mxu0 0.0
  %3184 = vmatpush.msra.mxu0 0.0
  %3185 = vmatpush.msra.mxu0 0.0
  %3186 = vmatpush.msra.mxu0 0.0
  %3187 = vmatpush.msra.mxu0 0.0
  %3188 = vmatpush.msra.mxu0 0.0
  %3189 = vmatpush.msra.mxu0 0.0
  %3190 = vmatpush.msra.mxu0 0.0
  %3191 = vmatpush.msra.mxu0 0.0
  %3192 = vmatpush.msra.mxu0 %v3107
  %3193 = vmatpush.msra.mxu0 %v3099
  %3194 = vmatmul.f32.gmra.mxu0 %v3127
  %v3195 = vpop.f32.mrf.mxu0
  %v3196 = vadd.f32 %v3118, %v3195
  %3197 = vmatmul.f32.gmra.mxu0 %v3130
  %v3198 = vpop.f32.mrf.mxu0
  %v3199 = vadd.f32 %v3123, %v3198
  %3200 = vdwg.mxu0
  %3201 = vmatpush.msra.mxu0 0.0
  %3202 = vmatpush.msra.mxu0 0.0
  %3203 = vmatpush.msra.mxu0 0.0
  %3204 = vmatpush.msra.mxu0 0.0
  %3205 = vmatpush.msra.mxu0 0.0
  %3206 = vmatpush.msra.mxu0 0.0
  %3207 = vmatpush.msra.mxu0 0.0
  %3208 = vmatpush.msra.mxu0 0.0
  %3209 = vmatpush.msra.mxu0 0.0
  %3210 = vmatpush.msra.mxu0 0.0
  %3211 = vmatpush.msra.mxu0 0.0
  %3212 = vmatpush.msra.mxu0 0.0
  %3213 = vmatpush.msra.mxu0 0.0
  %3214 = vmatpush.msra.mxu0 0.0
  %3215 = vmatpush.msra.mxu0 %v3108
  %3216 = vmatpush.msra.mxu0 %v3100
  %3217 = vmatmul.f32.gmra.mxu0 %v3127
  %v3218 = vpop.f32.mrf.mxu0
  %v3219 = vadd.f32 %v3118, %v3218
  %3220 = vmatmul.f32.gmra.mxu0 %v3130
  %v3221 = vpop.f32.mrf.mxu0
  %v3222 = vadd.f32 %v3123, %v3221
  %3223 = vdwg.mxu0
  %3224 = vmatpush.msra.mxu0 0.0
  %3225 = vmatpush.msra.mxu0 0.0
  %3226 = vmatpush.msra.mxu0 0.0
  %3227 = vmatpush.msra.mxu0 0.0
  %3228 = vmatpush.msra.mxu0 0.0
  %3229 = vmatpush.msra.mxu0 0.0
  %3230 = vmatpush.msra.mxu0 0.0
  %3231 = vmatpush.msra.mxu0 0.0
  %3232 = vmatpush.msra.mxu0 0.0
  %3233 = vmatpush.msra.mxu0 0.0
  %3234 = vmatpush.msra.mxu0 0.0
  %3235 = vmatpush.msra.mxu0 0.0
  %3236 = vmatpush.msra.mxu0 0.0
  %3237 = vmatpush.msra.mxu0 0.0
  %3238 = vmatpush.msra.mxu0 %v3109
  %3239 = vmatpush.msra.mxu0 %v3101
  %3240 = vmatmul.f32.gmra.mxu0 %v3127
  %v3241 = vpop.f32.mrf.mxu0
  %v3242 = vadd.f32 %v3118, %v3241
  %3243 = vmatmul.f32.gmra.mxu0 %v3130
  %v3244 = vpop.f32.mrf.mxu0
  %v3245 = vadd.f32 %v3123, %v3244
  %3246 = vdwg.mxu0
  %3247 = vmatpush.msra.mxu0 0.0
  %3248 = vmatpush.msra.mxu0 0.0
  %3249 = vmatpush.msra.mxu0 0.0
  %3250 = vmatpush.msra.mxu0 0.0
  %3251 = vmatpush.msra.mxu0 0.0
  %3252 = vmatpush.msra.mxu0 0.0
  %3253 = vmatpush.msra.mxu0 0.0
  %3254 = vmatpush.msra.mxu0 0.0
  %3255 = vmatpush.msra.mxu0 0.0
  %3256 = vmatpush.msra.mxu0 0.0
  %3257 = vmatpush.msra.mxu0 0.0
  %3258 = vmatpush.msra.mxu0 0.0
  %3259 = vmatpush.msra.mxu0 0.0
  %3260 = vmatpush.msra.mxu0 0.0
  %3261 = vmatpush.msra.mxu0 %v3110
  %3262 = vmatpush.msra.mxu0 %v3102
  %3263 = vmatmul.f32.gmra.mxu0 %v3127
  %v3264 = vpop.f32.mrf.mxu0
  %v3265 = vadd.f32 %v3118, %v3264
  %3266 = vmatmul.f32.gmra.mxu0 %v3130
  %v3267 = vpop.f32.mrf.mxu0
  %v3268 = vadd.f32 %v3123, %v3267
  %3269 = vdwg.mxu0
  %3270 = vmatpush.msra.mxu0 0.0
  %3271 = vmatpush.msra.mxu0 0.0
  %3272 = vmatpush.msra.mxu0 0.0
  %3273 = vmatpush.msra.mxu0 0.0
  %3274 = vmatpush.msra.mxu0 0.0
  %3275 = vmatpush.msra.mxu0 0.0
  %3276 = vmatpush.msra.mxu0 0.0
  %3277 = vmatpush.msra.mxu0 0.0
  %3278 = vmatpush.msra.mxu0 0.0
  %3279 = vmatpush.msra.mxu0 0.0
  %3280 = vmatpush.msra.mxu0 0.0
  %3281 = vmatpush.msra.mxu0 0.0
  %3282 = vmatpush.msra.mxu0 0.0
  %3283 = vmatpush.msra.mxu0 0.0
  %3284 = vmatpush.msra.mxu0 %v3111
  %3285 = vmatpush.msra.mxu0 %v3103
  %3286 = vmatmul.f32.gmra.mxu0 %v3127
  %v3287 = vpop.f32.mrf.mxu0
  %v3288 = vadd.f32 %v3118, %v3287
  %3289 = vmatmul.f32.gmra.mxu0 %v3130
  %v3290 = vpop.f32.mrf.mxu0
  %v3291 = vadd.f32 %v3123, %v3290
  %3292 = vdwg.mxu0
  %3293 = vmatpush.msra.mxu0 0.0
  %3294 = vmatpush.msra.mxu0 0.0
  %3295 = vmatpush.msra.mxu0 0.0
  %3296 = vmatpush.msra.mxu0 0.0
  %3297 = vmatpush.msra.mxu0 0.0
  %3298 = vmatpush.msra.mxu0 0.0
  %3299 = vmatpush.msra.mxu0 0.0
  %3300 = vmatpush.msra.mxu0 0.0
  %3301 = vmatpush.msra.mxu0 0.0
  %3302 = vmatpush.msra.mxu0 0.0
  %3303 = vmatpush.msra.mxu0 0.0
  %3304 = vmatpush.msra.mxu0 0.0
  %3305 = vmatpush.msra.mxu0 0.0
  %3306 = vmatpush.msra.mxu0 0.0
  %3307 = vmatpush.msra.mxu0 %v3112
  %3308 = vmatpush.msra.mxu0 %v3104
  %3309 = vmatmul.f32.gmra.mxu0 %v3127
  %v3310 = vpop.f32.mrf.mxu0
  %v3311 = vadd.f32 %v3118, %v3310
  %3312 = vmatmul.f32.gmra.mxu0 %v3130
  %v3313 = vpop.f32.mrf.mxu0
  %v3314 = vadd.f32 %v3123, %v3313
  %3315 = vdwg.mxu0
  %v3316 = vmax.f32 %v3150, 0.0
  %v3317 = vmax.f32 %v3173, 0.0
  %v3318 = vmax.f32 %v3196, 0.0
  %v3319 = vmax.f32 %v3219, 0.0
  %v3320 = vmax.f32 %v3242, 0.0
  %v3321 = vmax.f32 %v3265, 0.0
  %v3322 = vmax.f32 %v3288, 0.0
  %v3323 = vmax.f32 %v3311, 0.0
  %v3324 = vmax.f32 %v3153, 0.0
  %v3325 = vmax.f32 %v3176, 0.0
  %v3326 = vmax.f32 %v3199, 0.0
  %v3327 = vmax.f32 %v3222, 0.0
  %v3328 = vmax.f32 %v3245, 0.0
  %v3329 = vmax.f32 %v3268, 0.0
  %v3330 = vmax.f32 %v3291, 0.0
  %v3331 = vmax.f32 %v3314, 0.0
  %3332 = vst [vmem:[%s11] sm:$0xff] %v3316
  %3333 = vst [vmem:[%s11 + $0x8] sm:$0xff] %v3317
  %3334 = vst [vmem:[%s11 + $0x10] sm:$0xff] %v3318
  %3335 = vst [vmem:[%s11 + $0x18] sm:$0xff] %v3319
  %3336 = vst [vmem:[%s11 + $0x20] sm:$0xff] %v3320
  %3337 = vst [vmem:[%s11 + $0x28] sm:$0xff] %v3321
  %3338 = vst [vmem:[%s11 + $0x30] sm:$0xff] %v3322
  %3339 = vst [vmem:[%s11 + $0x38] sm:$0xff] %v3323
  %3340 = vst [vmem:[%s11 + $0x200] sm:$0xf] %v3324
  %3341 = vst [vmem:[%s11 + $0x208] sm:$0xf] %v3325
  %3342 = vst [vmem:[%s11 + $0x210] sm:$0xf] %v3326
  %3343 = vst [vmem:[%s11 + $0x218] sm:$0xf] %v3327
  %3344 = vst [vmem:[%s11 + $0x220] sm:$0xf] %v3328
  %3345 = vst [vmem:[%s11 + $0x228] sm:$0xf] %v3329
  %3346 = vst [vmem:[%s11 + $0x230] sm:$0xf] %v3330
  %3347 = vst [vmem:[%s11 + $0x238] sm:$0xf] %v3331
  %v3348 = vld [vmem:[%s9] sm:$0xff]
  %v3349 = vld [vmem:[%s9 + $0x8] sm:$0xf]
  %v3350 = vld [vmem:[#allocation4 + $0x40] sm:$0xff]
  %v3351 = vld [vmem:[#allocation4 + $0x48] sm:$0xff]
  %v3352 = vld [vmem:[#allocation4 + $0x50] sm:$0xff]
  %v3353 = vld [vmem:[#allocation4 + $0x58] sm:$0xff]
  %v3354 = vld [vmem:[#allocation4 + $0x60] sm:$0xff]
  %v3355 = vld [vmem:[#allocation4 + $0x68] sm:$0xff]
  %v3356 = vld [vmem:[#allocation4 + $0x70] sm:$0xff]
  %v3357 = vld [vmem:[#allocation4 + $0x78] sm:$0xff]
  %v3358 = vld [vmem:[#allocation4 + $0x240] sm:$0xff]
  %v3359 = vld [vmem:[#allocation4 + $0x248] sm:$0xff]
  %v3360 = vld [vmem:[#allocation4 + $0x250] sm:$0xff]
  %v3361 = vld [vmem:[#allocation4 + $0x258] sm:$0xff]
  %v3362 = vld [vmem:[#allocation4 + $0x260] sm:$0xff]
  %v3363 = vld [vmem:[#allocation4 + $0x268] sm:$0xff]
  %v3364 = vld [vmem:[#allocation4 + $0x270] sm:$0xff]
  %v3365 = vld [vmem:[#allocation4 + $0x278] sm:$0xff]
  %v3366 = vld [vmem:[%s10] sm:$0xff]
  %v3367 = vld [vmem:[%s10 + $0x8] sm:$0xf]
  %3369 = vset.pattern.permute.xlu0 0
  %3370 = vperm.xlu0 %3369, %v3366
  %v3371 = vpop.permute.xlu0 %3370
  %3374 = vset.pattern.permute.xlu0 0
  %3375 = vperm.xlu0 %3374, %v3367
  %v3376 = vpop.permute.xlu0 %3375
  %v3379 = vsel %vm3125, %v3348, 0
  %v3382 = vsel %vm3125, %v3349, 0
  %3384 = vmatpush.msra.mxu0 0.0
  %3385 = vmatpush.msra.mxu0 0.0
  %3386 = vmatpush.msra.mxu0 0.0
  %3387 = vmatpush.msra.mxu0 0.0
  %3388 = vmatpush.msra.mxu0 0.0
  %3389 = vmatpush.msra.mxu0 0.0
  %3390 = vmatpush.msra.mxu0 0.0
  %3391 = vmatpush.msra.mxu0 0.0
  %3392 = vmatpush.msra.mxu0 0.0
  %3393 = vmatpush.msra.mxu0 0.0
  %3394 = vmatpush.msra.mxu0 0.0
  %3395 = vmatpush.msra.mxu0 0.0
  %3396 = vmatpush.msra.mxu0 0.0
  %3397 = vmatpush.msra.mxu0 0.0
  %3398 = vmatpush.msra.mxu0 %v3358
  %3399 = vmatpush.msra.mxu0 %v3350
  %3400 = vmatmul.f32.gmra.mxu0 %v3379
  %v3401 = vpop.f32.mrf.mxu0
  %v3402 = vadd.f32 %v3371, %v3401
  %3403 = vmatmul.f32.gmra.mxu0 %v3382
  %v3404 = vpop.f32.mrf.mxu0
  %v3405 = vadd.f32 %v3376, %v3404
  %3406 = vdwg.mxu0
  %3407 = vmatpush.msra.mxu0 0.0
  %3408 = vmatpush.msra.mxu0 0.0
  %3409 = vmatpush.msra.mxu0 0.0
  %3410 = vmatpush.msra.mxu0 0.0
  %3411 = vmatpush.msra.mxu0 0.0
  %3412 = vmatpush.msra.mxu0 0.0
  %3413 = vmatpush.msra.mxu0 0.0
  %3414 = vmatpush.msra.mxu0 0.0
  %3415 = vmatpush.msra.mxu0 0.0
  %3416 = vmatpush.msra.mxu0 0.0
  %3417 = vmatpush.msra.mxu0 0.0
  %3418 = vmatpush.msra.mxu0 0.0
  %3419 = vmatpush.msra.mxu0 0.0
  %3420 = vmatpush.msra.mxu0 0.0
  %3421 = vmatpush.msra.mxu0 %v3359
  %3422 = vmatpush.msra.mxu0 %v3351
  %3423 = vmatmul.f32.gmra.mxu0 %v3379
  %v3424 = vpop.f32.mrf.mxu0
  %v3425 = vadd.f32 %v3371, %v3424
  %3426 = vmatmul.f32.gmra.mxu0 %v3382
  %v3427 = vpop.f32.mrf.mxu0
  %v3428 = vadd.f32 %v3376, %v3427
  %3429 = vdwg.mxu0
  %3430 = vmatpush.msra.mxu0 0.0
  %3431 = vmatpush.msra.mxu0 0.0
  %3432 = vmatpush.msra.mxu0 0.0
  %3433 = vmatpush.msra.mxu0 0.0
  %3434 = vmatpush.msra.mxu0 0.0
  %3435 = vmatpush.msra.mxu0 0.0
  %3436 = vmatpush.msra.mxu0 0.0
  %3437 = vmatpush.msra.mxu0 0.0
  %3438 = vmatpush.msra.mxu0 0.0
  %3439 = vmatpush.msra.mxu0 0.0
  %3440 = vmatpush.msra.mxu0 0.0
  %3441 = vmatpush.msra.mxu0 0.0
  %3442 = vmatpush.msra.mxu0 0.0
  %3443 = vmatpush.msra.mxu0 0.0
  %3444 = vmatpush.msra.mxu0 %v3360
  %3445 = vmatpush.msra.mxu0 %v3352
  %3446 = vmatmul.f32.gmra.mxu0 %v3379
  %v3447 = vpop.f32.mrf.mxu0
  %v3448 = vadd.f32 %v3371, %v3447
  %3449 = vmatmul.f32.gmra.mxu0 %v3382
  %v3450 = vpop.f32.mrf.mxu0
  %v3451 = vadd.f32 %v3376, %v3450
  %3452 = vdwg.mxu0
  %3453 = vmatpush.msra.mxu0 0.0
  %3454 = vmatpush.msra.mxu0 0.0
  %3455 = vmatpush.msra.mxu0 0.0
  %3456 = vmatpush.msra.mxu0 0.0
  %3457 = vmatpush.msra.mxu0 0.0
  %3458 = vmatpush.msra.mxu0 0.0
  %3459 = vmatpush.msra.mxu0 0.0
  %3460 = vmatpush.msra.mxu0 0.0
  %3461 = vmatpush.msra.mxu0 0.0
  %3462 = vmatpush.msra.mxu0 0.0
  %3463 = vmatpush.msra.mxu0 0.0
  %3464 = vmatpush.msra.mxu0 0.0
  %3465 = vmatpush.msra.mxu0 0.0
  %3466 = vmatpush.msra.mxu0 0.0
  %3467 = vmatpush.msra.mxu0 %v3361
  %3468 = vmatpush.msra.mxu0 %v3353
  %3469 = vmatmul.f32.gmra.mxu0 %v3379
  %v3470 = vpop.f32.mrf.mxu0
  %v3471 = vadd.f32 %v3371, %v3470
  %3472 = vmatmul.f32.gmra.mxu0 %v3382
  %v3473 = vpop.f32.mrf.mxu0
  %v3474 = vadd.f32 %v3376, %v3473
  %3475 = vdwg.mxu0
  %3476 = vmatpush.msra.mxu0 0.0
  %3477 = vmatpush.msra.mxu0 0.0
  %3478 = vmatpush.msra.mxu0 0.0
  %3479 = vmatpush.msra.mxu0 0.0
  %3480 = vmatpush.msra.mxu0 0.0
  %3481 = vmatpush.msra.mxu0 0.0
  %3482 = vmatpush.msra.mxu0 0.0
  %3483 = vmatpush.msra.mxu0 0.0
  %3484 = vmatpush.msra.mxu0 0.0
  %3485 = vmatpush.msra.mxu0 0.0
  %3486 = vmatpush.msra.mxu0 0.0
  %3487 = vmatpush.msra.mxu0 0.0
  %3488 = vmatpush.msra.mxu0 0.0
  %3489 = vmatpush.msra.mxu0 0.0
  %3490 = vmatpush.msra.mxu0 %v3362
  %3491 = vmatpush.msra.mxu0 %v3354
  %3492 = vmatmul.f32.gmra.mxu0 %v3379
  %v3493 = vpop.f32.mrf.mxu0
  %v3494 = vadd.f32 %v3371, %v3493
  %3495 = vmatmul.f32.gmra.mxu0 %v3382
  %v3496 = vpop.f32.mrf.mxu0
  %v3497 = vadd.f32 %v3376, %v3496
  %3498 = vdwg.mxu0
  %3499 = vmatpush.msra.mxu0 0.0
  %3500 = vmatpush.msra.mxu0 0.0
  %3501 = vmatpush.msra.mxu0 0.0
  %3502 = vmatpush.msra.mxu0 0.0
  %3503 = vmatpush.msra.mxu0 0.0
  %3504 = vmatpush.msra.mxu0 0.0
  %3505 = vmatpush.msra.mxu0 0.0
  %3506 = vmatpush.msra.mxu0 0.0
  %3507 = vmatpush.msra.mxu0 0.0
  %3508 = vmatpush.msra.mxu0 0.0
  %3509 = vmatpush.msra.mxu0 0.0
  %3510 = vmatpush.msra.mxu0 0.0
  %3511 = vmatpush.msra.mxu0 0.0
  %3512 = vmatpush.msra.mxu0 0.0
  %3513 = vmatpush.msra.mxu0 %v3363
  %3514 = vmatpush.msra.mxu0 %v3355
  %3515 = vmatmul.f32.gmra.mxu0 %v3379
  %v3516 = vpop.f32.mrf.mxu0
  %v3517 = vadd.f32 %v3371, %v3516
  %3518 = vmatmul.f32.gmra.mxu0 %v3382
  %v3519 = vpop.f32.mrf.mxu0
  %v3520 = vadd.f32 %v3376, %v3519
  %3521 = vdwg.mxu0
  %3522 = vmatpush.msra.mxu0 0.0
  %3523 = vmatpush.msra.mxu0 0.0
  %3524 = vmatpush.msra.mxu0 0.0
  %3525 = vmatpush.msra.mxu0 0.0
  %3526 = vmatpush.msra.mxu0 0.0
  %3527 = vmatpush.msra.mxu0 0.0
  %3528 = vmatpush.msra.mxu0 0.0
  %3529 = vmatpush.msra.mxu0 0.0
  %3530 = vmatpush.msra.mxu0 0.0
  %3531 = vmatpush.msra.mxu0 0.0
  %3532 = vmatpush.msra.mxu0 0.0
  %3533 = vmatpush.msra.mxu0 0.0
  %3534 = vmatpush.msra.mxu0 0.0
  %3535 = vmatpush.msra.mxu0 0.0
  %3536 = vmatpush.msra.mxu0 %v3364
  %3537 = vmatpush.msra.mxu0 %v3356
  %3538 = vmatmul.f32.gmra.mxu0 %v3379
  %v3539 = vpop.f32.mrf.mxu0
  %v3540 = vadd.f32 %v3371, %v3539
  %3541 = vmatmul.f32.gmra.mxu0 %v3382
  %v3542 = vpop.f32.mrf.mxu0
  %v3543 = vadd.f32 %v3376, %v3542
  %3544 = vdwg.mxu0
  %3545 = vmatpush.msra.mxu0 0.0
  %3546 = vmatpush.msra.mxu0 0.0
  %3547 = vmatpush.msra.mxu0 0.0
  %3548 = vmatpush.msra.mxu0 0.0
  %3549 = vmatpush.msra.mxu0 0.0
  %3550 = vmatpush.msra.mxu0 0.0
  %3551 = vmatpush.msra.mxu0 0.0
  %3552 = vmatpush.msra.mxu0 0.0
  %3553 = vmatpush.msra.mxu0 0.0
  %3554 = vmatpush.msra.mxu0 0.0
  %3555 = vmatpush.msra.mxu0 0.0
  %3556 = vmatpush.msra.mxu0 0.0
  %3557 = vmatpush.msra.mxu0 0.0
  %3558 = vmatpush.msra.mxu0 0.0
  %3559 = vmatpush.msra.mxu0 %v3365
  %3560 = vmatpush.msra.mxu0 %v3357
  %3561 = vmatmul.f32.gmra.mxu0 %v3379
  %v3562 = vpop.f32.mrf.mxu0
  %v3563 = vadd.f32 %v3371, %v3562
  %3564 = vmatmul.f32.gmra.mxu0 %v3382
  %v3565 = vpop.f32.mrf.mxu0
  %v3566 = vadd.f32 %v3376, %v3565
  %3567 = vdwg.mxu0
  %v3568 = vmax.f32 %v3402, 0.0
  %v3569 = vmax.f32 %v3425, 0.0
  %v3570 = vmax.f32 %v3448, 0.0
  %v3571 = vmax.f32 %v3471, 0.0
  %v3572 = vmax.f32 %v3494, 0.0
  %v3573 = vmax.f32 %v3517, 0.0
  %v3574 = vmax.f32 %v3540, 0.0
  %v3575 = vmax.f32 %v3563, 0.0
  %v3576 = vmax.f32 %v3405, 0.0
  %v3577 = vmax.f32 %v3428, 0.0
  %v3578 = vmax.f32 %v3451, 0.0
  %v3579 = vmax.f32 %v3474, 0.0
  %v3580 = vmax.f32 %v3497, 0.0
  %v3581 = vmax.f32 %v3520, 0.0
  %v3582 = vmax.f32 %v3543, 0.0
  %v3583 = vmax.f32 %v3566, 0.0
  %3584 = vst [vmem:[%s11 + $0x40] sm:$0xff] %v3568
  %3585 = vst [vmem:[%s11 + $0x48] sm:$0xff] %v3569
  %3586 = vst [vmem:[%s11 + $0x50] sm:$0xff] %v3570
  %3587 = vst [vmem:[%s11 + $0x58] sm:$0xff] %v3571
  %3588 = vst [vmem:[%s11 + $0x60] sm:$0xff] %v3572
  %3589 = vst [vmem:[%s11 + $0x68] sm:$0xff] %v3573
  %3590 = vst [vmem:[%s11 + $0x70] sm:$0xff] %v3574
  %3591 = vst [vmem:[%s11 + $0x78] sm:$0xff] %v3575
  %3592 = vst [vmem:[%s11 + $0x240] sm:$0xf] %v3576
  %3593 = vst [vmem:[%s11 + $0x248] sm:$0xf] %v3577
  %3594 = vst [vmem:[%s11 + $0x250] sm:$0xf] %v3578
  %3595 = vst [vmem:[%s11 + $0x258] sm:$0xf] %v3579
  %3596 = vst [vmem:[%s11 + $0x260] sm:$0xf] %v3580
  %3597 = vst [vmem:[%s11 + $0x268] sm:$0xf] %v3581
  %3598 = vst [vmem:[%s11 + $0x270] sm:$0xf] %v3582
  %3599 = vst [vmem:[%s11 + $0x278] sm:$0xf] %v3583
  %v3600 = vld [vmem:[%s9] sm:$0xff]
  %v3601 = vld [vmem:[%s9 + $0x8] sm:$0xf]
  %v3602 = vld [vmem:[#allocation4 + $0x80] sm:$0xff]
  %v3603 = vld [vmem:[#allocation4 + $0x88] sm:$0xff]
  %v3604 = vld [vmem:[#allocation4 + $0x90] sm:$0xff]
  %v3605 = vld [vmem:[#allocation4 + $0x98] sm:$0xff]
  %v3606 = vld [vmem:[#allocation4 + $0xa0] sm:$0xff]
  %v3607 = vld [vmem:[#allocation4 + $0xa8] sm:$0xff]
  %v3608 = vld [vmem:[#allocation4 + $0xb0] sm:$0xff]
  %v3609 = vld [vmem:[#allocation4 + $0xb8] sm:$0xff]
  %v3610 = vld [vmem:[#allocation4 + $0x280] sm:$0xff]
  %v3611 = vld [vmem:[#allocation4 + $0x288] sm:$0xff]
  %v3612 = vld [vmem:[#allocation4 + $0x290] sm:$0xff]
  %v3613 = vld [vmem:[#allocation4 + $0x298] sm:$0xff]
  %v3614 = vld [vmem:[#allocation4 + $0x2a0] sm:$0xff]
  %v3615 = vld [vmem:[#allocation4 + $0x2a8] sm:$0xff]
  %v3616 = vld [vmem:[#allocation4 + $0x2b0] sm:$0xff]
  %v3617 = vld [vmem:[#allocation4 + $0x2b8] sm:$0xff]
  %v3618 = vld [vmem:[%s10] sm:$0xff]
  %v3619 = vld [vmem:[%s10 + $0x8] sm:$0xf]
  %3621 = vset.pattern.permute.xlu0 0
  %3622 = vperm.xlu0 %3621, %v3618
  %v3623 = vpop.permute.xlu0 %3622
  %3626 = vset.pattern.permute.xlu0 0
  %3627 = vperm.xlu0 %3626, %v3619
  %v3628 = vpop.permute.xlu0 %3627
  %v3631 = vsel %vm3125, %v3600, 0
  %v3634 = vsel %vm3125, %v3601, 0
  %3636 = vmatpush.msra.mxu0 0.0
  %3637 = vmatpush.msra.mxu0 0.0
  %3638 = vmatpush.msra.mxu0 0.0
  %3639 = vmatpush.msra.mxu0 0.0
  %3640 = vmatpush.msra.mxu0 0.0
  %3641 = vmatpush.msra.mxu0 0.0
  %3642 = vmatpush.msra.mxu0 0.0
  %3643 = vmatpush.msra.mxu0 0.0
  %3644 = vmatpush.msra.mxu0 0.0
  %3645 = vmatpush.msra.mxu0 0.0
  %3646 = vmatpush.msra.mxu0 0.0
  %3647 = vmatpush.msra.mxu0 0.0
  %3648 = vmatpush.msra.mxu0 0.0
  %3649 = vmatpush.msra.mxu0 0.0
  %3650 = vmatpush.msra.mxu0 %v3610
  %3651 = vmatpush.msra.mxu0 %v3602
  %3652 = vmatmul.f32.gmra.mxu0 %v3631
  %v3653 = vpop.f32.mrf.mxu0
  %v3654 = vadd.f32 %v3623, %v3653
  %3655 = vmatmul.f32.gmra.mxu0 %v3634
  %v3656 = vpop.f32.mrf.mxu0
  %v3657 = vadd.f32 %v3628, %v3656
  %3658 = vdwg.mxu0
  %3659 = vmatpush.msra.mxu0 0.0
  %3660 = vmatpush.msra.mxu0 0.0
  %3661 = vmatpush.msra.mxu0 0.0
  %3662 = vmatpush.msra.mxu0 0.0
  %3663 = vmatpush.msra.mxu0 0.0
  %3664 = vmatpush.msra.mxu0 0.0
  %3665 = vmatpush.msra.mxu0 0.0
  %3666 = vmatpush.msra.mxu0 0.0
  %3667 = vmatpush.msra.mxu0 0.0
  %3668 = vmatpush.msra.mxu0 0.0
  %3669 = vmatpush.msra.mxu0 0.0
  %3670 = vmatpush.msra.mxu0 0.0
  %3671 = vmatpush.msra.mxu0 0.0
  %3672 = vmatpush.msra.mxu0 0.0
  %3673 = vmatpush.msra.mxu0 %v3611
  %3674 = vmatpush.msra.mxu0 %v3603
  %3675 = vmatmul.f32.gmra.mxu0 %v3631
  %v3676 = vpop.f32.mrf.mxu0
  %v3677 = vadd.f32 %v3623, %v3676
  %3678 = vmatmul.f32.gmra.mxu0 %v3634
  %v3679 = vpop.f32.mrf.mxu0
  %v3680 = vadd.f32 %v3628, %v3679
  %3681 = vdwg.mxu0
  %3682 = vmatpush.msra.mxu0 0.0
  %3683 = vmatpush.msra.mxu0 0.0
  %3684 = vmatpush.msra.mxu0 0.0
  %3685 = vmatpush.msra.mxu0 0.0
  %3686 = vmatpush.msra.mxu0 0.0
  %3687 = vmatpush.msra.mxu0 0.0
  %3688 = vmatpush.msra.mxu0 0.0
  %3689 = vmatpush.msra.mxu0 0.0
  %3690 = vmatpush.msra.mxu0 0.0
  %3691 = vmatpush.msra.mxu0 0.0
  %3692 = vmatpush.msra.mxu0 0.0
  %3693 = vmatpush.msra.mxu0 0.0
  %3694 = vmatpush.msra.mxu0 0.0
  %3695 = vmatpush.msra.mxu0 0.0
  %3696 = vmatpush.msra.mxu0 %v3612
  %3697 = vmatpush.msra.mxu0 %v3604
  %3698 = vmatmul.f32.gmra.mxu0 %v3631
  %v3699 = vpop.f32.mrf.mxu0
  %v3700 = vadd.f32 %v3623, %v3699
  %3701 = vmatmul.f32.gmra.mxu0 %v3634
  %v3702 = vpop.f32.mrf.mxu0
  %v3703 = vadd.f32 %v3628, %v3702
  %3704 = vdwg.mxu0
  %3705 = vmatpush.msra.mxu0 0.0
  %3706 = vmatpush.msra.mxu0 0.0
  %3707 = vmatpush.msra.mxu0 0.0
  %3708 = vmatpush.msra.mxu0 0.0
  %3709 = vmatpush.msra.mxu0 0.0
  %3710 = vmatpush.msra.mxu0 0.0
  %3711 = vmatpush.msra.mxu0 0.0
  %3712 = vmatpush.msra.mxu0 0.0
  %3713 = vmatpush.msra.mxu0 0.0
  %3714 = vmatpush.msra.mxu0 0.0
  %3715 = vmatpush.msra.mxu0 0.0
  %3716 = vmatpush.msra.mxu0 0.0
  %3717 = vmatpush.msra.mxu0 0.0
  %3718 = vmatpush.msra.mxu0 0.0
  %3719 = vmatpush.msra.mxu0 %v3613
  %3720 = vmatpush.msra.mxu0 %v3605
  %3721 = vmatmul.f32.gmra.mxu0 %v3631
  %v3722 = vpop.f32.mrf.mxu0
  %v3723 = vadd.f32 %v3623, %v3722
  %3724 = vmatmul.f32.gmra.mxu0 %v3634
  %v3725 = vpop.f32.mrf.mxu0
  %v3726 = vadd.f32 %v3628, %v3725
  %3727 = vdwg.mxu0
  %3728 = vmatpush.msra.mxu0 0.0
  %3729 = vmatpush.msra.mxu0 0.0
  %3730 = vmatpush.msra.mxu0 0.0
  %3731 = vmatpush.msra.mxu0 0.0
  %3732 = vmatpush.msra.mxu0 0.0
  %3733 = vmatpush.msra.mxu0 0.0
  %3734 = vmatpush.msra.mxu0 0.0
  %3735 = vmatpush.msra.mxu0 0.0
  %3736 = vmatpush.msra.mxu0 0.0
  %3737 = vmatpush.msra.mxu0 0.0
  %3738 = vmatpush.msra.mxu0 0.0
  %3739 = vmatpush.msra.mxu0 0.0
  %3740 = vmatpush.msra.mxu0 0.0
  %3741 = vmatpush.msra.mxu0 0.0
  %3742 = vmatpush.msra.mxu0 %v3614
  %3743 = vmatpush.msra.mxu0 %v3606
  %3744 = vmatmul.f32.gmra.mxu0 %v3631
  %v3745 = vpop.f32.mrf.mxu0
  %v3746 = vadd.f32 %v3623, %v3745
  %3747 = vmatmul.f32.gmra.mxu0 %v3634
  %v3748 = vpop.f32.mrf.mxu0
  %v3749 = vadd.f32 %v3628, %v3748
  %3750 = vdwg.mxu0
  %3751 = vmatpush.msra.mxu0 0.0
  %3752 = vmatpush.msra.mxu0 0.0
  %3753 = vmatpush.msra.mxu0 0.0
  %3754 = vmatpush.msra.mxu0 0.0
  %3755 = vmatpush.msra.mxu0 0.0
  %3756 = vmatpush.msra.mxu0 0.0
  %3757 = vmatpush.msra.mxu0 0.0
  %3758 = vmatpush.msra.mxu0 0.0
  %3759 = vmatpush.msra.mxu0 0.0
  %3760 = vmatpush.msra.mxu0 0.0
  %3761 = vmatpush.msra.mxu0 0.0
  %3762 = vmatpush.msra.mxu0 0.0
  %3763 = vmatpush.msra.mxu0 0.0
  %3764 = vmatpush.msra.mxu0 0.0
  %3765 = vmatpush.msra.mxu0 %v3615
  %3766 = vmatpush.msra.mxu0 %v3607
  %3767 = vmatmul.f32.gmra.mxu0 %v3631
  %v3768 = vpop.f32.mrf.mxu0
  %v3769 = vadd.f32 %v3623, %v3768
  %3770 = vmatmul.f32.gmra.mxu0 %v3634
  %v3771 = vpop.f32.mrf.mxu0
  %v3772 = vadd.f32 %v3628, %v3771
  %3773 = vdwg.mxu0
  %3774 = vmatpush.msra.mxu0 0.0
  %3775 = vmatpush.msra.mxu0 0.0
  %3776 = vmatpush.msra.mxu0 0.0
  %3777 = vmatpush.msra.mxu0 0.0
  %3778 = vmatpush.msra.mxu0 0.0
  %3779 = vmatpush.msra.mxu0 0.0
  %3780 = vmatpush.msra.mxu0 0.0
  %3781 = vmatpush.msra.mxu0 0.0
  %3782 = vmatpush.msra.mxu0 0.0
  %3783 = vmatpush.msra.mxu0 0.0
  %3784 = vmatpush.msra.mxu0 0.0
  %3785 = vmatpush.msra.mxu0 0.0
  %3786 = vmatpush.msra.mxu0 0.0
  %3787 = vmatpush.msra.mxu0 0.0
  %3788 = vmatpush.msra.mxu0 %v3616
  %3789 = vmatpush.msra.mxu0 %v3608
  %3790 = vmatmul.f32.gmra.mxu0 %v3631
  %v3791 = vpop.f32.mrf.mxu0
  %v3792 = vadd.f32 %v3623, %v3791
  %3793 = vmatmul.f32.gmra.mxu0 %v3634
  %v3794 = vpop.f32.mrf.mxu0
  %v3795 = vadd.f32 %v3628, %v3794
  %3796 = vdwg.mxu0
  %3797 = vmatpush.msra.mxu0 0.0
  %3798 = vmatpush.msra.mxu0 0.0
  %3799 = vmatpush.msra.mxu0 0.0
  %3800 = vmatpush.msra.mxu0 0.0
  %3801 = vmatpush.msra.mxu0 0.0
  %3802 = vmatpush.msra.mxu0 0.0
  %3803 = vmatpush.msra.mxu0 0.0
  %3804 = vmatpush.msra.mxu0 0.0
  %3805 = vmatpush.msra.mxu0 0.0
  %3806 = vmatpush.msra.mxu0 0.0
  %3807 = vmatpush.msra.mxu0 0.0
  %3808 = vmatpush.msra.mxu0 0.0
  %3809 = vmatpush.msra.mxu0 0.0
  %3810 = vmatpush.msra.mxu0 0.0
  %3811 = vmatpush.msra.mxu0 %v3617
  %3812 = vmatpush.msra.mxu0 %v3609
  %3813 = vmatmul.f32.gmra.mxu0 %v3631
  %v3814 = vpop.f32.mrf.mxu0
  %v3815 = vadd.f32 %v3623, %v3814
  %3816 = vmatmul.f32.gmra.mxu0 %v3634
  %v3817 = vpop.f32.mrf.mxu0
  %v3818 = vadd.f32 %v3628, %v3817
  %3819 = vdwg.mxu0
  %v3820 = vmax.f32 %v3654, 0.0
  %v3821 = vmax.f32 %v3677, 0.0
  %v3822 = vmax.f32 %v3700, 0.0
  %v3823 = vmax.f32 %v3723, 0.0
  %v3824 = vmax.f32 %v3746, 0.0
  %v3825 = vmax.f32 %v3769, 0.0
  %v3826 = vmax.f32 %v3792, 0.0
  %v3827 = vmax.f32 %v3815, 0.0
  %v3828 = vmax.f32 %v3657, 0.0
  %v3829 = vmax.f32 %v3680, 0.0
  %v3830 = vmax.f32 %v3703, 0.0
  %v3831 = vmax.f32 %v3726, 0.0
  %v3832 = vmax.f32 %v3749, 0.0
  %v3833 = vmax.f32 %v3772, 0.0
  %v3834 = vmax.f32 %v3795, 0.0
  %v3835 = vmax.f32 %v3818, 0.0
  %3836 = vst [vmem:[%s11 + $0x80] sm:$0xff] %v3820
  %3837 = vst [vmem:[%s11 + $0x88] sm:$0xff] %v3821
  %3838 = vst [vmem:[%s11 + $0x90] sm:$0xff] %v3822
  %3839 = vst [vmem:[%s11 + $0x98] sm:$0xff] %v3823
  %3840 = vst [vmem:[%s11 + $0xa0] sm:$0xff] %v3824
  %3841 = vst [vmem:[%s11 + $0xa8] sm:$0xff] %v3825
  %3842 = vst [vmem:[%s11 + $0xb0] sm:$0xff] %v3826
  %3843 = vst [vmem:[%s11 + $0xb8] sm:$0xff] %v3827
  %3844 = vst [vmem:[%s11 + $0x280] sm:$0xf] %v3828
  %3845 = vst [vmem:[%s11 + $0x288] sm:$0xf] %v3829
  %3846 = vst [vmem:[%s11 + $0x290] sm:$0xf] %v3830
  %3847 = vst [vmem:[%s11 + $0x298] sm:$0xf] %v3831
  %3848 = vst [vmem:[%s11 + $0x2a0] sm:$0xf] %v3832
  %3849 = vst [vmem:[%s11 + $0x2a8] sm:$0xf] %v3833
  %3850 = vst [vmem:[%s11 + $0x2b0] sm:$0xf] %v3834
  %3851 = vst [vmem:[%s11 + $0x2b8] sm:$0xf] %v3835
  %v3852 = vld [vmem:[%s9] sm:$0xff]
  %v3853 = vld [vmem:[%s9 + $0x8] sm:$0xf]
  %v3854 = vld [vmem:[#allocation4 + $0xc0] sm:$0xff]
  %v3855 = vld [vmem:[#allocation4 + $0xc8] sm:$0xff]
  %v3856 = vld [vmem:[#allocation4 + $0xd0] sm:$0xff]
  %v3857 = vld [vmem:[#allocation4 + $0xd8] sm:$0xff]
  %v3858 = vld [vmem:[#allocation4 + $0xe0] sm:$0xff]
  %v3859 = vld [vmem:[#allocation4 + $0xe8] sm:$0xff]
  %v3860 = vld [vmem:[#allocation4 + $0xf0] sm:$0xff]
  %v3861 = vld [vmem:[#allocation4 + $0xf8] sm:$0xff]
  %v3862 = vld [vmem:[#allocation4 + $0x2c0] sm:$0xff]
  %v3863 = vld [vmem:[#allocation4 + $0x2c8] sm:$0xff]
  %v3864 = vld [vmem:[#allocation4 + $0x2d0] sm:$0xff]
  %v3865 = vld [vmem:[#allocation4 + $0x2d8] sm:$0xff]
  %v3866 = vld [vmem:[#allocation4 + $0x2e0] sm:$0xff]
  %v3867 = vld [vmem:[#allocation4 + $0x2e8] sm:$0xff]
  %v3868 = vld [vmem:[#allocation4 + $0x2f0] sm:$0xff]
  %v3869 = vld [vmem:[#allocation4 + $0x2f8] sm:$0xff]
  %v3870 = vld [vmem:[%s10] sm:$0xff]
  %v3871 = vld [vmem:[%s10 + $0x8] sm:$0xf]
  %3873 = vset.pattern.permute.xlu0 0
  %3874 = vperm.xlu0 %3873, %v3870
  %v3875 = vpop.permute.xlu0 %3874
  %3878 = vset.pattern.permute.xlu0 0
  %3879 = vperm.xlu0 %3878, %v3871
  %v3880 = vpop.permute.xlu0 %3879
  %v3883 = vsel %vm3125, %v3852, 0
  %v3886 = vsel %vm3125, %v3853, 0
  %3888 = vmatpush.msra.mxu0 0.0
  %3889 = vmatpush.msra.mxu0 0.0
  %3890 = vmatpush.msra.mxu0 0.0
  %3891 = vmatpush.msra.mxu0 0.0
  %3892 = vmatpush.msra.mxu0 0.0
  %3893 = vmatpush.msra.mxu0 0.0
  %3894 = vmatpush.msra.mxu0 0.0
  %3895 = vmatpush.msra.mxu0 0.0
  %3896 = vmatpush.msra.mxu0 0.0
  %3897 = vmatpush.msra.mxu0 0.0
  %3898 = vmatpush.msra.mxu0 0.0
  %3899 = vmatpush.msra.mxu0 0.0
  %3900 = vmatpush.msra.mxu0 0.0
  %3901 = vmatpush.msra.mxu0 0.0
  %3902 = vmatpush.msra.mxu0 %v3862
  %3903 = vmatpush.msra.mxu0 %v3854
  %3904 = vmatmul.f32.gmra.mxu0 %v3883
  %v3905 = vpop.f32.mrf.mxu0
  %v3906 = vadd.f32 %v3875, %v3905
  %3907 = vmatmul.f32.gmra.mxu0 %v3886
  %v3908 = vpop.f32.mrf.mxu0
  %v3909 = vadd.f32 %v3880, %v3908
  %3910 = vdwg.mxu0
  %3911 = vmatpush.msra.mxu0 0.0
  %3912 = vmatpush.msra.mxu0 0.0
  %3913 = vmatpush.msra.mxu0 0.0
  %3914 = vmatpush.msra.mxu0 0.0
  %3915 = vmatpush.msra.mxu0 0.0
  %3916 = vmatpush.msra.mxu0 0.0
  %3917 = vmatpush.msra.mxu0 0.0
  %3918 = vmatpush.msra.mxu0 0.0
  %3919 = vmatpush.msra.mxu0 0.0
  %3920 = vmatpush.msra.mxu0 0.0
  %3921 = vmatpush.msra.mxu0 0.0
  %3922 = vmatpush.msra.mxu0 0.0
  %3923 = vmatpush.msra.mxu0 0.0
  %3924 = vmatpush.msra.mxu0 0.0
  %3925 = vmatpush.msra.mxu0 %v3863
  %3926 = vmatpush.msra.mxu0 %v3855
  %3927 = vmatmul.f32.gmra.mxu0 %v3883
  %v3928 = vpop.f32.mrf.mxu0
  %v3929 = vadd.f32 %v3875, %v3928
  %3930 = vmatmul.f32.gmra.mxu0 %v3886
  %v3931 = vpop.f32.mrf.mxu0
  %v3932 = vadd.f32 %v3880, %v3931
  %3933 = vdwg.mxu0
  %3934 = vmatpush.msra.mxu0 0.0
  %3935 = vmatpush.msra.mxu0 0.0
  %3936 = vmatpush.msra.mxu0 0.0
  %3937 = vmatpush.msra.mxu0 0.0
  %3938 = vmatpush.msra.mxu0 0.0
  %3939 = vmatpush.msra.mxu0 0.0
  %3940 = vmatpush.msra.mxu0 0.0
  %3941 = vmatpush.msra.mxu0 0.0
  %3942 = vmatpush.msra.mxu0 0.0
  %3943 = vmatpush.msra.mxu0 0.0
  %3944 = vmatpush.msra.mxu0 0.0
  %3945 = vmatpush.msra.mxu0 0.0
  %3946 = vmatpush.msra.mxu0 0.0
  %3947 = vmatpush.msra.mxu0 0.0
  %3948 = vmatpush.msra.mxu0 %v3864
  %3949 = vmatpush.msra.mxu0 %v3856
  %3950 = vmatmul.f32.gmra.mxu0 %v3883
  %v3951 = vpop.f32.mrf.mxu0
  %v3952 = vadd.f32 %v3875, %v3951
  %3953 = vmatmul.f32.gmra.mxu0 %v3886
  %v3954 = vpop.f32.mrf.mxu0
  %v3955 = vadd.f32 %v3880, %v3954
  %3956 = vdwg.mxu0
  %3957 = vmatpush.msra.mxu0 0.0
  %3958 = vmatpush.msra.mxu0 0.0
  %3959 = vmatpush.msra.mxu0 0.0
  %3960 = vmatpush.msra.mxu0 0.0
  %3961 = vmatpush.msra.mxu0 0.0
  %3962 = vmatpush.msra.mxu0 0.0
  %3963 = vmatpush.msra.mxu0 0.0
  %3964 = vmatpush.msra.mxu0 0.0
  %3965 = vmatpush.msra.mxu0 0.0
  %3966 = vmatpush.msra.mxu0 0.0
  %3967 = vmatpush.msra.mxu0 0.0
  %3968 = vmatpush.msra.mxu0 0.0
  %3969 = vmatpush.msra.mxu0 0.0
  %3970 = vmatpush.msra.mxu0 0.0
  %3971 = vmatpush.msra.mxu0 %v3865
  %3972 = vmatpush.msra.mxu0 %v3857
  %3973 = vmatmul.f32.gmra.mxu0 %v3883
  %v3974 = vpop.f32.mrf.mxu0
  %v3975 = vadd.f32 %v3875, %v3974
  %3976 = vmatmul.f32.gmra.mxu0 %v3886
  %v3977 = vpop.f32.mrf.mxu0
  %v3978 = vadd.f32 %v3880, %v3977
  %3979 = vdwg.mxu0
  %3980 = vmatpush.msra.mxu0 0.0
  %3981 = vmatpush.msra.mxu0 0.0
  %3982 = vmatpush.msra.mxu0 0.0
  %3983 = vmatpush.msra.mxu0 0.0
  %3984 = vmatpush.msra.mxu0 0.0
  %3985 = vmatpush.msra.mxu0 0.0
  %3986 = vmatpush.msra.mxu0 0.0
  %3987 = vmatpush.msra.mxu0 0.0
  %3988 = vmatpush.msra.mxu0 0.0
  %3989 = vmatpush.msra.mxu0 0.0
  %3990 = vmatpush.msra.mxu0 0.0
  %3991 = vmatpush.msra.mxu0 0.0
  %3992 = vmatpush.msra.mxu0 0.0
  %3993 = vmatpush.msra.mxu0 0.0
  %3994 = vmatpush.msra.mxu0 %v3866
  %3995 = vmatpush.msra.mxu0 %v3858
  %3996 = vmatmul.f32.gmra.mxu0 %v3883
  %v3997 = vpop.f32.mrf.mxu0
  %v3998 = vadd.f32 %v3875, %v3997
  %3999 = vmatmul.f32.gmra.mxu0 %v3886
  %v4000 = vpop.f32.mrf.mxu0
  %v4001 = vadd.f32 %v3880, %v4000
  %4002 = vdwg.mxu0
  %4003 = vmatpush.msra.mxu0 0.0
  %4004 = vmatpush.msra.mxu0 0.0
  %4005 = vmatpush.msra.mxu0 0.0
  %4006 = vmatpush.msra.mxu0 0.0
  %4007 = vmatpush.msra.mxu0 0.0
  %4008 = vmatpush.msra.mxu0 0.0
  %4009 = vmatpush.msra.mxu0 0.0
  %4010 = vmatpush.msra.mxu0 0.0
  %4011 = vmatpush.msra.mxu0 0.0
  %4012 = vmatpush.msra.mxu0 0.0
  %4013 = vmatpush.msra.mxu0 0.0
  %4014 = vmatpush.msra.mxu0 0.0
  %4015 = vmatpush.msra.mxu0 0.0
  %4016 = vmatpush.msra.mxu0 0.0
  %4017 = vmatpush.msra.mxu0 %v3867
  %4018 = vmatpush.msra.mxu0 %v3859
  %4019 = vmatmul.f32.gmra.mxu0 %v3883
  %v4020 = vpop.f32.mrf.mxu0
  %v4021 = vadd.f32 %v3875, %v4020
  %4022 = vmatmul.f32.gmra.mxu0 %v3886
  %v4023 = vpop.f32.mrf.mxu0
  %v4024 = vadd.f32 %v3880, %v4023
  %4025 = vdwg.mxu0
  %4026 = vmatpush.msra.mxu0 0.0
  %4027 = vmatpush.msra.mxu0 0.0
  %4028 = vmatpush.msra.mxu0 0.0
  %4029 = vmatpush.msra.mxu0 0.0
  %4030 = vmatpush.msra.mxu0 0.0
  %4031 = vmatpush.msra.mxu0 0.0
  %4032 = vmatpush.msra.mxu0 0.0
  %4033 = vmatpush.msra.mxu0 0.0
  %4034 = vmatpush.msra.mxu0 0.0
  %4035 = vmatpush.msra.mxu0 0.0
  %4036 = vmatpush.msra.mxu0 0.0
  %4037 = vmatpush.msra.mxu0 0.0
  %4038 = vmatpush.msra.mxu0 0.0
  %4039 = vmatpush.msra.mxu0 0.0
  %4040 = vmatpush.msra.mxu0 %v3868
  %4041 = vmatpush.msra.mxu0 %v3860
  %4042 = vmatmul.f32.gmra.mxu0 %v3883
  %v4043 = vpop.f32.mrf.mxu0
  %v4044 = vadd.f32 %v3875, %v4043
  %4045 = vmatmul.f32.gmra.mxu0 %v3886
  %v4046 = vpop.f32.mrf.mxu0
  %v4047 = vadd.f32 %v3880, %v4046
  %4048 = vdwg.mxu0
  %4049 = vmatpush.msra.mxu0 0.0
  %4050 = vmatpush.msra.mxu0 0.0
  %4051 = vmatpush.msra.mxu0 0.0
  %4052 = vmatpush.msra.mxu0 0.0
  %4053 = vmatpush.msra.mxu0 0.0
  %4054 = vmatpush.msra.mxu0 0.0
  %4055 = vmatpush.msra.mxu0 0.0
  %4056 = vmatpush.msra.mxu0 0.0
  %4057 = vmatpush.msra.mxu0 0.0
  %4058 = vmatpush.msra.mxu0 0.0
  %4059 = vmatpush.msra.mxu0 0.0
  %4060 = vmatpush.msra.mxu0 0.0
  %4061 = vmatpush.msra.mxu0 0.0
  %4062 = vmatpush.msra.mxu0 0.0
  %4063 = vmatpush.msra.mxu0 %v3869
  %4064 = vmatpush.msra.mxu0 %v3861
  %4065 = vmatmul.f32.gmra.mxu0 %v3883
  %v4066 = vpop.f32.mrf.mxu0
  %v4067 = vadd.f32 %v3875, %v4066
  %4068 = vmatmul.f32.gmra.mxu0 %v3886
  %v4069 = vpop.f32.mrf.mxu0
  %v4070 = vadd.f32 %v3880, %v4069
  %4071 = vdwg.mxu0
  %v4072 = vmax.f32 %v3906, 0.0
  %v4073 = vmax.f32 %v3929, 0.0
  %v4074 = vmax.f32 %v3952, 0.0
  %v4075 = vmax.f32 %v3975, 0.0
  %v4076 = vmax.f32 %v3998, 0.0
  %v4077 = vmax.f32 %v4021, 0.0
  %v4078 = vmax.f32 %v4044, 0.0
  %v4079 = vmax.f32 %v4067, 0.0
  %v4080 = vmax.f32 %v3909, 0.0
  %v4081 = vmax.f32 %v3932, 0.0
  %v4082 = vmax.f32 %v3955, 0.0
  %v4083 = vmax.f32 %v3978, 0.0
  %v4084 = vmax.f32 %v4001, 0.0
  %v4085 = vmax.f32 %v4024, 0.0
  %v4086 = vmax.f32 %v4047, 0.0
  %v4087 = vmax.f32 %v4070, 0.0
  %4088 = vst [vmem:[%s11 + $0xc0] sm:$0xff] %v4072
  %4089 = vst [vmem:[%s11 + $0xc8] sm:$0xff] %v4073
  %4090 = vst [vmem:[%s11 + $0xd0] sm:$0xff] %v4074
  %4091 = vst [vmem:[%s11 + $0xd8] sm:$0xff] %v4075
  %4092 = vst [vmem:[%s11 + $0xe0] sm:$0xff] %v4076
  %4093 = vst [vmem:[%s11 + $0xe8] sm:$0xff] %v4077
  %4094 = vst [vmem:[%s11 + $0xf0] sm:$0xff] %v4078
  %4095 = vst [vmem:[%s11 + $0xf8] sm:$0xff] %v4079
  %4096 = vst [vmem:[%s11 + $0x2c0] sm:$0xf] %v4080
  %4097 = vst [vmem:[%s11 + $0x2c8] sm:$0xf] %v4081
  %4098 = vst [vmem:[%s11 + $0x2d0] sm:$0xf] %v4082
  %4099 = vst [vmem:[%s11 + $0x2d8] sm:$0xf] %v4083
  %4100 = vst [vmem:[%s11 + $0x2e0] sm:$0xf] %v4084
  %4101 = vst [vmem:[%s11 + $0x2e8] sm:$0xf] %v4085
  %4102 = vst [vmem:[%s11 + $0x2f0] sm:$0xf] %v4086
  %4103 = vst [vmem:[%s11 + $0x2f8] sm:$0xf] %v4087
  %v4104 = vld [vmem:[%s9] sm:$0xff]
  %v4105 = vld [vmem:[%s9 + $0x8] sm:$0xf]
  %v4106 = vld [vmem:[#allocation4 + $0x100] sm:$0xff]
  %v4107 = vld [vmem:[#allocation4 + $0x108] sm:$0xff]
  %v4108 = vld [vmem:[#allocation4 + $0x110] sm:$0xff]
  %v4109 = vld [vmem:[#allocation4 + $0x118] sm:$0xff]
  %v4110 = vld [vmem:[#allocation4 + $0x120] sm:$0xff]
  %v4111 = vld [vmem:[#allocation4 + $0x128] sm:$0xff]
  %v4112 = vld [vmem:[#allocation4 + $0x130] sm:$0xff]
  %v4113 = vld [vmem:[#allocation4 + $0x138] sm:$0xff]
  %v4114 = vld [vmem:[#allocation4 + $0x300] sm:$0xff]
  %v4115 = vld [vmem:[#allocation4 + $0x308] sm:$0xff]
  %v4116 = vld [vmem:[#allocation4 + $0x310] sm:$0xff]
  %v4117 = vld [vmem:[#allocation4 + $0x318] sm:$0xff]
  %v4118 = vld [vmem:[#allocation4 + $0x320] sm:$0xff]
  %v4119 = vld [vmem:[#allocation4 + $0x328] sm:$0xff]
  %v4120 = vld [vmem:[#allocation4 + $0x330] sm:$0xff]
  %v4121 = vld [vmem:[#allocation4 + $0x338] sm:$0xff]
  %v4122 = vld [vmem:[%s10] sm:$0xff]
  %v4123 = vld [vmem:[%s10 + $0x8] sm:$0xf]
  %4125 = vset.pattern.permute.xlu0 0
  %4126 = vperm.xlu0 %4125, %v4122
  %v4127 = vpop.permute.xlu0 %4126
  %4130 = vset.pattern.permute.xlu0 0
  %4131 = vperm.xlu0 %4130, %v4123
  %v4132 = vpop.permute.xlu0 %4131
  %v4135 = vsel %vm3125, %v4104, 0
  %v4138 = vsel %vm3125, %v4105, 0
  %4140 = vmatpush.msra.mxu0 0.0
  %4141 = vmatpush.msra.mxu0 0.0
  %4142 = vmatpush.msra.mxu0 0.0
  %4143 = vmatpush.msra.mxu0 0.0
  %4144 = vmatpush.msra.mxu0 0.0
  %4145 = vmatpush.msra.mxu0 0.0
  %4146 = vmatpush.msra.mxu0 0.0
  %4147 = vmatpush.msra.mxu0 0.0
  %4148 = vmatpush.msra.mxu0 0.0
  %4149 = vmatpush.msra.mxu0 0.0
  %4150 = vmatpush.msra.mxu0 0.0
  %4151 = vmatpush.msra.mxu0 0.0
  %4152 = vmatpush.msra.mxu0 0.0
  %4153 = vmatpush.msra.mxu0 0.0
  %4154 = vmatpush.msra.mxu0 %v4114
  %4155 = vmatpush.msra.mxu0 %v4106
  %4156 = vmatmul.f32.gmra.mxu0 %v4135
  %v4157 = vpop.f32.mrf.mxu0
  %v4158 = vadd.f32 %v4127, %v4157
  %4159 = vmatmul.f32.gmra.mxu0 %v4138
  %v4160 = vpop.f32.mrf.mxu0
  %v4161 = vadd.f32 %v4132, %v4160
  %4162 = vdwg.mxu0
  %4163 = vmatpush.msra.mxu0 0.0
  %4164 = vmatpush.msra.mxu0 0.0
  %4165 = vmatpush.msra.mxu0 0.0
  %4166 = vmatpush.msra.mxu0 0.0
  %4167 = vmatpush.msra.mxu0 0.0
  %4168 = vmatpush.msra.mxu0 0.0
  %4169 = vmatpush.msra.mxu0 0.0
  %4170 = vmatpush.msra.mxu0 0.0
  %4171 = vmatpush.msra.mxu0 0.0
  %4172 = vmatpush.msra.mxu0 0.0
  %4173 = vmatpush.msra.mxu0 0.0
  %4174 = vmatpush.msra.mxu0 0.0
  %4175 = vmatpush.msra.mxu0 0.0
  %4176 = vmatpush.msra.mxu0 0.0
  %4177 = vmatpush.msra.mxu0 %v4115
  %4178 = vmatpush.msra.mxu0 %v4107
  %4179 = vmatmul.f32.gmra.mxu0 %v4135
  %v4180 = vpop.f32.mrf.mxu0
  %v4181 = vadd.f32 %v4127, %v4180
  %4182 = vmatmul.f32.gmra.mxu0 %v4138
  %v4183 = vpop.f32.mrf.mxu0
  %v4184 = vadd.f32 %v4132, %v4183
  %4185 = vdwg.mxu0
  %4186 = vmatpush.msra.mxu0 0.0
  %4187 = vmatpush.msra.mxu0 0.0
  %4188 = vmatpush.msra.mxu0 0.0
  %4189 = vmatpush.msra.mxu0 0.0
  %4190 = vmatpush.msra.mxu0 0.0
  %4191 = vmatpush.msra.mxu0 0.0
  %4192 = vmatpush.msra.mxu0 0.0
  %4193 = vmatpush.msra.mxu0 0.0
  %4194 = vmatpush.msra.mxu0 0.0
  %4195 = vmatpush.msra.mxu0 0.0
  %4196 = vmatpush.msra.mxu0 0.0
  %4197 = vmatpush.msra.mxu0 0.0
  %4198 = vmatpush.msra.mxu0 0.0
  %4199 = vmatpush.msra.mxu0 0.0
  %4200 = vmatpush.msra.mxu0 %v4116
  %4201 = vmatpush.msra.mxu0 %v4108
  %4202 = vmatmul.f32.gmra.mxu0 %v4135
  %v4203 = vpop.f32.mrf.mxu0
  %v4204 = vadd.f32 %v4127, %v4203
  %4205 = vmatmul.f32.gmra.mxu0 %v4138
  %v4206 = vpop.f32.mrf.mxu0
  %v4207 = vadd.f32 %v4132, %v4206
  %4208 = vdwg.mxu0
  %4209 = vmatpush.msra.mxu0 0.0
  %4210 = vmatpush.msra.mxu0 0.0
  %4211 = vmatpush.msra.mxu0 0.0
  %4212 = vmatpush.msra.mxu0 0.0
  %4213 = vmatpush.msra.mxu0 0.0
  %4214 = vmatpush.msra.mxu0 0.0
  %4215 = vmatpush.msra.mxu0 0.0
  %4216 = vmatpush.msra.mxu0 0.0
  %4217 = vmatpush.msra.mxu0 0.0
  %4218 = vmatpush.msra.mxu0 0.0
  %4219 = vmatpush.msra.mxu0 0.0
  %4220 = vmatpush.msra.mxu0 0.0
  %4221 = vmatpush.msra.mxu0 0.0
  %4222 = vmatpush.msra.mxu0 0.0
  %4223 = vmatpush.msra.mxu0 %v4117
  %4224 = vmatpush.msra.mxu0 %v4109
  %4225 = vmatmul.f32.gmra.mxu0 %v4135
  %v4226 = vpop.f32.mrf.mxu0
  %v4227 = vadd.f32 %v4127, %v4226
  %4228 = vmatmul.f32.gmra.mxu0 %v4138
  %v4229 = vpop.f32.mrf.mxu0
  %v4230 = vadd.f32 %v4132, %v4229
  %4231 = vdwg.mxu0
  %4232 = vmatpush.msra.mxu0 0.0
  %4233 = vmatpush.msra.mxu0 0.0
  %4234 = vmatpush.msra.mxu0 0.0
  %4235 = vmatpush.msra.mxu0 0.0
  %4236 = vmatpush.msra.mxu0 0.0
  %4237 = vmatpush.msra.mxu0 0.0
  %4238 = vmatpush.msra.mxu0 0.0
  %4239 = vmatpush.msra.mxu0 0.0
  %4240 = vmatpush.msra.mxu0 0.0
  %4241 = vmatpush.msra.mxu0 0.0
  %4242 = vmatpush.msra.mxu0 0.0
  %4243 = vmatpush.msra.mxu0 0.0
  %4244 = vmatpush.msra.mxu0 0.0
  %4245 = vmatpush.msra.mxu0 0.0
  %4246 = vmatpush.msra.mxu0 %v4118
  %4247 = vmatpush.msra.mxu0 %v4110
  %4248 = vmatmul.f32.gmra.mxu0 %v4135
  %v4249 = vpop.f32.mrf.mxu0
  %v4250 = vadd.f32 %v4127, %v4249
  %4251 = vmatmul.f32.gmra.mxu0 %v4138
  %v4252 = vpop.f32.mrf.mxu0
  %v4253 = vadd.f32 %v4132, %v4252
  %4254 = vdwg.mxu0
  %4255 = vmatpush.msra.mxu0 0.0
  %4256 = vmatpush.msra.mxu0 0.0
  %4257 = vmatpush.msra.mxu0 0.0
  %4258 = vmatpush.msra.mxu0 0.0
  %4259 = vmatpush.msra.mxu0 0.0
  %4260 = vmatpush.msra.mxu0 0.0
  %4261 = vmatpush.msra.mxu0 0.0
  %4262 = vmatpush.msra.mxu0 0.0
  %4263 = vmatpush.msra.mxu0 0.0
  %4264 = vmatpush.msra.mxu0 0.0
  %4265 = vmatpush.msra.mxu0 0.0
  %4266 = vmatpush.msra.mxu0 0.0
  %4267 = vmatpush.msra.mxu0 0.0
  %4268 = vmatpush.msra.mxu0 0.0
  %4269 = vmatpush.msra.mxu0 %v4119
  %4270 = vmatpush.msra.mxu0 %v4111
  %4271 = vmatmul.f32.gmra.mxu0 %v4135
  %v4272 = vpop.f32.mrf.mxu0
  %v4273 = vadd.f32 %v4127, %v4272
  %4274 = vmatmul.f32.gmra.mxu0 %v4138
  %v4275 = vpop.f32.mrf.mxu0
  %v4276 = vadd.f32 %v4132, %v4275
  %4277 = vdwg.mxu0
  %4278 = vmatpush.msra.mxu0 0.0
  %4279 = vmatpush.msra.mxu0 0.0
  %4280 = vmatpush.msra.mxu0 0.0
  %4281 = vmatpush.msra.mxu0 0.0
  %4282 = vmatpush.msra.mxu0 0.0
  %4283 = vmatpush.msra.mxu0 0.0
  %4284 = vmatpush.msra.mxu0 0.0
  %4285 = vmatpush.msra.mxu0 0.0
  %4286 = vmatpush.msra.mxu0 0.0
  %4287 = vmatpush.msra.mxu0 0.0
  %4288 = vmatpush.msra.mxu0 0.0
  %4289 = vmatpush.msra.mxu0 0.0
  %4290 = vmatpush.msra.mxu0 0.0
  %4291 = vmatpush.msra.mxu0 0.0
  %4292 = vmatpush.msra.mxu0 %v4120
  %4293 = vmatpush.msra.mxu0 %v4112
  %4294 = vmatmul.f32.gmra.mxu0 %v4135
  %v4295 = vpop.f32.mrf.mxu0
  %v4296 = vadd.f32 %v4127, %v4295
  %4297 = vmatmul.f32.gmra.mxu0 %v4138
  %v4298 = vpop.f32.mrf.mxu0
  %v4299 = vadd.f32 %v4132, %v4298
  %4300 = vdwg.mxu0
  %4301 = vmatpush.msra.mxu0 0.0
  %4302 = vmatpush.msra.mxu0 0.0
  %4303 = vmatpush.msra.mxu0 0.0
  %4304 = vmatpush.msra.mxu0 0.0
  %4305 = vmatpush.msra.mxu0 0.0
  %4306 = vmatpush.msra.mxu0 0.0
  %4307 = vmatpush.msra.mxu0 0.0
  %4308 = vmatpush.msra.mxu0 0.0
  %4309 = vmatpush.msra.mxu0 0.0
  %4310 = vmatpush.msra.mxu0 0.0
  %4311 = vmatpush.msra.mxu0 0.0
  %4312 = vmatpush.msra.mxu0 0.0
  %4313 = vmatpush.msra.mxu0 0.0
  %4314 = vmatpush.msra.mxu0 0.0
  %4315 = vmatpush.msra.mxu0 %v4121
  %4316 = vmatpush.msra.mxu0 %v4113
  %4317 = vmatmul.f32.gmra.mxu0 %v4135
  %v4318 = vpop.f32.mrf.mxu0
  %v4319 = vadd.f32 %v4127, %v4318
  %4320 = vmatmul.f32.gmra.mxu0 %v4138
  %v4321 = vpop.f32.mrf.mxu0
  %v4322 = vadd.f32 %v4132, %v4321
  %4323 = vdwg.mxu0
  %v4324 = vmax.f32 %v4158, 0.0
  %v4325 = vmax.f32 %v4181, 0.0
  %v4326 = vmax.f32 %v4204, 0.0
  %v4327 = vmax.f32 %v4227, 0.0
  %v4328 = vmax.f32 %v4250, 0.0
  %v4329 = vmax.f32 %v4273, 0.0
  %v4330 = vmax.f32 %v4296, 0.0
  %v4331 = vmax.f32 %v4319, 0.0
  %v4332 = vmax.f32 %v4161, 0.0
  %v4333 = vmax.f32 %v4184, 0.0
  %v4334 = vmax.f32 %v4207, 0.0
  %v4335 = vmax.f32 %v4230, 0.0
  %v4336 = vmax.f32 %v4253, 0.0
  %v4337 = vmax.f32 %v4276, 0.0
  %v4338 = vmax.f32 %v4299, 0.0
  %v4339 = vmax.f32 %v4322, 0.0
  %4340 = vst [vmem:[%s11 + $0x100] sm:$0xff] %v4324
  %4341 = vst [vmem:[%s11 + $0x108] sm:$0xff] %v4325
  %4342 = vst [vmem:[%s11 + $0x110] sm:$0xff] %v4326
  %4343 = vst [vmem:[%s11 + $0x118] sm:$0xff] %v4327
  %4344 = vst [vmem:[%s11 + $0x120] sm:$0xff] %v4328
  %4345 = vst [vmem:[%s11 + $0x128] sm:$0xff] %v4329
  %4346 = vst [vmem:[%s11 + $0x130] sm:$0xff] %v4330
  %4347 = vst [vmem:[%s11 + $0x138] sm:$0xff] %v4331
  %4348 = vst [vmem:[%s11 + $0x300] sm:$0xf] %v4332
  %4349 = vst [vmem:[%s11 + $0x308] sm:$0xf] %v4333
  %4350 = vst [vmem:[%s11 + $0x310] sm:$0xf] %v4334
  %4351 = vst [vmem:[%s11 + $0x318] sm:$0xf] %v4335
  %4352 = vst [vmem:[%s11 + $0x320] sm:$0xf] %v4336
  %4353 = vst [vmem:[%s11 + $0x328] sm:$0xf] %v4337
  %4354 = vst [vmem:[%s11 + $0x330] sm:$0xf] %v4338
  %4355 = vst [vmem:[%s11 + $0x338] sm:$0xf] %v4339
  %v4356 = vld [vmem:[%s9] sm:$0xff]
  %v4357 = vld [vmem:[%s9 + $0x8] sm:$0xf]
  %v4358 = vld [vmem:[#allocation4 + $0x140] sm:$0xff]
  %v4359 = vld [vmem:[#allocation4 + $0x148] sm:$0xff]
  %v4360 = vld [vmem:[#allocation4 + $0x150] sm:$0xff]
  %v4361 = vld [vmem:[#allocation4 + $0x158] sm:$0xff]
  %v4362 = vld [vmem:[#allocation4 + $0x160] sm:$0xff]
  %v4363 = vld [vmem:[#allocation4 + $0x168] sm:$0xff]
  %v4364 = vld [vmem:[#allocation4 + $0x170] sm:$0xff]
  %v4365 = vld [vmem:[#allocation4 + $0x178] sm:$0xff]
  %v4366 = vld [vmem:[#allocation4 + $0x340] sm:$0xff]
  %v4367 = vld [vmem:[#allocation4 + $0x348] sm:$0xff]
  %v4368 = vld [vmem:[#allocation4 + $0x350] sm:$0xff]
  %v4369 = vld [vmem:[#allocation4 + $0x358] sm:$0xff]
  %v4370 = vld [vmem:[#allocation4 + $0x360] sm:$0xff]
  %v4371 = vld [vmem:[#allocation4 + $0x368] sm:$0xff]
  %v4372 = vld [vmem:[#allocation4 + $0x370] sm:$0xff]
  %v4373 = vld [vmem:[#allocation4 + $0x378] sm:$0xff]
  %v4374 = vld [vmem:[%s10] sm:$0xff]
  %v4375 = vld [vmem:[%s10 + $0x8] sm:$0xf]
  %4377 = vset.pattern.permute.xlu0 0
  %4378 = vperm.xlu0 %4377, %v4374
  %v4379 = vpop.permute.xlu0 %4378
  %4382 = vset.pattern.permute.xlu0 0
  %4383 = vperm.xlu0 %4382, %v4375
  %v4384 = vpop.permute.xlu0 %4383
  %v4387 = vsel %vm3125, %v4356, 0
  %v4390 = vsel %vm3125, %v4357, 0
  %4392 = vmatpush.msra.mxu0 0.0
  %4393 = vmatpush.msra.mxu0 0.0
  %4394 = vmatpush.msra.mxu0 0.0
  %4395 = vmatpush.msra.mxu0 0.0
  %4396 = vmatpush.msra.mxu0 0.0
  %4397 = vmatpush.msra.mxu0 0.0
  %4398 = vmatpush.msra.mxu0 0.0
  %4399 = vmatpush.msra.mxu0 0.0
  %4400 = vmatpush.msra.mxu0 0.0
  %4401 = vmatpush.msra.mxu0 0.0
  %4402 = vmatpush.msra.mxu0 0.0
  %4403 = vmatpush.msra.mxu0 0.0
  %4404 = vmatpush.msra.mxu0 0.0
  %4405 = vmatpush.msra.mxu0 0.0
  %4406 = vmatpush.msra.mxu0 %v4366
  %4407 = vmatpush.msra.mxu0 %v4358
  %4408 = vmatmul.f32.gmra.mxu0 %v4387
  %v4409 = vpop.f32.mrf.mxu0
  %v4410 = vadd.f32 %v4379, %v4409
  %4411 = vmatmul.f32.gmra.mxu0 %v4390
  %v4412 = vpop.f32.mrf.mxu0
  %v4413 = vadd.f32 %v4384, %v4412
  %4414 = vdwg.mxu0
  %4415 = vmatpush.msra.mxu0 0.0
  %4416 = vmatpush.msra.mxu0 0.0
  %4417 = vmatpush.msra.mxu0 0.0
  %4418 = vmatpush.msra.mxu0 0.0
  %4419 = vmatpush.msra.mxu0 0.0
  %4420 = vmatpush.msra.mxu0 0.0
  %4421 = vmatpush.msra.mxu0 0.0
  %4422 = vmatpush.msra.mxu0 0.0
  %4423 = vmatpush.msra.mxu0 0.0
  %4424 = vmatpush.msra.mxu0 0.0
  %4425 = vmatpush.msra.mxu0 0.0
  %4426 = vmatpush.msra.mxu0 0.0
  %4427 = vmatpush.msra.mxu0 0.0
  %4428 = vmatpush.msra.mxu0 0.0
  %4429 = vmatpush.msra.mxu0 %v4367
  %4430 = vmatpush.msra.mxu0 %v4359
  %4431 = vmatmul.f32.gmra.mxu0 %v4387
  %v4432 = vpop.f32.mrf.mxu0
  %v4433 = vadd.f32 %v4379, %v4432
  %4434 = vmatmul.f32.gmra.mxu0 %v4390
  %v4435 = vpop.f32.mrf.mxu0
  %v4436 = vadd.f32 %v4384, %v4435
  %4437 = vdwg.mxu0
  %4438 = vmatpush.msra.mxu0 0.0
  %4439 = vmatpush.msra.mxu0 0.0
  %4440 = vmatpush.msra.mxu0 0.0
  %4441 = vmatpush.msra.mxu0 0.0
  %4442 = vmatpush.msra.mxu0 0.0
  %4443 = vmatpush.msra.mxu0 0.0
  %4444 = vmatpush.msra.mxu0 0.0
  %4445 = vmatpush.msra.mxu0 0.0
  %4446 = vmatpush.msra.mxu0 0.0
  %4447 = vmatpush.msra.mxu0 0.0
  %4448 = vmatpush.msra.mxu0 0.0
  %4449 = vmatpush.msra.mxu0 0.0
  %4450 = vmatpush.msra.mxu0 0.0
  %4451 = vmatpush.msra.mxu0 0.0
  %4452 = vmatpush.msra.mxu0 %v4368
  %4453 = vmatpush.msra.mxu0 %v4360
  %4454 = vmatmul.f32.gmra.mxu0 %v4387
  %v4455 = vpop.f32.mrf.mxu0
  %v4456 = vadd.f32 %v4379, %v4455
  %4457 = vmatmul.f32.gmra.mxu0 %v4390
  %v4458 = vpop.f32.mrf.mxu0
  %v4459 = vadd.f32 %v4384, %v4458
  %4460 = vdwg.mxu0
  %4461 = vmatpush.msra.mxu0 0.0
  %4462 = vmatpush.msra.mxu0 0.0
  %4463 = vmatpush.msra.mxu0 0.0
  %4464 = vmatpush.msra.mxu0 0.0
  %4465 = vmatpush.msra.mxu0 0.0
  %4466 = vmatpush.msra.mxu0 0.0
  %4467 = vmatpush.msra.mxu0 0.0
  %4468 = vmatpush.msra.mxu0 0.0
  %4469 = vmatpush.msra.mxu0 0.0
  %4470 = vmatpush.msra.mxu0 0.0
  %4471 = vmatpush.msra.mxu0 0.0
  %4472 = vmatpush.msra.mxu0 0.0
  %4473 = vmatpush.msra.mxu0 0.0
  %4474 = vmatpush.msra.mxu0 0.0
  %4475 = vmatpush.msra.mxu0 %v4369
  %4476 = vmatpush.msra.mxu0 %v4361
  %4477 = vmatmul.f32.gmra.mxu0 %v4387
  %v4478 = vpop.f32.mrf.mxu0
  %v4479 = vadd.f32 %v4379, %v4478
  %4480 = vmatmul.f32.gmra.mxu0 %v4390
  %v4481 = vpop.f32.mrf.mxu0
  %v4482 = vadd.f32 %v4384, %v4481
  %4483 = vdwg.mxu0
  %4484 = vmatpush.msra.mxu0 0.0
  %4485 = vmatpush.msra.mxu0 0.0
  %4486 = vmatpush.msra.mxu0 0.0
  %4487 = vmatpush.msra.mxu0 0.0
  %4488 = vmatpush.msra.mxu0 0.0
  %4489 = vmatpush.msra.mxu0 0.0
  %4490 = vmatpush.msra.mxu0 0.0
  %4491 = vmatpush.msra.mxu0 0.0
  %4492 = vmatpush.msra.mxu0 0.0
  %4493 = vmatpush.msra.mxu0 0.0
  %4494 = vmatpush.msra.mxu0 0.0
  %4495 = vmatpush.msra.mxu0 0.0
  %4496 = vmatpush.msra.mxu0 0.0
  %4497 = vmatpush.msra.mxu0 0.0
  %4498 = vmatpush.msra.mxu0 %v4370
  %4499 = vmatpush.msra.mxu0 %v4362
  %4500 = vmatmul.f32.gmra.mxu0 %v4387
  %v4501 = vpop.f32.mrf.mxu0
  %v4502 = vadd.f32 %v4379, %v4501
  %4503 = vmatmul.f32.gmra.mxu0 %v4390
  %v4504 = vpop.f32.mrf.mxu0
  %v4505 = vadd.f32 %v4384, %v4504
  %4506 = vdwg.mxu0
  %4507 = vmatpush.msra.mxu0 0.0
  %4508 = vmatpush.msra.mxu0 0.0
  %4509 = vmatpush.msra.mxu0 0.0
  %4510 = vmatpush.msra.mxu0 0.0
  %4511 = vmatpush.msra.mxu0 0.0
  %4512 = vmatpush.msra.mxu0 0.0
  %4513 = vmatpush.msra.mxu0 0.0
  %4514 = vmatpush.msra.mxu0 0.0
  %4515 = vmatpush.msra.mxu0 0.0
  %4516 = vmatpush.msra.mxu0 0.0
  %4517 = vmatpush.msra.mxu0 0.0
  %4518 = vmatpush.msra.mxu0 0.0
  %4519 = vmatpush.msra.mxu0 0.0
  %4520 = vmatpush.msra.mxu0 0.0
  %4521 = vmatpush.msra.mxu0 %v4371
  %4522 = vmatpush.msra.mxu0 %v4363
  %4523 = vmatmul.f32.gmra.mxu0 %v4387
  %v4524 = vpop.f32.mrf.mxu0
  %v4525 = vadd.f32 %v4379, %v4524
  %4526 = vmatmul.f32.gmra.mxu0 %v4390
  %v4527 = vpop.f32.mrf.mxu0
  %v4528 = vadd.f32 %v4384, %v4527
  %4529 = vdwg.mxu0
  %4530 = vmatpush.msra.mxu0 0.0
  %4531 = vmatpush.msra.mxu0 0.0
  %4532 = vmatpush.msra.mxu0 0.0
  %4533 = vmatpush.msra.mxu0 0.0
  %4534 = vmatpush.msra.mxu0 0.0
  %4535 = vmatpush.msra.mxu0 0.0
  %4536 = vmatpush.msra.mxu0 0.0
  %4537 = vmatpush.msra.mxu0 0.0
  %4538 = vmatpush.msra.mxu0 0.0
  %4539 = vmatpush.msra.mxu0 0.0
  %4540 = vmatpush.msra.mxu0 0.0
  %4541 = vmatpush.msra.mxu0 0.0
  %4542 = vmatpush.msra.mxu0 0.0
  %4543 = vmatpush.msra.mxu0 0.0
  %4544 = vmatpush.msra.mxu0 %v4372
  %4545 = vmatpush.msra.mxu0 %v4364
  %4546 = vmatmul.f32.gmra.mxu0 %v4387
  %v4547 = vpop.f32.mrf.mxu0
  %v4548 = vadd.f32 %v4379, %v4547
  %4549 = vmatmul.f32.gmra.mxu0 %v4390
  %v4550 = vpop.f32.mrf.mxu0
  %v4551 = vadd.f32 %v4384, %v4550
  %4552 = vdwg.mxu0
  %4553 = vmatpush.msra.mxu0 0.0
  %4554 = vmatpush.msra.mxu0 0.0
  %4555 = vmatpush.msra.mxu0 0.0
  %4556 = vmatpush.msra.mxu0 0.0
  %4557 = vmatpush.msra.mxu0 0.0
  %4558 = vmatpush.msra.mxu0 0.0
  %4559 = vmatpush.msra.mxu0 0.0
  %4560 = vmatpush.msra.mxu0 0.0
  %4561 = vmatpush.msra.mxu0 0.0
  %4562 = vmatpush.msra.mxu0 0.0
  %4563 = vmatpush.msra.mxu0 0.0
  %4564 = vmatpush.msra.mxu0 0.0
  %4565 = vmatpush.msra.mxu0 0.0
  %4566 = vmatpush.msra.mxu0 0.0
  %4567 = vmatpush.msra.mxu0 %v4373
  %4568 = vmatpush.msra.mxu0 %v4365
  %4569 = vmatmul.f32.gmra.mxu0 %v4387
  %v4570 = vpop.f32.mrf.mxu0
  %v4571 = vadd.f32 %v4379, %v4570
  %4572 = vmatmul.f32.gmra.mxu0 %v4390
  %v4573 = vpop.f32.mrf.mxu0
  %v4574 = vadd.f32 %v4384, %v4573
  %4575 = vdwg.mxu0
  %v4576 = vmax.f32 %v4410, 0.0
  %v4577 = vmax.f32 %v4433, 0.0
  %v4578 = vmax.f32 %v4456, 0.0
  %v4579 = vmax.f32 %v4479, 0.0
  %v4580 = vmax.f32 %v4502, 0.0
  %v4581 = vmax.f32 %v4525, 0.0
  %v4582 = vmax.f32 %v4548, 0.0
  %v4583 = vmax.f32 %v4571, 0.0
  %v4584 = vmax.f32 %v4413, 0.0
  %v4585 = vmax.f32 %v4436, 0.0
  %v4586 = vmax.f32 %v4459, 0.0
  %v4587 = vmax.f32 %v4482, 0.0
  %v4588 = vmax.f32 %v4505, 0.0
  %v4589 = vmax.f32 %v4528, 0.0
  %v4590 = vmax.f32 %v4551, 0.0
  %v4591 = vmax.f32 %v4574, 0.0
  %4592 = vst [vmem:[%s11 + $0x140] sm:$0xff] %v4576
  %4593 = vst [vmem:[%s11 + $0x148] sm:$0xff] %v4577
  %4594 = vst [vmem:[%s11 + $0x150] sm:$0xff] %v4578
  %4595 = vst [vmem:[%s11 + $0x158] sm:$0xff] %v4579
  %4596 = vst [vmem:[%s11 + $0x160] sm:$0xff] %v4580
  %4597 = vst [vmem:[%s11 + $0x168] sm:$0xff] %v4581
  %4598 = vst [vmem:[%s11 + $0x170] sm:$0xff] %v4582
  %4599 = vst [vmem:[%s11 + $0x178] sm:$0xff] %v4583
  %4600 = vst [vmem:[%s11 + $0x340] sm:$0xf] %v4584
  %4601 = vst [vmem:[%s11 + $0x348] sm:$0xf] %v4585
  %4602 = vst [vmem:[%s11 + $0x350] sm:$0xf] %v4586
  %4603 = vst [vmem:[%s11 + $0x358] sm:$0xf] %v4587
  %4604 = vst [vmem:[%s11 + $0x360] sm:$0xf] %v4588
  %4605 = vst [vmem:[%s11 + $0x368] sm:$0xf] %v4589
  %4606 = vst [vmem:[%s11 + $0x370] sm:$0xf] %v4590
  %4607 = vst [vmem:[%s11 + $0x378] sm:$0xf] %v4591
  %v4608 = vld [vmem:[%s9] sm:$0xff]
  %v4609 = vld [vmem:[%s9 + $0x8] sm:$0xf]
  %v4610 = vld [vmem:[#allocation4 + $0x180] sm:$0xff]
  %v4611 = vld [vmem:[#allocation4 + $0x188] sm:$0xff]
  %v4612 = vld [vmem:[#allocation4 + $0x190] sm:$0xff]
  %v4613 = vld [vmem:[#allocation4 + $0x198] sm:$0xff]
  %v4614 = vld [vmem:[#allocation4 + $0x1a0] sm:$0xff]
  %v4615 = vld [vmem:[#allocation4 + $0x1a8] sm:$0xff]
  %v4616 = vld [vmem:[#allocation4 + $0x1b0] sm:$0xff]
  %v4617 = vld [vmem:[#allocation4 + $0x1b8] sm:$0xff]
  %v4618 = vld [vmem:[#allocation4 + $0x380] sm:$0xff]
  %v4619 = vld [vmem:[#allocation4 + $0x388] sm:$0xff]
  %v4620 = vld [vmem:[#allocation4 + $0x390] sm:$0xff]
  %v4621 = vld [vmem:[#allocation4 + $0x398] sm:$0xff]
  %v4622 = vld [vmem:[#allocation4 + $0x3a0] sm:$0xff]
  %v4623 = vld [vmem:[#allocation4 + $0x3a8] sm:$0xff]
  %v4624 = vld [vmem:[#allocation4 + $0x3b0] sm:$0xff]
  %v4625 = vld [vmem:[#allocation4 + $0x3b8] sm:$0xff]
  %v4626 = vld [vmem:[%s10] sm:$0xff]
  %v4627 = vld [vmem:[%s10 + $0x8] sm:$0xf]
  %4629 = vset.pattern.permute.xlu0 0
  %4630 = vperm.xlu0 %4629, %v4626
  %v4631 = vpop.permute.xlu0 %4630
  %4634 = vset.pattern.permute.xlu0 0
  %4635 = vperm.xlu0 %4634, %v4627
  %v4636 = vpop.permute.xlu0 %4635
  %v4639 = vsel %vm3125, %v4608, 0
  %v4642 = vsel %vm3125, %v4609, 0
  %4644 = vmatpush.msra.mxu0 0.0
  %4645 = vmatpush.msra.mxu0 0.0
  %4646 = vmatpush.msra.mxu0 0.0
  %4647 = vmatpush.msra.mxu0 0.0
  %4648 = vmatpush.msra.mxu0 0.0
  %4649 = vmatpush.msra.mxu0 0.0
  %4650 = vmatpush.msra.mxu0 0.0
  %4651 = vmatpush.msra.mxu0 0.0
  %4652 = vmatpush.msra.mxu0 0.0
  %4653 = vmatpush.msra.mxu0 0.0
  %4654 = vmatpush.msra.mxu0 0.0
  %4655 = vmatpush.msra.mxu0 0.0
  %4656 = vmatpush.msra.mxu0 0.0
  %4657 = vmatpush.msra.mxu0 0.0
  %4658 = vmatpush.msra.mxu0 %v4618
  %4659 = vmatpush.msra.mxu0 %v4610
  %4660 = vmatmul.f32.gmra.mxu0 %v4639
  %v4661 = vpop.f32.mrf.mxu0
  %v4662 = vadd.f32 %v4631, %v4661
  %4663 = vmatmul.f32.gmra.mxu0 %v4642
  %v4664 = vpop.f32.mrf.mxu0
  %v4665 = vadd.f32 %v4636, %v4664
  %4666 = vdwg.mxu0
  %4667 = vmatpush.msra.mxu0 0.0
  %4668 = vmatpush.msra.mxu0 0.0
  %4669 = vmatpush.msra.mxu0 0.0
  %4670 = vmatpush.msra.mxu0 0.0
  %4671 = vmatpush.msra.mxu0 0.0
  %4672 = vmatpush.msra.mxu0 0.0
  %4673 = vmatpush.msra.mxu0 0.0
  %4674 = vmatpush.msra.mxu0 0.0
  %4675 = vmatpush.msra.mxu0 0.0
  %4676 = vmatpush.msra.mxu0 0.0
  %4677 = vmatpush.msra.mxu0 0.0
  %4678 = vmatpush.msra.mxu0 0.0
  %4679 = vmatpush.msra.mxu0 0.0
  %4680 = vmatpush.msra.mxu0 0.0
  %4681 = vmatpush.msra.mxu0 %v4619
  %4682 = vmatpush.msra.mxu0 %v4611
  %4683 = vmatmul.f32.gmra.mxu0 %v4639
  %v4684 = vpop.f32.mrf.mxu0
  %v4685 = vadd.f32 %v4631, %v4684
  %4686 = vmatmul.f32.gmra.mxu0 %v4642
  %v4687 = vpop.f32.mrf.mxu0
  %v4688 = vadd.f32 %v4636, %v4687
  %4689 = vdwg.mxu0
  %4690 = vmatpush.msra.mxu0 0.0
  %4691 = vmatpush.msra.mxu0 0.0
  %4692 = vmatpush.msra.mxu0 0.0
  %4693 = vmatpush.msra.mxu0 0.0
  %4694 = vmatpush.msra.mxu0 0.0
  %4695 = vmatpush.msra.mxu0 0.0
  %4696 = vmatpush.msra.mxu0 0.0
  %4697 = vmatpush.msra.mxu0 0.0
  %4698 = vmatpush.msra.mxu0 0.0
  %4699 = vmatpush.msra.mxu0 0.0
  %4700 = vmatpush.msra.mxu0 0.0
  %4701 = vmatpush.msra.mxu0 0.0
  %4702 = vmatpush.msra.mxu0 0.0
  %4703 = vmatpush.msra.mxu0 0.0
  %4704 = vmatpush.msra.mxu0 %v4620
  %4705 = vmatpush.msra.mxu0 %v4612
  %4706 = vmatmul.f32.gmra.mxu0 %v4639
  %v4707 = vpop.f32.mrf.mxu0
  %v4708 = vadd.f32 %v4631, %v4707
  %4709 = vmatmul.f32.gmra.mxu0 %v4642
  %v4710 = vpop.f32.mrf.mxu0
  %v4711 = vadd.f32 %v4636, %v4710
  %4712 = vdwg.mxu0
  %4713 = vmatpush.msra.mxu0 0.0
  %4714 = vmatpush.msra.mxu0 0.0
  %4715 = vmatpush.msra.mxu0 0.0
  %4716 = vmatpush.msra.mxu0 0.0
  %4717 = vmatpush.msra.mxu0 0.0
  %4718 = vmatpush.msra.mxu0 0.0
  %4719 = vmatpush.msra.mxu0 0.0
  %4720 = vmatpush.msra.mxu0 0.0
  %4721 = vmatpush.msra.mxu0 0.0
  %4722 = vmatpush.msra.mxu0 0.0
  %4723 = vmatpush.msra.mxu0 0.0
  %4724 = vmatpush.msra.mxu0 0.0
  %4725 = vmatpush.msra.mxu0 0.0
  %4726 = vmatpush.msra.mxu0 0.0
  %4727 = vmatpush.msra.mxu0 %v4621
  %4728 = vmatpush.msra.mxu0 %v4613
  %4729 = vmatmul.f32.gmra.mxu0 %v4639
  %v4730 = vpop.f32.mrf.mxu0
  %v4731 = vadd.f32 %v4631, %v4730
  %4732 = vmatmul.f32.gmra.mxu0 %v4642
  %v4733 = vpop.f32.mrf.mxu0
  %v4734 = vadd.f32 %v4636, %v4733
  %4735 = vdwg.mxu0
  %4736 = vmatpush.msra.mxu0 0.0
  %4737 = vmatpush.msra.mxu0 0.0
  %4738 = vmatpush.msra.mxu0 0.0
  %4739 = vmatpush.msra.mxu0 0.0
  %4740 = vmatpush.msra.mxu0 0.0
  %4741 = vmatpush.msra.mxu0 0.0
  %4742 = vmatpush.msra.mxu0 0.0
  %4743 = vmatpush.msra.mxu0 0.0
  %4744 = vmatpush.msra.mxu0 0.0
  %4745 = vmatpush.msra.mxu0 0.0
  %4746 = vmatpush.msra.mxu0 0.0
  %4747 = vmatpush.msra.mxu0 0.0
  %4748 = vmatpush.msra.mxu0 0.0
  %4749 = vmatpush.msra.mxu0 0.0
  %4750 = vmatpush.msra.mxu0 %v4622
  %4751 = vmatpush.msra.mxu0 %v4614
  %4752 = vmatmul.f32.gmra.mxu0 %v4639
  %v4753 = vpop.f32.mrf.mxu0
  %v4754 = vadd.f32 %v4631, %v4753
  %4755 = vmatmul.f32.gmra.mxu0 %v4642
  %v4756 = vpop.f32.mrf.mxu0
  %v4757 = vadd.f32 %v4636, %v4756
  %4758 = vdwg.mxu0
  %4759 = vmatpush.msra.mxu0 0.0
  %4760 = vmatpush.msra.mxu0 0.0
  %4761 = vmatpush.msra.mxu0 0.0
  %4762 = vmatpush.msra.mxu0 0.0
  %4763 = vmatpush.msra.mxu0 0.0
  %4764 = vmatpush.msra.mxu0 0.0
  %4765 = vmatpush.msra.mxu0 0.0
  %4766 = vmatpush.msra.mxu0 0.0
  %4767 = vmatpush.msra.mxu0 0.0
  %4768 = vmatpush.msra.mxu0 0.0
  %4769 = vmatpush.msra.mxu0 0.0
  %4770 = vmatpush.msra.mxu0 0.0
  %4771 = vmatpush.msra.mxu0 0.0
  %4772 = vmatpush.msra.mxu0 0.0
  %4773 = vmatpush.msra.mxu0 %v4623
  %4774 = vmatpush.msra.mxu0 %v4615
  %4775 = vmatmul.f32.gmra.mxu0 %v4639
  %v4776 = vpop.f32.mrf.mxu0
  %v4777 = vadd.f32 %v4631, %v4776
  %4778 = vmatmul.f32.gmra.mxu0 %v4642
  %v4779 = vpop.f32.mrf.mxu0
  %v4780 = vadd.f32 %v4636, %v4779
  %4781 = vdwg.mxu0
  %4782 = vmatpush.msra.mxu0 0.0
  %4783 = vmatpush.msra.mxu0 0.0
  %4784 = vmatpush.msra.mxu0 0.0
  %4785 = vmatpush.msra.mxu0 0.0
  %4786 = vmatpush.msra.mxu0 0.0
  %4787 = vmatpush.msra.mxu0 0.0
  %4788 = vmatpush.msra.mxu0 0.0
  %4789 = vmatpush.msra.mxu0 0.0
  %4790 = vmatpush.msra.mxu0 0.0
  %4791 = vmatpush.msra.mxu0 0.0
  %4792 = vmatpush.msra.mxu0 0.0
  %4793 = vmatpush.msra.mxu0 0.0
  %4794 = vmatpush.msra.mxu0 0.0
  %4795 = vmatpush.msra.mxu0 0.0
  %4796 = vmatpush.msra.mxu0 %v4624
  %4797 = vmatpush.msra.mxu0 %v4616
  %4798 = vmatmul.f32.gmra.mxu0 %v4639
  %v4799 = vpop.f32.mrf.mxu0
  %v4800 = vadd.f32 %v4631, %v4799
  %4801 = vmatmul.f32.gmra.mxu0 %v4642
  %v4802 = vpop.f32.mrf.mxu0
  %v4803 = vadd.f32 %v4636, %v4802
  %4804 = vdwg.mxu0
  %4805 = vmatpush.msra.mxu0 0.0
  %4806 = vmatpush.msra.mxu0 0.0
  %4807 = vmatpush.msra.mxu0 0.0
  %4808 = vmatpush.msra.mxu0 0.0
  %4809 = vmatpush.msra.mxu0 0.0
  %4810 = vmatpush.msra.mxu0 0.0
  %4811 = vmatpush.msra.mxu0 0.0
  %4812 = vmatpush.msra.mxu0 0.0
  %4813 = vmatpush.msra.mxu0 0.0
  %4814 = vmatpush.msra.mxu0 0.0
  %4815 = vmatpush.msra.mxu0 0.0
  %4816 = vmatpush.msra.mxu0 0.0
  %4817 = vmatpush.msra.mxu0 0.0
  %4818 = vmatpush.msra.mxu0 0.0
  %4819 = vmatpush.msra.mxu0 %v4625
  %4820 = vmatpush.msra.mxu0 %v4617
  %4821 = vmatmul.f32.gmra.mxu0 %v4639
  %v4822 = vpop.f32.mrf.mxu0
  %v4823 = vadd.f32 %v4631, %v4822
  %4824 = vmatmul.f32.gmra.mxu0 %v4642
  %v4825 = vpop.f32.mrf.mxu0
  %v4826 = vadd.f32 %v4636, %v4825
  %4827 = vdwg.mxu0
  %v4828 = vmax.f32 %v4662, 0.0
  %v4829 = vmax.f32 %v4685, 0.0
  %v4830 = vmax.f32 %v4708, 0.0
  %v4831 = vmax.f32 %v4731, 0.0
  %v4832 = vmax.f32 %v4754, 0.0
  %v4833 = vmax.f32 %v4777, 0.0
  %v4834 = vmax.f32 %v4800, 0.0
  %v4835 = vmax.f32 %v4823, 0.0
  %v4836 = vmax.f32 %v4665, 0.0
  %v4837 = vmax.f32 %v4688, 0.0
  %v4838 = vmax.f32 %v4711, 0.0
  %v4839 = vmax.f32 %v4734, 0.0
  %v4840 = vmax.f32 %v4757, 0.0
  %v4841 = vmax.f32 %v4780, 0.0
  %v4842 = vmax.f32 %v4803, 0.0
  %v4843 = vmax.f32 %v4826, 0.0
  %4844 = vst [vmem:[%s11 + $0x180] sm:$0xff] %v4828
  %4845 = vst [vmem:[%s11 + $0x188] sm:$0xff] %v4829
  %4846 = vst [vmem:[%s11 + $0x190] sm:$0xff] %v4830
  %4847 = vst [vmem:[%s11 + $0x198] sm:$0xff] %v4831
  %4848 = vst [vmem:[%s11 + $0x1a0] sm:$0xff] %v4832
  %4849 = vst [vmem:[%s11 + $0x1a8] sm:$0xff] %v4833
  %4850 = vst [vmem:[%s11 + $0x1b0] sm:$0xff] %v4834
  %4851 = vst [vmem:[%s11 + $0x1b8] sm:$0xff] %v4835
  %4852 = vst [vmem:[%s11 + $0x380] sm:$0xf] %v4836
  %4853 = vst [vmem:[%s11 + $0x388] sm:$0xf] %v4837
  %4854 = vst [vmem:[%s11 + $0x390] sm:$0xf] %v4838
  %4855 = vst [vmem:[%s11 + $0x398] sm:$0xf] %v4839
  %4856 = vst [vmem:[%s11 + $0x3a0] sm:$0xf] %v4840
  %4857 = vst [vmem:[%s11 + $0x3a8] sm:$0xf] %v4841
  %4858 = vst [vmem:[%s11 + $0x3b0] sm:$0xf] %v4842
  %4859 = vst [vmem:[%s11 + $0x3b8] sm:$0xf] %v4843
  %v4860 = vld [vmem:[%s9] sm:$0xff]
  %v4861 = vld [vmem:[%s9 + $0x8] sm:$0xf]
  %v4862 = vld [vmem:[#allocation4 + $0x1c0] sm:$0xff]
  %v4863 = vld [vmem:[#allocation4 + $0x1c8] sm:$0xff]
  %v4864 = vld [vmem:[#allocation4 + $0x1d0] sm:$0xff]
  %v4865 = vld [vmem:[#allocation4 + $0x1d8] sm:$0xff]
  %v4866 = vld [vmem:[#allocation4 + $0x1e0] sm:$0xff]
  %v4867 = vld [vmem:[#allocation4 + $0x1e8] sm:$0xff]
  %v4868 = vld [vmem:[#allocation4 + $0x1f0] sm:$0xff]
  %v4869 = vld [vmem:[#allocation4 + $0x1f8] sm:$0xff]
  %v4870 = vld [vmem:[#allocation4 + $0x3c0] sm:$0xff]
  %v4871 = vld [vmem:[#allocation4 + $0x3c8] sm:$0xff]
  %v4872 = vld [vmem:[#allocation4 + $0x3d0] sm:$0xff]
  %v4873 = vld [vmem:[#allocation4 + $0x3d8] sm:$0xff]
  %v4874 = vld [vmem:[#allocation4 + $0x3e0] sm:$0xff]
  %v4875 = vld [vmem:[#allocation4 + $0x3e8] sm:$0xff]
  %v4876 = vld [vmem:[#allocation4 + $0x3f0] sm:$0xff]
  %v4877 = vld [vmem:[#allocation4 + $0x3f8] sm:$0xff]
  %v4878 = vld [vmem:[%s10] sm:$0xff]
  %v4879 = vld [vmem:[%s10 + $0x8] sm:$0xf]
  %4881 = vset.pattern.permute.xlu0 0
  %4882 = vperm.xlu0 %4881, %v4878
  %v4883 = vpop.permute.xlu0 %4882
  %4886 = vset.pattern.permute.xlu0 0
  %4887 = vperm.xlu0 %4886, %v4879
  %v4888 = vpop.permute.xlu0 %4887
  %v4891 = vsel %vm3125, %v4860, 0
  %v4894 = vsel %vm3125, %v4861, 0
  %4896 = vmatpush.msra.mxu0 0.0
  %4897 = vmatpush.msra.mxu0 0.0
  %4898 = vmatpush.msra.mxu0 0.0
  %4899 = vmatpush.msra.mxu0 0.0
  %4900 = vmatpush.msra.mxu0 0.0
  %4901 = vmatpush.msra.mxu0 0.0
  %4902 = vmatpush.msra.mxu0 0.0
  %4903 = vmatpush.msra.mxu0 0.0
  %4904 = vmatpush.msra.mxu0 0.0
  %4905 = vmatpush.msra.mxu0 0.0
  %4906 = vmatpush.msra.mxu0 0.0
  %4907 = vmatpush.msra.mxu0 0.0
  %4908 = vmatpush.msra.mxu0 0.0
  %4909 = vmatpush.msra.mxu0 0.0
  %4910 = vmatpush.msra.mxu0 %v4870
  %4911 = vmatpush.msra.mxu0 %v4862
  %4912 = vmatmul.f32.gmra.mxu0 %v4891
  %v4913 = vpop.f32.mrf.mxu0
  %v4914 = vadd.f32 %v4883, %v4913
  %4915 = vmatmul.f32.gmra.mxu0 %v4894
  %v4916 = vpop.f32.mrf.mxu0
  %v4917 = vadd.f32 %v4888, %v4916
  %4918 = vdwg.mxu0
  %4919 = vmatpush.msra.mxu0 0.0
  %4920 = vmatpush.msra.mxu0 0.0
  %4921 = vmatpush.msra.mxu0 0.0
  %4922 = vmatpush.msra.mxu0 0.0
  %4923 = vmatpush.msra.mxu0 0.0
  %4924 = vmatpush.msra.mxu0 0.0
  %4925 = vmatpush.msra.mxu0 0.0
  %4926 = vmatpush.msra.mxu0 0.0
  %4927 = vmatpush.msra.mxu0 0.0
  %4928 = vmatpush.msra.mxu0 0.0
  %4929 = vmatpush.msra.mxu0 0.0
  %4930 = vmatpush.msra.mxu0 0.0
  %4931 = vmatpush.msra.mxu0 0.0
  %4932 = vmatpush.msra.mxu0 0.0
  %4933 = vmatpush.msra.mxu0 %v4871
  %4934 = vmatpush.msra.mxu0 %v4863
  %4935 = vmatmul.f32.gmra.mxu0 %v4891
  %v4936 = vpop.f32.mrf.mxu0
  %v4937 = vadd.f32 %v4883, %v4936
  %4938 = vmatmul.f32.gmra.mxu0 %v4894
  %v4939 = vpop.f32.mrf.mxu0
  %v4940 = vadd.f32 %v4888, %v4939
  %4941 = vdwg.mxu0
  %4942 = vmatpush.msra.mxu0 0.0
  %4943 = vmatpush.msra.mxu0 0.0
  %4944 = vmatpush.msra.mxu0 0.0
  %4945 = vmatpush.msra.mxu0 0.0
  %4946 = vmatpush.msra.mxu0 0.0
  %4947 = vmatpush.msra.mxu0 0.0
  %4948 = vmatpush.msra.mxu0 0.0
  %4949 = vmatpush.msra.mxu0 0.0
  %4950 = vmatpush.msra.mxu0 0.0
  %4951 = vmatpush.msra.mxu0 0.0
  %4952 = vmatpush.msra.mxu0 0.0
  %4953 = vmatpush.msra.mxu0 0.0
  %4954 = vmatpush.msra.mxu0 0.0
  %4955 = vmatpush.msra.mxu0 0.0
  %4956 = vmatpush.msra.mxu0 %v4872
  %4957 = vmatpush.msra.mxu0 %v4864
  %4958 = vmatmul.f32.gmra.mxu0 %v4891
  %v4959 = vpop.f32.mrf.mxu0
  %v4960 = vadd.f32 %v4883, %v4959
  %4961 = vmatmul.f32.gmra.mxu0 %v4894
  %v4962 = vpop.f32.mrf.mxu0
  %v4963 = vadd.f32 %v4888, %v4962
  %4964 = vdwg.mxu0
  %4965 = vmatpush.msra.mxu0 0.0
  %4966 = vmatpush.msra.mxu0 0.0
  %4967 = vmatpush.msra.mxu0 0.0
  %4968 = vmatpush.msra.mxu0 0.0
  %4969 = vmatpush.msra.mxu0 0.0
  %4970 = vmatpush.msra.mxu0 0.0
  %4971 = vmatpush.msra.mxu0 0.0
  %4972 = vmatpush.msra.mxu0 0.0
  %4973 = vmatpush.msra.mxu0 0.0
  %4974 = vmatpush.msra.mxu0 0.0
  %4975 = vmatpush.msra.mxu0 0.0
  %4976 = vmatpush.msra.mxu0 0.0
  %4977 = vmatpush.msra.mxu0 0.0
  %4978 = vmatpush.msra.mxu0 0.0
  %4979 = vmatpush.msra.mxu0 %v4873
  %4980 = vmatpush.msra.mxu0 %v4865
  %4981 = vmatmul.f32.gmra.mxu0 %v4891
  %v4982 = vpop.f32.mrf.mxu0
  %v4983 = vadd.f32 %v4883, %v4982
  %4984 = vmatmul.f32.gmra.mxu0 %v4894
  %v4985 = vpop.f32.mrf.mxu0
  %v4986 = vadd.f32 %v4888, %v4985
  %4987 = vdwg.mxu0
  %4988 = vmatpush.msra.mxu0 0.0
  %4989 = vmatpush.msra.mxu0 0.0
  %4990 = vmatpush.msra.mxu0 0.0
  %4991 = vmatpush.msra.mxu0 0.0
  %4992 = vmatpush.msra.mxu0 0.0
  %4993 = vmatpush.msra.mxu0 0.0
  %4994 = vmatpush.msra.mxu0 0.0
  %4995 = vmatpush.msra.mxu0 0.0
  %4996 = vmatpush.msra.mxu0 0.0
  %4997 = vmatpush.msra.mxu0 0.0
  %4998 = vmatpush.msra.mxu0 0.0
  %4999 = vmatpush.msra.mxu0 0.0
  %5000 = vmatpush.msra.mxu0 0.0
  %5001 = vmatpush.msra.mxu0 0.0
  %5002 = vmatpush.msra.mxu0 %v4874
  %5003 = vmatpush.msra.mxu0 %v4866
  %5004 = vmatmul.f32.gmra.mxu0 %v4891
  %v5005 = vpop.f32.mrf.mxu0
  %v5006 = vadd.f32 %v4883, %v5005
  %5007 = vmatmul.f32.gmra.mxu0 %v4894
  %v5008 = vpop.f32.mrf.mxu0
  %v5009 = vadd.f32 %v4888, %v5008
  %5010 = vdwg.mxu0
  %5011 = vmatpush.msra.mxu0 0.0
  %5012 = vmatpush.msra.mxu0 0.0
  %5013 = vmatpush.msra.mxu0 0.0
  %5014 = vmatpush.msra.mxu0 0.0
  %5015 = vmatpush.msra.mxu0 0.0
  %5016 = vmatpush.msra.mxu0 0.0
  %5017 = vmatpush.msra.mxu0 0.0
  %5018 = vmatpush.msra.mxu0 0.0
  %5019 = vmatpush.msra.mxu0 0.0
  %5020 = vmatpush.msra.mxu0 0.0
  %5021 = vmatpush.msra.mxu0 0.0
  %5022 = vmatpush.msra.mxu0 0.0
  %5023 = vmatpush.msra.mxu0 0.0
  %5024 = vmatpush.msra.mxu0 0.0
  %5025 = vmatpush.msra.mxu0 %v4875
  %5026 = vmatpush.msra.mxu0 %v4867
  %5027 = vmatmul.f32.gmra.mxu0 %v4891
  %v5028 = vpop.f32.mrf.mxu0
  %v5029 = vadd.f32 %v4883, %v5028
  %5030 = vmatmul.f32.gmra.mxu0 %v4894
  %v5031 = vpop.f32.mrf.mxu0
  %v5032 = vadd.f32 %v4888, %v5031
  %5033 = vdwg.mxu0
  %5034 = vmatpush.msra.mxu0 0.0
  %5035 = vmatpush.msra.mxu0 0.0
  %5036 = vmatpush.msra.mxu0 0.0
  %5037 = vmatpush.msra.mxu0 0.0
  %5038 = vmatpush.msra.mxu0 0.0
  %5039 = vmatpush.msra.mxu0 0.0
  %5040 = vmatpush.msra.mxu0 0.0
  %5041 = vmatpush.msra.mxu0 0.0
  %5042 = vmatpush.msra.mxu0 0.0
  %5043 = vmatpush.msra.mxu0 0.0
  %5044 = vmatpush.msra.mxu0 0.0
  %5045 = vmatpush.msra.mxu0 0.0
  %5046 = vmatpush.msra.mxu0 0.0
  %5047 = vmatpush.msra.mxu0 0.0
  %5048 = vmatpush.msra.mxu0 %v4876
  %5049 = vmatpush.msra.mxu0 %v4868
  %5050 = vmatmul.f32.gmra.mxu0 %v4891
  %v5051 = vpop.f32.mrf.mxu0
  %v5052 = vadd.f32 %v4883, %v5051
  %5053 = vmatmul.f32.gmra.mxu0 %v4894
  %v5054 = vpop.f32.mrf.mxu0
  %v5055 = vadd.f32 %v4888, %v5054
  %5056 = vdwg.mxu0
  %5057 = vmatpush.msra.mxu0 0.0
  %5058 = vmatpush.msra.mxu0 0.0
  %5059 = vmatpush.msra.mxu0 0.0
  %5060 = vmatpush.msra.mxu0 0.0
  %5061 = vmatpush.msra.mxu0 0.0
  %5062 = vmatpush.msra.mxu0 0.0
  %5063 = vmatpush.msra.mxu0 0.0
  %5064 = vmatpush.msra.mxu0 0.0
  %5065 = vmatpush.msra.mxu0 0.0
  %5066 = vmatpush.msra.mxu0 0.0
  %5067 = vmatpush.msra.mxu0 0.0
  %5068 = vmatpush.msra.mxu0 0.0
  %5069 = vmatpush.msra.mxu0 0.0
  %5070 = vmatpush.msra.mxu0 0.0
  %5071 = vmatpush.msra.mxu0 %v4877
  %5072 = vmatpush.msra.mxu0 %v4869
  %5073 = vmatmul.f32.gmra.mxu0 %v4891
  %v5074 = vpop.f32.mrf.mxu0
  %v5075 = vadd.f32 %v4883, %v5074
  %5076 = vmatmul.f32.gmra.mxu0 %v4894
  %v5077 = vpop.f32.mrf.mxu0
  %v5078 = vadd.f32 %v4888, %v5077
  %5079 = vdwg.mxu0
  %v5080 = vmax.f32 %v4914, 0.0
  %v5081 = vmax.f32 %v4937, 0.0
  %v5082 = vmax.f32 %v4960, 0.0
  %v5083 = vmax.f32 %v4983, 0.0
  %v5084 = vmax.f32 %v5006, 0.0
  %v5085 = vmax.f32 %v5029, 0.0
  %v5086 = vmax.f32 %v5052, 0.0
  %v5087 = vmax.f32 %v5075, 0.0
  %v5088 = vmax.f32 %v4917, 0.0
  %v5089 = vmax.f32 %v4940, 0.0
  %v5090 = vmax.f32 %v4963, 0.0
  %v5091 = vmax.f32 %v4986, 0.0
  %v5092 = vmax.f32 %v5009, 0.0
  %v5093 = vmax.f32 %v5032, 0.0
  %v5094 = vmax.f32 %v5055, 0.0
  %v5095 = vmax.f32 %v5078, 0.0
  %5096 = vst [vmem:[%s11 + $0x1c0] sm:$0xff] %v5080
  %5097 = vst [vmem:[%s11 + $0x1c8] sm:$0xff] %v5081
  %5098 = vst [vmem:[%s11 + $0x1d0] sm:$0xff] %v5082
  %5099 = vst [vmem:[%s11 + $0x1d8] sm:$0xff] %v5083
  %5100 = vst [vmem:[%s11 + $0x1e0] sm:$0xff] %v5084
  %5101 = vst [vmem:[%s11 + $0x1e8] sm:$0xff] %v5085
  %5102 = vst [vmem:[%s11 + $0x1f0] sm:$0xff] %v5086
  %5103 = vst [vmem:[%s11 + $0x1f8] sm:$0xff] %v5087
  %5104 = vst [vmem:[%s11 + $0x3c0] sm:$0xf] %v5088
  %5105 = vst [vmem:[%s11 + $0x3c8] sm:$0xf] %v5089
  %5106 = vst [vmem:[%s11 + $0x3d0] sm:$0xf] %v5090
  %5107 = vst [vmem:[%s11 + $0x3d8] sm:$0xf] %v5091
  %5108 = vst [vmem:[%s11 + $0x3e0] sm:$0xf] %v5092
  %5109 = vst [vmem:[%s11 + $0x3e8] sm:$0xf] %v5093
  %5110 = vst [vmem:[%s11 + $0x3f0] sm:$0xf] %v5094
  %5111 = vst [vmem:[%s11 + $0x3f8] sm:$0xf] %v5095
  // Predicated region
  $region46: #{conv_decoder_forward.1} parent=0 // pred_check
    _
  $region47: #{conv_decoder_forward.1} parent=0 // pred_check_branch
    %5113 = sbr.rel (0) target = $region49
  $region48: #{conv_decoder_forward.1} parent=0 // pred_region
    _
  $region49: #{conv_decoder_forward.1} parent=0 // pred_fallthru
    _
  // Predicated region
  $region50: #{conv_decoder_forward.1} parent=0 // pred_check
    _
  $region51: #{conv_decoder_forward.1} parent=0 // pred_check_branch
    %5115 = sbr.rel (0) target = $region53
  $region52: #{conv_decoder_forward.1} parent=0 // pred_region
    _
  $region53: #{conv_decoder_forward.1} parent=0 // pred_fallthru
    _

</llo_original>
